<compile_context>
chip_gen: v6e
topology: v6e:2x2x1
jax: 0.10.0
libtpu: 0.0.40
codegen_flags: <defaults>
</compile_context>

<pallas_src>
import jax
import jax.numpy as jnp
from jax.experimental import pallas as pl
from jax.experimental.pallas import tpu as pltpu

H = 768           # hidden size (fixed by the module)
D1 = 2 * H        # 1536: concat of two tokens (handled as two H-halves here)
D2 = H            # 768
D3 = 512
D4 = 2            # num classes
NPAD = 128        # lane-padded width of the final projection


def cls_head_kernel(x1_ref, x2_ref, w1a_ref, w1b_ref, b1_ref,
                    w2_ref, b2_ref, w3_ref, b3_ref, o_ref):
    bf16 = jnp.bfloat16
    x1 = x1_ref[...].astype(bf16)
    x2 = x2_ref[...].astype(bf16)
    # dense: tok1 @ W1a + tok2 @ W1b + b1, tanh  (== concat(tok1,tok2) @ W1 + b1)
    h1 = jnp.dot(x1, w1a_ref[...], preferred_element_type=jnp.float32)
    h1 = h1 + jnp.dot(x2, w1b_ref[...], preferred_element_type=jnp.float32)
    h1 = jnp.tanh(h1 + b1_ref[...])
    # dense2: relu
    h2 = jnp.dot(h1.astype(bf16), w2_ref[...], preferred_element_type=jnp.float32)
    h2 = jnp.maximum(h2 + b2_ref[...], 0.0)
    # cls_header (output padded to 128 lanes -> unmasked stores)
    out = jnp.dot(h2.astype(bf16), w3_ref[...], preferred_element_type=jnp.float32)
    o_ref[...] = (out + b3_ref[...]).astype(o_ref.dtype)


def prepare_params(params):
    """One-time weight prep: split W1 into two halves, cast weights to bf16,
    zero-pad the final projection to 128 output lanes.  In real use hoist this
    out of the per-call path so the bf16/padded weights are reused."""
    w1, b1, w2, b2, w3, b3 = params
    bf16 = jnp.bfloat16
    w1a = w1[:H].astype(bf16)                 # (768, 768)
    w1b = w1[H:].astype(bf16)                 # (768, 768)
    w2b = w2.astype(bf16)                     # (768, 512)
    w3p = jnp.zeros((D3, NPAD), bf16).at[:, :D4].set(w3.astype(bf16))
    b3p = jnp.zeros((1, NPAD), jnp.float32).at[:, :D4].set(b3)
    return (w1a, w1b, b1, w2b, b2, w3p, b3p)


def cls_head_pallas(tok1, tok2, prep):
    """tok1/tok2: [B, 768] gathered tokens; prep: output of prepare_params."""
    w1a, w1b, b1, w2, b2, w3p, b3p = prep
    B = tok1.shape[0]
    # 256-row batch tiles keep the 2x256x256 bf16 MXU (v6e/v7x) full; v5e's
    # 4x128x128 MXU only needs 128 but 256 works there too.  Small batches
    # collapse to a single full-extent tile.
    TM = min(B, 256)
    nb = pl.cdiv(B, TM)

    const = lambda shape: pl.BlockSpec(shape, lambda i: (0, 0))  # VMEM-resident
    row = lambda shape: pl.BlockSpec(shape, lambda i: (i, 0))    # streams over B

    return pl.pallas_call(
        cls_head_kernel,
        out_shape=jax.ShapeDtypeStruct((B, NPAD), jnp.float32),
        grid=(nb,),
        in_specs=[
            row((TM, H)),       # tok1 (pipelined over batch tiles)
            row((TM, H)),       # tok2
            const((H, D2)),     # W1a  (constant index => loaded once)
            const((H, D2)),     # W1b
            const((1, D2)),     # b1
            const((D2, D3)),    # W2
            const((1, D3)),     # b2
            const((D3, NPAD)),  # W3 zero-padded 2 -> 128 lanes
            const((1, NPAD)),   # b3 zero-padded
        ],
        out_specs=row((TM, NPAD)),
        compiler_params=pltpu.CompilerParams(
            dimension_semantics=("parallel",),       # megacore split on v7x
            vmem_limit_bytes=32 * 1024 * 1024),      # v5e default is 16 MiB
    )(tok1, tok2, w1a, w1b, b1, w2, b2, w3p, b3p)


def cls_head_forward(hidden_states, params, pos1=0, pos2=0):
    # Token gather stays in plain JAX (two [B, 768] slices, no [B, 1536]
    # concat is ever materialized since W1 is split inside the kernel).
    # TODO(synk): fully fuse the gather via scalar-prefetched seq indices; a
    # size-1 second-minor block on [B, S, H] conflicts with the (8,128) rule.
    tok1 = hidden_states[:, pos1, :]
    tok2 = hidden_states[:, pos2, :]
    prep = prepare_params(params)
    out = cls_head_pallas(tok1, tok2, prep)
    return out[:, :D4]


def init_params(key):
    """Deterministic synthetic weights; shapes match the torch module
    (stored as (in, out) = torch weight transposed)."""
    k1, k2, k3, k4, k5, k6 = jax.random.split(key, 6)
    s = 0.02
    w1 = s * jax.random.normal(k1, (D1, D2), jnp.float32)
    b1 = s * jax.random.normal(k2, (1, D2), jnp.float32)
    w2 = s * jax.random.normal(k3, (D2, D3), jnp.float32)
    b2 = s * jax.random.normal(k4, (1, D3), jnp.float32)
    w3 = s * jax.random.normal(k5, (D3, D4), jnp.float32)
    b3 = s * jax.random.normal(k6, (1, D4), jnp.float32)
    return (w1, b1, w2, b2, w3, b3)


def cls_head_ref(hidden_states, params, pos1=0, pos2=0):
    """Plain-JAX reference mirroring the kernel's bf16-weight / f32-accum math."""
    w1, b1, w2, b2, w3, b3 = params
    bf16 = jnp.bfloat16
    t1 = hidden_states[:, pos1, :].astype(bf16)
    t2 = hidden_states[:, pos2, :].astype(bf16)
    h1 = (jnp.dot(t1, w1[:H].astype(bf16), preferred_element_type=jnp.float32)
          + jnp.dot(t2, w1[H:].astype(bf16), preferred_element_type=jnp.float32))
    h1 = jnp.tanh(h1 + b1[0])
    h2 = jnp.dot(h1.astype(bf16), w2.astype(bf16),
                 preferred_element_type=jnp.float32)
    h2 = jnp.maximum(h2 + b2[0], 0.0)
    out = jnp.dot(h2.astype(bf16), w3.astype(bf16),
                  preferred_element_type=jnp.float32)
    return out + b3[0]


if __name__ == "__main__":
    key = jax.random.PRNGKey(0)
    kx, kp = jax.random.split(key)

    B, S = 2, 8
    hidden_states = jax.random.normal(kx, (B, S, H), jnp.float32)
    params = init_params(kp)

    out = cls_head_forward(hidden_states, params, pos1=0, pos2=3)
    out = jax.block_until_ready(out)

    ref = cls_head_ref(hidden_states, params, pos1=0, pos2=3)
    assert out.shape == (B, D4)
    assert jnp.allclose(out, ref, atol=1e-2, rtol=1e-2), (
        f"max abs err {float(jnp.max(jnp.abs(out - ref)))}")
    print("KERNEL_OK")
</pallas_src>

<mosaic_0001>
module attributes {stable_mosaic.version = 11 : i64} {
  func.func @cls_head_kernel(%arg0: i32, %arg1: memref<2x768xf32, #tpu.memory_space<vmem>>, %arg2: memref<2x768xf32, #tpu.memory_space<vmem>>, %arg3: memref<768x768xbf16, #tpu.memory_space<vmem>>, %arg4: memref<768x768xbf16, #tpu.memory_space<vmem>>, %arg5: memref<1x768xf32, #tpu.memory_space<vmem>>, %arg6: memref<768x512xbf16, #tpu.memory_space<vmem>>, %arg7: memref<1x512xf32, #tpu.memory_space<vmem>>, %arg8: memref<512x128xbf16, #tpu.memory_space<vmem>>, %arg9: memref<1x128xf32, #tpu.memory_space<vmem>>, %arg10: memref<2x128xf32, #tpu.memory_space<vmem>>) attributes {dimension_semantics = [#tpu.dimension_semantics<parallel>], iteration_bounds = array<i64: 1>, scalar_prefetch = 0 : i64, scratch_operands = 0 : i64, tpu.core_type = #tpu.core_type<tc>, window_params = [{transform_indices = @transform_0, window_bounds = array<i64: 2, 768>}, {transform_indices = @transform_1, window_bounds = array<i64: 2, 768>}, {pipeline_mode = #tpu.pipeline_mode<synchronous>, transform_indices = @transform_2, window_bounds = array<i64: 768, 768>}, {pipeline_mode = #tpu.pipeline_mode<synchronous>, transform_indices = @transform_3, window_bounds = array<i64: 768, 768>}, {pipeline_mode = #tpu.pipeline_mode<synchronous>, transform_indices = @transform_4, window_bounds = array<i64: 1, 768>}, {pipeline_mode = #tpu.pipeline_mode<synchronous>, transform_indices = @transform_5, window_bounds = array<i64: 768, 512>}, {pipeline_mode = #tpu.pipeline_mode<synchronous>, transform_indices = @transform_6, window_bounds = array<i64: 1, 512>}, {pipeline_mode = #tpu.pipeline_mode<synchronous>, transform_indices = @transform_7, window_bounds = array<i64: 512, 128>}, {pipeline_mode = #tpu.pipeline_mode<synchronous>, transform_indices = @transform_8, window_bounds = array<i64: 1, 128>}, {transform_indices = @transform_9, window_bounds = array<i64: 2, 128>}]} {
    %c0 = arith.constant 0 : index
    %c0_0 = arith.constant 0 : index
    %0 = vector.load %arg1[%c0, %c0_0] : memref<2x768xf32, #tpu.memory_space<vmem>>, vector<2x768xf32>
    %1 = arith.truncf %0 : vector<2x768xf32> to vector<2x768xbf16>
    %c0_1 = arith.constant 0 : index
    %c0_2 = arith.constant 0 : index
    %2 = vector.load %arg2[%c0_1, %c0_2] : memref<2x768xf32, #tpu.memory_space<vmem>>, vector<2x768xf32>
    %3 = arith.truncf %2 : vector<2x768xf32> to vector<2x768xbf16>
    %c0_3 = arith.constant 0 : index
    %c0_4 = arith.constant 0 : index
    %4 = vector.load %arg3[%c0_3, %c0_4] : memref<768x768xbf16, #tpu.memory_space<vmem>>, vector<768x768xbf16>
    %cst = arith.constant dense<0.000000e+00> : vector<2x768xf32>
    %5 = tpu.matmul %1, %4, %cst {dimension_numbers = #tpu.dot_dimension_numbers<[1], [0], [0], [1], [0, 0, 1, 1], [], []>} : vector<2x768xbf16>, vector<768x768xbf16>, vector<2x768xf32> -> vector<2x768xf32>
    %c0_5 = arith.constant 0 : index
    %c0_6 = arith.constant 0 : index
    %6 = vector.load %arg4[%c0_5, %c0_6] : memref<768x768xbf16, #tpu.memory_space<vmem>>, vector<768x768xbf16>
    %cst_7 = arith.constant dense<0.000000e+00> : vector<2x768xf32>
    %7 = tpu.matmul %3, %6, %cst_7 {dimension_numbers = #tpu.dot_dimension_numbers<[1], [0], [0], [1], [0, 0, 1, 1], [], []>} : vector<2x768xbf16>, vector<768x768xbf16>, vector<2x768xf32> -> vector<2x768xf32>
    %8 = arith.addf %5, %7 : vector<2x768xf32>
    %c0_8 = arith.constant 0 : index
    %c0_9 = arith.constant 0 : index
    %9 = vector.load %arg5[%c0_8, %c0_9] : memref<1x768xf32, #tpu.memory_space<vmem>>, vector<1x768xf32>
    %10 = vector.broadcast %9 : vector<1x768xf32> to vector<2x768xf32>
    %11 = arith.addf %8, %10 : vector<2x768xf32>
    %12 = math.tanh %11 : vector<2x768xf32>
    %13 = arith.truncf %12 : vector<2x768xf32> to vector<2x768xbf16>
    %c0_10 = arith.constant 0 : index
    %c0_11 = arith.constant 0 : index
    %14 = vector.load %arg6[%c0_10, %c0_11] : memref<768x512xbf16, #tpu.memory_space<vmem>>, vector<768x512xbf16>
    %cst_12 = arith.constant dense<0.000000e+00> : vector<2x512xf32>
    %15 = tpu.matmul %13, %14, %cst_12 {dimension_numbers = #tpu.dot_dimension_numbers<[1], [0], [0], [1], [0, 0, 1, 1], [], []>} : vector<2x768xbf16>, vector<768x512xbf16>, vector<2x512xf32> -> vector<2x512xf32>
    %c0_13 = arith.constant 0 : index
    %c0_14 = arith.constant 0 : index
    %16 = vector.load %arg7[%c0_13, %c0_14] : memref<1x512xf32, #tpu.memory_space<vmem>>, vector<1x512xf32>
    %17 = vector.broadcast %16 : vector<1x512xf32> to vector<2x512xf32>
    %18 = arith.addf %15, %17 : vector<2x512xf32>
    %cst_15 = arith.constant 0.000000e+00 : f32
    %19 = vector.broadcast %cst_15 : f32 to vector<2x512xf32>
    %20 = arith.maximumf %18, %19 : vector<2x512xf32>
    %21 = arith.truncf %20 : vector<2x512xf32> to vector<2x512xbf16>
    %c0_16 = arith.constant 0 : index
    %c0_17 = arith.constant 0 : index
    %22 = vector.load %arg8[%c0_16, %c0_17] : memref<512x128xbf16, #tpu.memory_space<vmem>>, vector<512x128xbf16>
    %cst_18 = arith.constant dense<0.000000e+00> : vector<2x128xf32>
    %23 = tpu.matmul %21, %22, %cst_18 {dimension_numbers = #tpu.dot_dimension_numbers<[1], [0], [0], [1], [0, 0, 1, 1], [], []>} : vector<2x512xbf16>, vector<512x128xbf16>, vector<2x128xf32> -> vector<2x128xf32>
    %c0_19 = arith.constant 0 : index
    %c0_20 = arith.constant 0 : index
    %24 = vector.load %arg9[%c0_19, %c0_20] : memref<1x128xf32, #tpu.memory_space<vmem>>, vector<1x128xf32>
    %25 = vector.broadcast %24 : vector<1x128xf32> to vector<2x128xf32>
    %26 = arith.addf %23, %25 : vector<2x128xf32>
    %c0_21 = arith.constant 0 : index
    %c0_22 = arith.constant 0 : index
    %27 = vector.load %arg10[%c0_21, %c0_22] : memref<2x128xf32, #tpu.memory_space<vmem>>, vector<2x128xf32>
    tpu.vector_store %arg10[%c0_21, %c0_22], %26 {strides = array<i32>} : memref<2x128xf32, #tpu.memory_space<vmem>>, vector<2x128xf32>,
    return
  }
  func.func @transform_0(%arg0: i32) -> (i32, i32) {
    %c0_i32 = arith.constant 0 : i32
    %c0_i32_0 = arith.constant 0 : i32
    return %arg0, %c0_i32 : i32, i32
  }
  func.func @transform_1(%arg0: i32) -> (i32, i32) {
    %c0_i32 = arith.constant 0 : i32
    %c0_i32_0 = arith.constant 0 : i32
    return %arg0, %c0_i32 : i32, i32
  }
  func.func @transform_2(%arg0: i32) -> (i32, i32) {
    %c0_i32 = arith.constant 0 : i32
    %c0_i32_0 = arith.constant 0 : i32
    %c0_i32_1 = arith.constant 0 : i32
    return %c0_i32, %c0_i32_0 : i32, i32
  }
  func.func @transform_3(%arg0: i32) -> (i32, i32) {
    %c0_i32 = arith.constant 0 : i32
    %c0_i32_0 = arith.constant 0 : i32
    %c0_i32_1 = arith.constant 0 : i32
    return %c0_i32, %c0_i32_0 : i32, i32
  }
  func.func @transform_4(%arg0: i32) -> (i32, i32) {
    %c0_i32 = arith.constant 0 : i32
    %c0_i32_0 = arith.constant 0 : i32
    %c0_i32_1 = arith.constant 0 : i32
    return %c0_i32, %c0_i32_0 : i32, i32
  }
  func.func @transform_5(%arg0: i32) -> (i32, i32) {
    %c0_i32 = arith.constant 0 : i32
    %c0_i32_0 = arith.constant 0 : i32
    %c0_i32_1 = arith.constant 0 : i32
    return %c0_i32, %c0_i32_0 : i32, i32
  }
  func.func @transform_6(%arg0: i32) -> (i32, i32) {
    %c0_i32 = arith.constant 0 : i32
    %c0_i32_0 = arith.constant 0 : i32
    %c0_i32_1 = arith.constant 0 : i32
    return %c0_i32, %c0_i32_0 : i32, i32
  }
  func.func @transform_7(%arg0: i32) -> (i32, i32) {
    %c0_i32 = arith.constant 0 : i32
    %c0_i32_0 = arith.constant 0 : i32
    %c0_i32_1 = arith.constant 0 : i32
    return %c0_i32, %c0_i32_0 : i32, i32
  }
  func.func @transform_8(%arg0: i32) -> (i32, i32) {
    %c0_i32 = arith.constant 0 : i32
    %c0_i32_0 = arith.constant 0 : i32
    %c0_i32_1 = arith.constant 0 : i32
    return %c0_i32, %c0_i32_0 : i32, i32
  }
  func.func @transform_9(%arg0: i32) -> (i32, i32) {
    %c0_i32 = arith.constant 0 : i32
    %c0_i32_0 = arith.constant 0 : i32
    return %arg0, %c0_i32 : i32, i32
  }
}

</mosaic_0001>

<llo_original>
// kernel: tpu_custom_call.1
$region0: #{tpu_custom_call.1}
  #allocation0 [shape = 'u32[]', space=smem, size = 0x4, offset = 0x4, fixed_abs, tag = 'smem constant byte address 0x4 - core index']
  #allocation1 [shape = 'u32[144,128]{1,0:T(1,128)}', space=vmem, size = 0x12000, scoped, tag = 'internal scratch']
  %s0 = inlined_call_operand.hbm [shape: f32[2,768], index: 0, kind: input, shape index: {}]
  %s1 = inlined_call_operand.hbm [shape: f32[2,768], index: 1, kind: input, shape index: {}]
  %s2 = inlined_call_operand.hbm [shape: bf16[768,768], index: 2, kind: input, shape index: {}]
  %s3 = inlined_call_operand.hbm [shape: bf16[768,768], index: 3, kind: input, shape index: {}]
  %s4 = inlined_call_operand.hbm [shape: f32[1,768], index: 4, kind: input, shape index: {}]
  %s5 = inlined_call_operand.hbm [shape: bf16[768,512], index: 5, kind: input, shape index: {}]
  %s6 = inlined_call_operand.hbm [shape: f32[1,512], index: 6, kind: input, shape index: {}]
  %s7 = inlined_call_operand.hbm [shape: bf16[512,128], index: 7, kind: input, shape index: {}]
  %s8 = inlined_call_operand.hbm [shape: f32[1,128], index: 8, kind: input, shape index: {}]
  %s9 = inlined_call_operand.hbm [shape: f32[2,128], index: 9, kind: output, shape index: {}]
  %s10 = sld [smem:[#allocation0]]
  $region82: #{tpu_custom_call.1} parent=0
    _
  %s12 = ssub.s32 1, %s10
  %s13 = scalar_select 0, %s12, %s10
  $region1: #{tpu_custom_call.1} parent=0
    #allocation2 [shape = 'u8[6144]{0}', space=vmem, size = 0x1800, scoped, tag = 'input window, operand 0, single buffered']
    #allocation3 [shape = 's32[1]{0}', space=sflag, size = 0x4, scoped, tag = 'scoped memory for tpu_custom_call.1']
    #allocation4 [shape = 's32[1]{0}', space=sflag, size = 0x4, scoped, tag = 'scoped memory for tpu_custom_call.1']
    #allocation5 [shape = 'u8[6144]{0}', space=vmem, size = 0x1800, scoped, tag = 'input window, operand 1, single buffered']
    #allocation6 [shape = 's32[1]{0}', space=sflag, size = 0x4, scoped, tag = 'scoped memory for tpu_custom_call.1']
    #allocation7 [shape = 'u8[1179648]{0}', space=vmem, size = 0x120000, scoped, tag = 'input window, operand 2, single buffered']
    #allocation8 [shape = 'u8[1179648]{0}', space=vmem, size = 0x120000, scoped, tag = 'input window, operand 3, single buffered']
    #allocation9 [shape = 's32[1]{0}', space=sflag, size = 0x4, scoped, tag = 'scoped memory for tpu_custom_call.1']
    #allocation10 [shape = 'u8[3072]{0}', space=vmem, size = 0xc00, scoped, tag = 'input window, operand 4, single buffered']
    #allocation11 [shape = 'u8[786432]{0}', space=vmem, size = 0xc0000, scoped, tag = 'input window, operand 5, single buffered']
    #allocation12 [shape = 's32[1]{0}', space=sflag, size = 0x4, scoped, tag = 'scoped memory for tpu_custom_call.1']
    #allocation13 [shape = 'u8[2048]{0}', space=vmem, size = 0x800, scoped, tag = 'input window, operand 6, single buffered']
    #allocation14 [shape = 'u8[131072]{0}', space=vmem, size = 0x20000, scoped, tag = 'input window, operand 7, single buffered']
    #allocation15 [shape = 's32[1]{0}', space=sflag, size = 0x4, scoped, tag = 'scoped memory for tpu_custom_call.1']
    #allocation16 [shape = 'u8[512]{0}', space=vmem, size = 0x400, scoped, tag = 'input window, operand 8, single buffered']
    #allocation17 [shape = 'u8[1024]{0}', space=vmem, size = 0x400, scoped, tag = 'output window, operand 0, single buffered']
    %14 = vsyncpa [#allocation3], 0
    %15 = vsyncpa [#allocation6], 0
    %16 = vsyncpa [#allocation9], 0
    %17 = vsyncpa [#allocation12], 0
    %18 = vsyncpa [#allocation15], 0
    %19 = vsyncpa [#allocation4], 0
    // Predicated region
    $region2: #{tpu_custom_call.1} parent=1 // pred_check
      _
    $region3: #{tpu_custom_call.1} parent=1 // pred_check_branch
      %21 = sbr.rel (0) target = $region5
    $region4: #{tpu_custom_call.1} parent=1 // pred_region
      %s23 = ssub.s32 192, 192
      %24 = vsyncadd [#allocation3], %s23
      %s26 = sshll.u32 [#allocation2], 4
      %s27 = int_to_ptr.vmem [resolvable:$true] %s26
      %29 = dma.hbm_to_vmem [thread:$0]  %s0, 192, %s27, [#allocation3]
    $region5: #{tpu_custom_call.1} parent=1 // pred_fallthru
      _
    // Predicated region
    $region6: #{tpu_custom_call.1} parent=1 // pred_check
      _
    $region7: #{tpu_custom_call.1} parent=1 // pred_check_branch
      %31 = sbr.rel (0) target = $region9
    $region8: #{tpu_custom_call.1} parent=1 // pred_region
      %s33 = ssub.s32 192, 192
      %34 = vsyncadd [#allocation6], %s33
      %s36 = sshll.u32 [#allocation5], 4
      %s37 = int_to_ptr.vmem [resolvable:$true] %s36
      %39 = dma.hbm_to_vmem [thread:$0]  %s1, 192, %s37, [#allocation6]
    $region9: #{tpu_custom_call.1} parent=1 // pred_fallthru
      _
    // Predicated region
    $region10: #{tpu_custom_call.1} parent=1 // pred_check
      _
    $region11: #{tpu_custom_call.1} parent=1 // pred_check_branch
      %41 = sbr.rel (0) target = $region13
    $region12: #{tpu_custom_call.1} parent=1 // pred_region
      %s43 = ssub.s32 36864, 36864
      %44 = vsyncadd [#allocation6], %s43
      %s45 = sshll.u32 [#allocation7], 4
      %s46 = int_to_ptr.vmem [resolvable:$true] %s45
      %51 = dma.hbm_to_vmem [thread:$0]  %s2, 36864, %s46, [#allocation6], 384, 384, 24
    $region13: #{tpu_custom_call.1} parent=1 // pred_fallthru
      _
    // Predicated region
    $region14: #{tpu_custom_call.1} parent=1 // pred_check
      _
    $region15: #{tpu_custom_call.1} parent=1 // pred_check_branch
      %53 = sbr.rel (0) target = $region17
    $region16: #{tpu_custom_call.1} parent=1 // pred_region
      %s55 = ssub.s32 36864, 36864
      %56 = vsyncadd [#allocation9], %s55
      %s57 = sshll.u32 [#allocation8], 4
      %s58 = int_to_ptr.vmem [resolvable:$true] %s57
      %63 = dma.hbm_to_vmem [thread:$0]  %s3, 36864, %s58, [#allocation9], 384, 384, 24
    $region17: #{tpu_custom_call.1} parent=1 // pred_fallthru
      _
    // Predicated region
    $region18: #{tpu_custom_call.1} parent=1 // pred_check
      _
    $region19: #{tpu_custom_call.1} parent=1 // pred_check_branch
      %65 = sbr.rel (0) target = $region21
    $region20: #{tpu_custom_call.1} parent=1 // pred_region
      %s67 = ssub.s32 96, 96
      %68 = vsyncadd [#allocation9], %s67
      %s70 = sshll.u32 [#allocation10], 4
      %s71 = int_to_ptr.vmem [resolvable:$true] %s70
      %73 = dma.hbm_to_vmem [thread:$0]  %s4, 96, %s71, [#allocation9]
    $region21: #{tpu_custom_call.1} parent=1 // pred_fallthru
      _
    // Predicated region
    $region22: #{tpu_custom_call.1} parent=1 // pred_check
      _
    $region23: #{tpu_custom_call.1} parent=1 // pred_check_branch
      %75 = sbr.rel (0) target = $region25
    $region24: #{tpu_custom_call.1} parent=1 // pred_region
      %s77 = ssub.s32 24576, 24576
      %78 = vsyncadd [#allocation12], %s77
      %s79 = sshll.u32 [#allocation11], 4
      %s80 = int_to_ptr.vmem [resolvable:$true] %s79
      %85 = dma.hbm_to_vmem [thread:$0]  %s5, 24576, %s80, [#allocation12], 256, 256, 16
    $region25: #{tpu_custom_call.1} parent=1 // pred_fallthru
      _
    // Predicated region
    $region26: #{tpu_custom_call.1} parent=1 // pred_check
      _
    $region27: #{tpu_custom_call.1} parent=1 // pred_check_branch
      %87 = sbr.rel (0) target = $region29
    $region28: #{tpu_custom_call.1} parent=1 // pred_region
      %s89 = ssub.s32 64, 64
      %90 = vsyncadd [#allocation12], %s89
      %s92 = sshll.u32 [#allocation13], 4
      %s93 = int_to_ptr.vmem [resolvable:$true] %s92
      %95 = dma.hbm_to_vmem [thread:$0]  %s6, 64, %s93, [#allocation12]
    $region29: #{tpu_custom_call.1} parent=1 // pred_fallthru
      _
    // Predicated region
    $region30: #{tpu_custom_call.1} parent=1 // pred_check
      _
    $region31: #{tpu_custom_call.1} parent=1 // pred_check_branch
      %97 = sbr.rel (0) target = $region33
    $region32: #{tpu_custom_call.1} parent=1 // pred_region
      %s99 = ssub.s32 4096, 4096
      %100 = vsyncadd [#allocation15], %s99
      %s101 = sshll.u32 [#allocation14], 4
      %s102 = int_to_ptr.vmem [resolvable:$true] %s101
      %107 = dma.hbm_to_vmem [thread:$0]  %s7, 4096, %s102, [#allocation15], 64, 64, 4
    $region33: #{tpu_custom_call.1} parent=1 // pred_fallthru
      _
    // Predicated region
    $region34: #{tpu_custom_call.1} parent=1 // pred_check
      _
    $region35: #{tpu_custom_call.1} parent=1 // pred_check_branch
      %109 = sbr.rel (0) target = $region37
    $region36: #{tpu_custom_call.1} parent=1 // pred_region
      %s111 = ssub.s32 16, 16
      %112 = vsyncadd [#allocation15], %s111
      %s114 = sshll.u32 [#allocation16], 4
      %s115 = int_to_ptr.vmem [resolvable:$true] %s114
      %117 = dma.hbm_to_vmem [thread:$0]  %s8, 16, %s115, [#allocation15]
    $region37: #{tpu_custom_call.1} parent=1 // pred_fallthru
      _
    // Predicated region
    $region38: #{tpu_custom_call.1} parent=1 // pred_check
      _
    $region39: #{tpu_custom_call.1} parent=1 // pred_check_branch
      %119 = sbr.rel (0) target = $region41
    $region40: #{tpu_custom_call.1} parent=1 // pred_region
      %120 = dma.done [#allocation3], 192
    $region41: #{tpu_custom_call.1} parent=1 // pred_fallthru
      _
    // Predicated region
    $region42: #{tpu_custom_call.1} parent=1 // pred_check
      _
    $region43: #{tpu_custom_call.1} parent=1 // pred_check_branch
      %122 = sbr.rel (0) target = $region45
    $region44: #{tpu_custom_call.1} parent=1 // pred_region
      %123 = dma.done [#allocation6], 192
    $region45: #{tpu_custom_call.1} parent=1 // pred_fallthru
      _
    // Predicated region
    $region46: #{tpu_custom_call.1} parent=1 // pred_check
      _
    $region47: #{tpu_custom_call.1} parent=1 // pred_check_branch
      %125 = sbr.rel (0) target = $region49
    $region48: #{tpu_custom_call.1} parent=1 // pred_region
      %126 = dma.done [#allocation6], 36864
    $region49: #{tpu_custom_call.1} parent=1 // pred_fallthru
      _
    // Predicated region
    $region50: #{tpu_custom_call.1} parent=1 // pred_check
      _
    $region51: #{tpu_custom_call.1} parent=1 // pred_check_branch
      %128 = sbr.rel (0) target = $region53
    $region52: #{tpu_custom_call.1} parent=1 // pred_region
      %129 = dma.done [#allocation9], 36864
    $region53: #{tpu_custom_call.1} parent=1 // pred_fallthru
      _
    // Predicated region
    $region54: #{tpu_custom_call.1} parent=1 // pred_check
      _
    $region55: #{tpu_custom_call.1} parent=1 // pred_check_branch
      %131 = sbr.rel (0) target = $region57
    $region56: #{tpu_custom_call.1} parent=1 // pred_region
      %132 = dma.done [#allocation9], 96
    $region57: #{tpu_custom_call.1} parent=1 // pred_fallthru
      _
    // Predicated region
    $region58: #{tpu_custom_call.1} parent=1 // pred_check
      _
    $region59: #{tpu_custom_call.1} parent=1 // pred_check_branch
      %134 = sbr.rel (0) target = $region61
    $region60: #{tpu_custom_call.1} parent=1 // pred_region
      %135 = dma.done [#allocation12], 24576
    $region61: #{tpu_custom_call.1} parent=1 // pred_fallthru
      _
    // Predicated region
    $region62: #{tpu_custom_call.1} parent=1 // pred_check
      _
    $region63: #{tpu_custom_call.1} parent=1 // pred_check_branch
      %137 = sbr.rel (0) target = $region65
    $region64: #{tpu_custom_call.1} parent=1 // pred_region
      %138 = dma.done [#allocation12], 64
    $region65: #{tpu_custom_call.1} parent=1 // pred_fallthru
      _
    // Predicated region
    $region66: #{tpu_custom_call.1} parent=1 // pred_check
      _
    $region67: #{tpu_custom_call.1} parent=1 // pred_check_branch
      %140 = sbr.rel (0) target = $region69
    $region68: #{tpu_custom_call.1} parent=1 // pred_region
      %141 = dma.done [#allocation15], 4096
    $region69: #{tpu_custom_call.1} parent=1 // pred_fallthru
      _
    // Predicated region
    $region70: #{tpu_custom_call.1} parent=1 // pred_check
      _
    $region71: #{tpu_custom_call.1} parent=1 // pred_check_branch
      %143 = sbr.rel (0) target = $region73
    $region72: #{tpu_custom_call.1} parent=1 // pred_region
      %144 = dma.done [#allocation15], 16
    $region73: #{tpu_custom_call.1} parent=1 // pred_fallthru
      _
    %v146 = vld [vmem:[#allocation2] sm:$0xff]
    %v147 = vld [vmem:[#allocation2 + $0x8] sm:$0xf]
    %v150 = vcombine.high %v146, %v146
    %v152 = vunpack.c.l.s4 1983009808
    %v153 = vunpack.c.0.s8 %v152
    %v154 = vlaneseq
    %v155 = vshrl.u32 %v154, 7
    %v156 = vsub.s32 %v153, %v155
    %v157 = vrot.slane %v146, %v156
    %v159 = vunpack.c.l.s4 1983009808
    %v160 = vunpack.c.0.s8 %v159
    %v161 = vlaneseq
    %v162 = vshrl.u32 %v161, 7
    %v163 = vsub.s32 %v160, %v162
    %v164 = vrot.slane %v150, %v163
    %v165 = vcombine.high %v157, %v157
    %v166 = vcombine.high %v164, %v164
    %v168 = vunpack.c.l.s4 1983009808
    %v169 = vunpack.c.0.s8 %v168
    %v170 = vlaneseq
    %v171 = vshrl.u32 %v170, 7
    %v172 = vsub.s32 %v169, %v171
    %v173 = vrot.slane %v147, %v172
    %v174 = vcombine.high %v173, %v173
    %v181 = vpack.c.bf16 %v157, %v157
    %v182 = vpack.c.bf16 %v165, %v165
    %v183 = vpack.c.bf16 %v164, %v164
    %v184 = vpack.c.bf16 %v166, %v166
    %v185 = vpack.c.bf16 %v173, %v173
    %v186 = vpack.c.bf16 %v174, %v174
    %v187 = vld [vmem:[#allocation5] sm:$0xff]
    %v188 = vld [vmem:[#allocation5 + $0x8] sm:$0xf]
    %v191 = vcombine.high %v187, %v187
    %v193 = vunpack.c.l.s4 1983009808
    %v194 = vunpack.c.0.s8 %v193
    %v195 = vlaneseq
    %v196 = vshrl.u32 %v195, 7
    %v197 = vsub.s32 %v194, %v196
    %v198 = vrot.slane %v187, %v197
    %v200 = vunpack.c.l.s4 1983009808
    %v201 = vunpack.c.0.s8 %v200
    %v202 = vlaneseq
    %v203 = vshrl.u32 %v202, 7
    %v204 = vsub.s32 %v201, %v203
    %v205 = vrot.slane %v191, %v204
    %v206 = vcombine.high %v198, %v198
    %v207 = vcombine.high %v205, %v205
    %v209 = vunpack.c.l.s4 1983009808
    %v210 = vunpack.c.0.s8 %v209
    %v211 = vlaneseq
    %v212 = vshrl.u32 %v211, 7
    %v213 = vsub.s32 %v210, %v212
    %v214 = vrot.slane %v188, %v213
    %v215 = vcombine.high %v214, %v214
    %v222 = vpack.c.bf16 %v198, %v198
    %v223 = vpack.c.bf16 %v206, %v206
    %v224 = vpack.c.bf16 %v205, %v205
    %v225 = vpack.c.bf16 %v207, %v207
    %v226 = vpack.c.bf16 %v214, %v214
    %v227 = vpack.c.bf16 %v215, %v215
    %v228 = vld [vmem:[#allocation7] sm:$0xff]
    %v229 = vld [vmem:[#allocation7 + $0x8] sm:$0xff]
    %v230 = vld [vmem:[#allocation7 + $0x10] sm:$0xff]
    %v231 = vld [vmem:[#allocation7 + $0x18] sm:$0xff]
    %v232 = vld [vmem:[#allocation7 + $0x20] sm:$0xff]
    %v233 = vld [vmem:[#allocation7 + $0x28] sm:$0xff]
    %v234 = vld [vmem:[#allocation7 + $0x30] sm:$0xff]
    %v235 = vld [vmem:[#allocation7 + $0x38] sm:$0xff]
    %v236 = vld [vmem:[#allocation7 + $0x40] sm:$0xff]
    %v237 = vld [vmem:[#allocation7 + $0x48] sm:$0xff]
    %v238 = vld [vmem:[#allocation7 + $0x50] sm:$0xff]
    %v239 = vld [vmem:[#allocation7 + $0x58] sm:$0xff]
    %v240 = vld [vmem:[#allocation7 + $0x60] sm:$0xff]
    %v241 = vld [vmem:[#allocation7 + $0x68] sm:$0xff]
    %v242 = vld [vmem:[#allocation7 + $0x70] sm:$0xff]
    %v243 = vld [vmem:[#allocation7 + $0x78] sm:$0xff]
    %v244 = vld [vmem:[#allocation7 + $0x80] sm:$0xff]
    %v245 = vld [vmem:[#allocation7 + $0x88] sm:$0xff]
    %v246 = vld [vmem:[#allocation7 + $0x90] sm:$0xff]
    %v247 = vld [vmem:[#allocation7 + $0x98] sm:$0xff]
    %v248 = vld [vmem:[#allocation7 + $0xa0] sm:$0xff]
    %v249 = vld [vmem:[#allocation7 + $0xa8] sm:$0xff]
    %v250 = vld [vmem:[#allocation7 + $0xb0] sm:$0xff]
    %v251 = vld [vmem:[#allocation7 + $0xb8] sm:$0xff]
    %v252 = vld [vmem:[#allocation7 + $0xc0] sm:$0xff]
    %v253 = vld [vmem:[#allocation7 + $0xc8] sm:$0xff]
    %v254 = vld [vmem:[#allocation7 + $0xd0] sm:$0xff]
    %v255 = vld [vmem:[#allocation7 + $0xd8] sm:$0xff]
    %v256 = vld [vmem:[#allocation7 + $0xe0] sm:$0xff]
    %v257 = vld [vmem:[#allocation7 + $0xe8] sm:$0xff]
    %v258 = vld [vmem:[#allocation7 + $0xf0] sm:$0xff]
    %v259 = vld [vmem:[#allocation7 + $0xf8] sm:$0xff]
    %v260 = vld [vmem:[#allocation7 + $0x100] sm:$0xff]
    %v261 = vld [vmem:[#allocation7 + $0x108] sm:$0xff]
    %v262 = vld [vmem:[#allocation7 + $0x110] sm:$0xff]
    %v263 = vld [vmem:[#allocation7 + $0x118] sm:$0xff]
    %v264 = vld [vmem:[#allocation7 + $0x120] sm:$0xff]
    %v265 = vld [vmem:[#allocation7 + $0x128] sm:$0xff]
    %v266 = vld [vmem:[#allocation7 + $0x130] sm:$0xff]
    %v267 = vld [vmem:[#allocation7 + $0x138] sm:$0xff]
    %v268 = vld [vmem:[#allocation7 + $0x140] sm:$0xff]
    %v269 = vld [vmem:[#allocation7 + $0x148] sm:$0xff]
    %v270 = vld [vmem:[#allocation7 + $0x150] sm:$0xff]
    %v271 = vld [vmem:[#allocation7 + $0x158] sm:$0xff]
    %v272 = vld [vmem:[#allocation7 + $0x160] sm:$0xff]
    %v273 = vld [vmem:[#allocation7 + $0x168] sm:$0xff]
    %v274 = vld [vmem:[#allocation7 + $0x170] sm:$0xff]
    %v275 = vld [vmem:[#allocation7 + $0x178] sm:$0xff]
    %v276 = vld [vmem:[#allocation7 + $0x180] sm:$0xff]
    %v277 = vld [vmem:[#allocation7 + $0x188] sm:$0xff]
    %v278 = vld [vmem:[#allocation7 + $0x190] sm:$0xff]
    %v279 = vld [vmem:[#allocation7 + $0x198] sm:$0xff]
    %v280 = vld [vmem:[#allocation7 + $0x1a0] sm:$0xff]
    %v281 = vld [vmem:[#allocation7 + $0x1a8] sm:$0xff]
    %v282 = vld [vmem:[#allocation7 + $0x1b0] sm:$0xff]
    %v283 = vld [vmem:[#allocation7 + $0x1b8] sm:$0xff]
    %v284 = vld [vmem:[#allocation7 + $0x1c0] sm:$0xff]
    %v285 = vld [vmem:[#allocation7 + $0x1c8] sm:$0xff]
    %v286 = vld [vmem:[#allocation7 + $0x1d0] sm:$0xff]
    %v287 = vld [vmem:[#allocation7 + $0x1d8] sm:$0xff]
    %v288 = vld [vmem:[#allocation7 + $0x1e0] sm:$0xff]
    %v289 = vld [vmem:[#allocation7 + $0x1e8] sm:$0xff]
    %v290 = vld [vmem:[#allocation7 + $0x1f0] sm:$0xff]
    %v291 = vld [vmem:[#allocation7 + $0x1f8] sm:$0xff]
    %v292 = vld [vmem:[#allocation7 + $0x200] sm:$0xff]
    %v293 = vld [vmem:[#allocation7 + $0x208] sm:$0xff]
    %v294 = vld [vmem:[#allocation7 + $0x210] sm:$0xff]
    %v295 = vld [vmem:[#allocation7 + $0x218] sm:$0xff]
    %v296 = vld [vmem:[#allocation7 + $0x220] sm:$0xff]
    %v297 = vld [vmem:[#allocation7 + $0x228] sm:$0xff]
    %v298 = vld [vmem:[#allocation7 + $0x230] sm:$0xff]
    %v299 = vld [vmem:[#allocation7 + $0x238] sm:$0xff]
    %v300 = vld [vmem:[#allocation7 + $0x240] sm:$0xff]
    %v301 = vld [vmem:[#allocation7 + $0x248] sm:$0xff]
    %v302 = vld [vmem:[#allocation7 + $0x250] sm:$0xff]
    %v303 = vld [vmem:[#allocation7 + $0x258] sm:$0xff]
    %v304 = vld [vmem:[#allocation7 + $0x260] sm:$0xff]
    %v305 = vld [vmem:[#allocation7 + $0x268] sm:$0xff]
    %v306 = vld [vmem:[#allocation7 + $0x270] sm:$0xff]
    %v307 = vld [vmem:[#allocation7 + $0x278] sm:$0xff]
    %v308 = vld [vmem:[#allocation7 + $0x280] sm:$0xff]
    %v309 = vld [vmem:[#allocation7 + $0x288] sm:$0xff]
    %v310 = vld [vmem:[#allocation7 + $0x290] sm:$0xff]
    %v311 = vld [vmem:[#allocation7 + $0x298] sm:$0xff]
    %v312 = vld [vmem:[#allocation7 + $0x2a0] sm:$0xff]
    %v313 = vld [vmem:[#allocation7 + $0x2a8] sm:$0xff]
    %v314 = vld [vmem:[#allocation7 + $0x2b0] sm:$0xff]
    %v315 = vld [vmem:[#allocation7 + $0x2b8] sm:$0xff]
    %v316 = vld [vmem:[#allocation7 + $0x2c0] sm:$0xff]
    %v317 = vld [vmem:[#allocation7 + $0x2c8] sm:$0xff]
    %v318 = vld [vmem:[#allocation7 + $0x2d0] sm:$0xff]
    %v319 = vld [vmem:[#allocation7 + $0x2d8] sm:$0xff]
    %v320 = vld [vmem:[#allocation7 + $0x2e0] sm:$0xff]
    %v321 = vld [vmem:[#allocation7 + $0x2e8] sm:$0xff]
    %v322 = vld [vmem:[#allocation7 + $0x2f0] sm:$0xff]
    %v323 = vld [vmem:[#allocation7 + $0x2f8] sm:$0xff]
    %v324 = vld [vmem:[#allocation7 + $0x300] sm:$0xff]
    %v325 = vld [vmem:[#allocation7 + $0x308] sm:$0xff]
    %v326 = vld [vmem:[#allocation7 + $0x310] sm:$0xff]
    %v327 = vld [vmem:[#allocation7 + $0x318] sm:$0xff]
    %v328 = vld [vmem:[#allocation7 + $0x320] sm:$0xff]
    %v329 = vld [vmem:[#allocation7 + $0x328] sm:$0xff]
    %v330 = vld [vmem:[#allocation7 + $0x330] sm:$0xff]
    %v331 = vld [vmem:[#allocation7 + $0x338] sm:$0xff]
    %v332 = vld [vmem:[#allocation7 + $0x340] sm:$0xff]
    %v333 = vld [vmem:[#allocation7 + $0x348] sm:$0xff]
    %v334 = vld [vmem:[#allocation7 + $0x350] sm:$0xff]
    %v335 = vld [vmem:[#allocation7 + $0x358] sm:$0xff]
    %v336 = vld [vmem:[#allocation7 + $0x360] sm:$0xff]
    %v337 = vld [vmem:[#allocation7 + $0x368] sm:$0xff]
    %v338 = vld [vmem:[#allocation7 + $0x370] sm:$0xff]
    %v339 = vld [vmem:[#allocation7 + $0x378] sm:$0xff]
    %v340 = vld [vmem:[#allocation7 + $0x380] sm:$0xff]
    %v341 = vld [vmem:[#allocation7 + $0x388] sm:$0xff]
    %v342 = vld [vmem:[#allocation7 + $0x390] sm:$0xff]
    %v343 = vld [vmem:[#allocation7 + $0x398] sm:$0xff]
    %v344 = vld [vmem:[#allocation7 + $0x3a0] sm:$0xff]
    %v345 = vld [vmem:[#allocation7 + $0x3a8] sm:$0xff]
    %v346 = vld [vmem:[#allocation7 + $0x3b0] sm:$0xff]
    %v347 = vld [vmem:[#allocation7 + $0x3b8] sm:$0xff]
    %v348 = vld [vmem:[#allocation7 + $0x3c0] sm:$0xff]
    %v349 = vld [vmem:[#allocation7 + $0x3c8] sm:$0xff]
    %v350 = vld [vmem:[#allocation7 + $0x3d0] sm:$0xff]
    %v351 = vld [vmem:[#allocation7 + $0x3d8] sm:$0xff]
    %v352 = vld [vmem:[#allocation7 + $0x3e0] sm:$0xff]
    %v353 = vld [vmem:[#allocation7 + $0x3e8] sm:$0xff]
    %v354 = vld [vmem:[#allocation7 + $0x3f0] sm:$0xff]
    %v355 = vld [vmem:[#allocation7 + $0x3f8] sm:$0xff]
    %v356 = vld [vmem:[#allocation7 + $0x400] sm:$0xff]
    %v357 = vld [vmem:[#allocation7 + $0x408] sm:$0xff]
    %v358 = vld [vmem:[#allocation7 + $0x410] sm:$0xff]
    %v359 = vld [vmem:[#allocation7 + $0x418] sm:$0xff]
    %v360 = vld [vmem:[#allocation7 + $0x420] sm:$0xff]
    %v361 = vld [vmem:[#allocation7 + $0x428] sm:$0xff]
    %v362 = vld [vmem:[#allocation7 + $0x430] sm:$0xff]
    %v363 = vld [vmem:[#allocation7 + $0x438] sm:$0xff]
    %v364 = vld [vmem:[#allocation7 + $0x440] sm:$0xff]
    %v365 = vld [vmem:[#allocation7 + $0x448] sm:$0xff]
    %v366 = vld [vmem:[#allocation7 + $0x450] sm:$0xff]
    %v367 = vld [vmem:[#allocation7 + $0x458] sm:$0xff]
    %v368 = vld [vmem:[#allocation7 + $0x460] sm:$0xff]
    %v369 = vld [vmem:[#allocation7 + $0x468] sm:$0xff]
    %v370 = vld [vmem:[#allocation7 + $0x470] sm:$0xff]
    %v371 = vld [vmem:[#allocation7 + $0x478] sm:$0xff]
    %v372 = vld [vmem:[#allocation7 + $0x480] sm:$0xff]
    %v373 = vld [vmem:[#allocation7 + $0x488] sm:$0xff]
    %v374 = vld [vmem:[#allocation7 + $0x490] sm:$0xff]
    %v375 = vld [vmem:[#allocation7 + $0x498] sm:$0xff]
    %v376 = vld [vmem:[#allocation7 + $0x4a0] sm:$0xff]
    %v377 = vld [vmem:[#allocation7 + $0x4a8] sm:$0xff]
    %v378 = vld [vmem:[#allocation7 + $0x4b0] sm:$0xff]
    %v379 = vld [vmem:[#allocation7 + $0x4b8] sm:$0xff]
    %v380 = vld [vmem:[#allocation7 + $0x4c0] sm:$0xff]
    %v381 = vld [vmem:[#allocation7 + $0x4c8] sm:$0xff]
    %v382 = vld [vmem:[#allocation7 + $0x4d0] sm:$0xff]
    %v383 = vld [vmem:[#allocation7 + $0x4d8] sm:$0xff]
    %v384 = vld [vmem:[#allocation7 + $0x4e0] sm:$0xff]
    %v385 = vld [vmem:[#allocation7 + $0x4e8] sm:$0xff]
    %v386 = vld [vmem:[#allocation7 + $0x4f0] sm:$0xff]
    %v387 = vld [vmem:[#allocation7 + $0x4f8] sm:$0xff]
    %v388 = vld [vmem:[#allocation7 + $0x500] sm:$0xff]
    %v389 = vld [vmem:[#allocation7 + $0x508] sm:$0xff]
    %v390 = vld [vmem:[#allocation7 + $0x510] sm:$0xff]
    %v391 = vld [vmem:[#allocation7 + $0x518] sm:$0xff]
    %v392 = vld [vmem:[#allocation7 + $0x520] sm:$0xff]
    %v393 = vld [vmem:[#allocation7 + $0x528] sm:$0xff]
    %v394 = vld [vmem:[#allocation7 + $0x530] sm:$0xff]
    %v395 = vld [vmem:[#allocation7 + $0x538] sm:$0xff]
    %v396 = vld [vmem:[#allocation7 + $0x540] sm:$0xff]
    %v397 = vld [vmem:[#allocation7 + $0x548] sm:$0xff]
    %v398 = vld [vmem:[#allocation7 + $0x550] sm:$0xff]
    %v399 = vld [vmem:[#allocation7 + $0x558] sm:$0xff]
    %v400 = vld [vmem:[#allocation7 + $0x560] sm:$0xff]
    %v401 = vld [vmem:[#allocation7 + $0x568] sm:$0xff]
    %v402 = vld [vmem:[#allocation7 + $0x570] sm:$0xff]
    %v403 = vld [vmem:[#allocation7 + $0x578] sm:$0xff]
    %v404 = vld [vmem:[#allocation7 + $0x580] sm:$0xff]
    %v405 = vld [vmem:[#allocation7 + $0x588] sm:$0xff]
    %v406 = vld [vmem:[#allocation7 + $0x590] sm:$0xff]
    %v407 = vld [vmem:[#allocation7 + $0x598] sm:$0xff]
    %v408 = vld [vmem:[#allocation7 + $0x5a0] sm:$0xff]
    %v409 = vld [vmem:[#allocation7 + $0x5a8] sm:$0xff]
    %v410 = vld [vmem:[#allocation7 + $0x5b0] sm:$0xff]
    %v411 = vld [vmem:[#allocation7 + $0x5b8] sm:$0xff]
    %v412 = vld [vmem:[#allocation7 + $0x5c0] sm:$0xff]
    %v413 = vld [vmem:[#allocation7 + $0x5c8] sm:$0xff]
    %v414 = vld [vmem:[#allocation7 + $0x5d0] sm:$0xff]
    %v415 = vld [vmem:[#allocation7 + $0x5d8] sm:$0xff]
    %v416 = vld [vmem:[#allocation7 + $0x5e0] sm:$0xff]
    %v417 = vld [vmem:[#allocation7 + $0x5e8] sm:$0xff]
    %v418 = vld [vmem:[#allocation7 + $0x5f0] sm:$0xff]
    %v419 = vld [vmem:[#allocation7 + $0x5f8] sm:$0xff]
    %v420 = vld [vmem:[#allocation7 + $0x600] sm:$0xff]
    %v421 = vld [vmem:[#allocation7 + $0x608] sm:$0xff]
    %v422 = vld [vmem:[#allocation7 + $0x610] sm:$0xff]
    %v423 = vld [vmem:[#allocation7 + $0x618] sm:$0xff]
    %v424 = vld [vmem:[#allocation7 + $0x620] sm:$0xff]
    %v425 = vld [vmem:[#allocation7 + $0x628] sm:$0xff]
    %v426 = vld [vmem:[#allocation7 + $0x630] sm:$0xff]
    %v427 = vld [vmem:[#allocation7 + $0x638] sm:$0xff]
    %v428 = vld [vmem:[#allocation7 + $0x640] sm:$0xff]
    %v429 = vld [vmem:[#allocation7 + $0x648] sm:$0xff]
    %v430 = vld [vmem:[#allocation7 + $0x650] sm:$0xff]
    %v431 = vld [vmem:[#allocation7 + $0x658] sm:$0xff]
    %v432 = vld [vmem:[#allocation7 + $0x660] sm:$0xff]
    %v433 = vld [vmem:[#allocation7 + $0x668] sm:$0xff]
    %v434 = vld [vmem:[#allocation7 + $0x670] sm:$0xff]
    %v435 = vld [vmem:[#allocation7 + $0x678] sm:$0xff]
    %v436 = vld [vmem:[#allocation7 + $0x680] sm:$0xff]
    %v437 = vld [vmem:[#allocation7 + $0x688] sm:$0xff]
    %v438 = vld [vmem:[#allocation7 + $0x690] sm:$0xff]
    %v439 = vld [vmem:[#allocation7 + $0x698] sm:$0xff]
    %v440 = vld [vmem:[#allocation7 + $0x6a0] sm:$0xff]
    %v441 = vld [vmem:[#allocation7 + $0x6a8] sm:$0xff]
    %v442 = vld [vmem:[#allocation7 + $0x6b0] sm:$0xff]
    %v443 = vld [vmem:[#allocation7 + $0x6b8] sm:$0xff]
    %v444 = vld [vmem:[#allocation7 + $0x6c0] sm:$0xff]
    %v445 = vld [vmem:[#allocation7 + $0x6c8] sm:$0xff]
    %v446 = vld [vmem:[#allocation7 + $0x6d0] sm:$0xff]
    %v447 = vld [vmem:[#allocation7 + $0x6d8] sm:$0xff]
    %v448 = vld [vmem:[#allocation7 + $0x6e0] sm:$0xff]
    %v449 = vld [vmem:[#allocation7 + $0x6e8] sm:$0xff]
    %v450 = vld [vmem:[#allocation7 + $0x6f0] sm:$0xff]
    %v451 = vld [vmem:[#allocation7 + $0x6f8] sm:$0xff]
    %v452 = vld [vmem:[#allocation7 + $0x700] sm:$0xff]
    %v453 = vld [vmem:[#allocation7 + $0x708] sm:$0xff]
    %v454 = vld [vmem:[#allocation7 + $0x710] sm:$0xff]
    %v455 = vld [vmem:[#allocation7 + $0x718] sm:$0xff]
    %v456 = vld [vmem:[#allocation7 + $0x720] sm:$0xff]
    %v457 = vld [vmem:[#allocation7 + $0x728] sm:$0xff]
    %v458 = vld [vmem:[#allocation7 + $0x730] sm:$0xff]
    %v459 = vld [vmem:[#allocation7 + $0x738] sm:$0xff]
    %v460 = vld [vmem:[#allocation7 + $0x740] sm:$0xff]
    %v461 = vld [vmem:[#allocation7 + $0x748] sm:$0xff]
    %v462 = vld [vmem:[#allocation7 + $0x750] sm:$0xff]
    %v463 = vld [vmem:[#allocation7 + $0x758] sm:$0xff]
    %v464 = vld [vmem:[#allocation7 + $0x760] sm:$0xff]
    %v465 = vld [vmem:[#allocation7 + $0x768] sm:$0xff]
    %v466 = vld [vmem:[#allocation7 + $0x770] sm:$0xff]
    %v467 = vld [vmem:[#allocation7 + $0x778] sm:$0xff]
    %v468 = vld [vmem:[#allocation7 + $0x780] sm:$0xff]
    %v469 = vld [vmem:[#allocation7 + $0x788] sm:$0xff]
    %v470 = vld [vmem:[#allocation7 + $0x790] sm:$0xff]
    %v471 = vld [vmem:[#allocation7 + $0x798] sm:$0xff]
    %v472 = vld [vmem:[#allocation7 + $0x7a0] sm:$0xff]
    %v473 = vld [vmem:[#allocation7 + $0x7a8] sm:$0xff]
    %v474 = vld [vmem:[#allocation7 + $0x7b0] sm:$0xff]
    %v475 = vld [vmem:[#allocation7 + $0x7b8] sm:$0xff]
    %v476 = vld [vmem:[#allocation7 + $0x7c0] sm:$0xff]
    %v477 = vld [vmem:[#allocation7 + $0x7c8] sm:$0xff]
    %v478 = vld [vmem:[#allocation7 + $0x7d0] sm:$0xff]
    %v479 = vld [vmem:[#allocation7 + $0x7d8] sm:$0xff]
    %v480 = vld [vmem:[#allocation7 + $0x7e0] sm:$0xff]
    %v481 = vld [vmem:[#allocation7 + $0x7e8] sm:$0xff]
    %v482 = vld [vmem:[#allocation7 + $0x7f0] sm:$0xff]
    %v483 = vld [vmem:[#allocation7 + $0x7f8] sm:$0xff]
    %v484 = vld [vmem:[#allocation7 + $0x800] sm:$0xff]
    %v485 = vld [vmem:[#allocation7 + $0x808] sm:$0xff]
    %v486 = vld [vmem:[#allocation7 + $0x810] sm:$0xff]
    %v487 = vld [vmem:[#allocation7 + $0x818] sm:$0xff]
    %v488 = vld [vmem:[#allocation7 + $0x820] sm:$0xff]
    %v489 = vld [vmem:[#allocation7 + $0x828] sm:$0xff]
    %v490 = vld [vmem:[#allocation7 + $0x830] sm:$0xff]
    %v491 = vld [vmem:[#allocation7 + $0x838] sm:$0xff]
    %v492 = vld [vmem:[#allocation7 + $0x840] sm:$0xff]
    %v493 = vld [vmem:[#allocation7 + $0x848] sm:$0xff]
    %v494 = vld [vmem:[#allocation7 + $0x850] sm:$0xff]
    %v495 = vld [vmem:[#allocation7 + $0x858] sm:$0xff]
    %v496 = vld [vmem:[#allocation7 + $0x860] sm:$0xff]
    %v497 = vld [vmem:[#allocation7 + $0x868] sm:$0xff]
    %v498 = vld [vmem:[#allocation7 + $0x870] sm:$0xff]
    %v499 = vld [vmem:[#allocation7 + $0x878] sm:$0xff]
    %v500 = vld [vmem:[#allocation7 + $0x880] sm:$0xff]
    %v501 = vld [vmem:[#allocation7 + $0x888] sm:$0xff]
    %v502 = vld [vmem:[#allocation7 + $0x890] sm:$0xff]
    %v503 = vld [vmem:[#allocation7 + $0x898] sm:$0xff]
    %v504 = vld [vmem:[#allocation7 + $0x8a0] sm:$0xff]
    %v505 = vld [vmem:[#allocation7 + $0x8a8] sm:$0xff]
    %v506 = vld [vmem:[#allocation7 + $0x8b0] sm:$0xff]
    %v507 = vld [vmem:[#allocation7 + $0x8b8] sm:$0xff]
    %v508 = vld [vmem:[#allocation7 + $0x8c0] sm:$0xff]
    %v509 = vld [vmem:[#allocation7 + $0x8c8] sm:$0xff]
    %v510 = vld [vmem:[#allocation7 + $0x8d0] sm:$0xff]
    %v511 = vld [vmem:[#allocation7 + $0x8d8] sm:$0xff]
    %v512 = vld [vmem:[#allocation7 + $0x8e0] sm:$0xff]
    %v513 = vld [vmem:[#allocation7 + $0x8e8] sm:$0xff]
    %v514 = vld [vmem:[#allocation7 + $0x8f0] sm:$0xff]
    %v515 = vld [vmem:[#allocation7 + $0x8f8] sm:$0xff]
    %v516 = vld [vmem:[#allocation8] sm:$0xff]
    %v517 = vld [vmem:[#allocation8 + $0x8] sm:$0xff]
    %v518 = vld [vmem:[#allocation8 + $0x10] sm:$0xff]
    %v519 = vld [vmem:[#allocation8 + $0x18] sm:$0xff]
    %v520 = vld [vmem:[#allocation8 + $0x20] sm:$0xff]
    %v521 = vld [vmem:[#allocation8 + $0x28] sm:$0xff]
    %v522 = vld [vmem:[#allocation8 + $0x30] sm:$0xff]
    %v523 = vld [vmem:[#allocation8 + $0x38] sm:$0xff]
    %v524 = vld [vmem:[#allocation8 + $0x40] sm:$0xff]
    %v525 = vld [vmem:[#allocation8 + $0x48] sm:$0xff]
    %v526 = vld [vmem:[#allocation8 + $0x50] sm:$0xff]
    %v527 = vld [vmem:[#allocation8 + $0x58] sm:$0xff]
    %v528 = vld [vmem:[#allocation8 + $0x60] sm:$0xff]
    %v529 = vld [vmem:[#allocation8 + $0x68] sm:$0xff]
    %v530 = vld [vmem:[#allocation8 + $0x70] sm:$0xff]
    %v531 = vld [vmem:[#allocation8 + $0x78] sm:$0xff]
    %v532 = vld [vmem:[#allocation8 + $0x80] sm:$0xff]
    %v533 = vld [vmem:[#allocation8 + $0x88] sm:$0xff]
    %v534 = vld [vmem:[#allocation8 + $0x90] sm:$0xff]
    %v535 = vld [vmem:[#allocation8 + $0x98] sm:$0xff]
    %v536 = vld [vmem:[#allocation8 + $0xa0] sm:$0xff]
    %v537 = vld [vmem:[#allocation8 + $0xa8] sm:$0xff]
    %v538 = vld [vmem:[#allocation8 + $0xb0] sm:$0xff]
    %v539 = vld [vmem:[#allocation8 + $0xb8] sm:$0xff]
    %v540 = vld [vmem:[#allocation8 + $0xc0] sm:$0xff]
    %v541 = vld [vmem:[#allocation8 + $0xc8] sm:$0xff]
    %v542 = vld [vmem:[#allocation8 + $0xd0] sm:$0xff]
    %v543 = vld [vmem:[#allocation8 + $0xd8] sm:$0xff]
    %v544 = vld [vmem:[#allocation8 + $0xe0] sm:$0xff]
    %v545 = vld [vmem:[#allocation8 + $0xe8] sm:$0xff]
    %v546 = vld [vmem:[#allocation8 + $0xf0] sm:$0xff]
    %v547 = vld [vmem:[#allocation8 + $0xf8] sm:$0xff]
    %v548 = vld [vmem:[#allocation8 + $0x100] sm:$0xff]
    %v549 = vld [vmem:[#allocation8 + $0x108] sm:$0xff]
    %v550 = vld [vmem:[#allocation8 + $0x110] sm:$0xff]
    %v551 = vld [vmem:[#allocation8 + $0x118] sm:$0xff]
    %v552 = vld [vmem:[#allocation8 + $0x120] sm:$0xff]
    %v553 = vld [vmem:[#allocation8 + $0x128] sm:$0xff]
    %v554 = vld [vmem:[#allocation8 + $0x130] sm:$0xff]
    %v555 = vld [vmem:[#allocation8 + $0x138] sm:$0xff]
    %v556 = vld [vmem:[#allocation8 + $0x140] sm:$0xff]
    %v557 = vld [vmem:[#allocation8 + $0x148] sm:$0xff]
    %v558 = vld [vmem:[#allocation8 + $0x150] sm:$0xff]
    %v559 = vld [vmem:[#allocation8 + $0x158] sm:$0xff]
    %v560 = vld [vmem:[#allocation8 + $0x160] sm:$0xff]
    %v561 = vld [vmem:[#allocation8 + $0x168] sm:$0xff]
    %v562 = vld [vmem:[#allocation8 + $0x170] sm:$0xff]
    %v563 = vld [vmem:[#allocation8 + $0x178] sm:$0xff]
    %v564 = vld [vmem:[#allocation8 + $0x180] sm:$0xff]
    %v565 = vld [vmem:[#allocation8 + $0x188] sm:$0xff]
    %v566 = vld [vmem:[#allocation8 + $0x190] sm:$0xff]
    %v567 = vld [vmem:[#allocation8 + $0x198] sm:$0xff]
    %v568 = vld [vmem:[#allocation8 + $0x1a0] sm:$0xff]
    %v569 = vld [vmem:[#allocation8 + $0x1a8] sm:$0xff]
    %v570 = vld [vmem:[#allocation8 + $0x1b0] sm:$0xff]
    %v571 = vld [vmem:[#allocation8 + $0x1b8] sm:$0xff]
    %v572 = vld [vmem:[#allocation8 + $0x1c0] sm:$0xff]
    %v573 = vld [vmem:[#allocation8 + $0x1c8] sm:$0xff]
    %v574 = vld [vmem:[#allocation8 + $0x1d0] sm:$0xff]
    %v575 = vld [vmem:[#allocation8 + $0x1d8] sm:$0xff]
    %v576 = vld [vmem:[#allocation8 + $0x1e0] sm:$0xff]
    %v577 = vld [vmem:[#allocation8 + $0x1e8] sm:$0xff]
    %v578 = vld [vmem:[#allocation8 + $0x1f0] sm:$0xff]
    %v579 = vld [vmem:[#allocation8 + $0x1f8] sm:$0xff]
    %v580 = vld [vmem:[#allocation8 + $0x200] sm:$0xff]
    %v581 = vld [vmem:[#allocation8 + $0x208] sm:$0xff]
    %v582 = vld [vmem:[#allocation8 + $0x210] sm:$0xff]
    %v583 = vld [vmem:[#allocation8 + $0x218] sm:$0xff]
    %v584 = vld [vmem:[#allocation8 + $0x220] sm:$0xff]
    %v585 = vld [vmem:[#allocation8 + $0x228] sm:$0xff]
    %v586 = vld [vmem:[#allocation8 + $0x230] sm:$0xff]
    %v587 = vld [vmem:[#allocation8 + $0x238] sm:$0xff]
    %v588 = vld [vmem:[#allocation8 + $0x240] sm:$0xff]
    %v589 = vld [vmem:[#allocation8 + $0x248] sm:$0xff]
    %v590 = vld [vmem:[#allocation8 + $0x250] sm:$0xff]
    %v591 = vld [vmem:[#allocation8 + $0x258] sm:$0xff]
    %v592 = vld [vmem:[#allocation8 + $0x260] sm:$0xff]
    %v593 = vld [vmem:[#allocation8 + $0x268] sm:$0xff]
    %v594 = vld [vmem:[#allocation8 + $0x270] sm:$0xff]
    %v595 = vld [vmem:[#allocation8 + $0x278] sm:$0xff]
    %v596 = vld [vmem:[#allocation8 + $0x280] sm:$0xff]
    %v597 = vld [vmem:[#allocation8 + $0x288] sm:$0xff]
    %v598 = vld [vmem:[#allocation8 + $0x290] sm:$0xff]
    %v599 = vld [vmem:[#allocation8 + $0x298] sm:$0xff]
    %v600 = vld [vmem:[#allocation8 + $0x2a0] sm:$0xff]
    %v601 = vld [vmem:[#allocation8 + $0x2a8] sm:$0xff]
    %v602 = vld [vmem:[#allocation8 + $0x2b0] sm:$0xff]
    %v603 = vld [vmem:[#allocation8 + $0x2b8] sm:$0xff]
    %v604 = vld [vmem:[#allocation8 + $0x2c0] sm:$0xff]
    %v605 = vld [vmem:[#allocation8 + $0x2c8] sm:$0xff]
    %v606 = vld [vmem:[#allocation8 + $0x2d0] sm:$0xff]
    %v607 = vld [vmem:[#allocation8 + $0x2d8] sm:$0xff]
    %v608 = vld [vmem:[#allocation8 + $0x2e0] sm:$0xff]
    %v609 = vld [vmem:[#allocation8 + $0x2e8] sm:$0xff]
    %v610 = vld [vmem:[#allocation8 + $0x2f0] sm:$0xff]
    %v611 = vld [vmem:[#allocation8 + $0x2f8] sm:$0xff]
    %v612 = vld [vmem:[#allocation8 + $0x300] sm:$0xff]
    %v613 = vld [vmem:[#allocation8 + $0x308] sm:$0xff]
    %v614 = vld [vmem:[#allocation8 + $0x310] sm:$0xff]
    %v615 = vld [vmem:[#allocation8 + $0x318] sm:$0xff]
    %v616 = vld [vmem:[#allocation8 + $0x320] sm:$0xff]
    %v617 = vld [vmem:[#allocation8 + $0x328] sm:$0xff]
    %v618 = vld [vmem:[#allocation8 + $0x330] sm:$0xff]
    %v619 = vld [vmem:[#allocation8 + $0x338] sm:$0xff]
    %v620 = vld [vmem:[#allocation8 + $0x340] sm:$0xff]
    %v621 = vld [vmem:[#allocation8 + $0x348] sm:$0xff]
    %v622 = vld [vmem:[#allocation8 + $0x350] sm:$0xff]
    %v623 = vld [vmem:[#allocation8 + $0x358] sm:$0xff]
    %v624 = vld [vmem:[#allocation8 + $0x360] sm:$0xff]
    %v625 = vld [vmem:[#allocation8 + $0x368] sm:$0xff]
    %v626 = vld [vmem:[#allocation8 + $0x370] sm:$0xff]
    %v627 = vld [vmem:[#allocation8 + $0x378] sm:$0xff]
    %v628 = vld [vmem:[#allocation8 + $0x380] sm:$0xff]
    %v629 = vld [vmem:[#allocation8 + $0x388] sm:$0xff]
    %v630 = vld [vmem:[#allocation8 + $0x390] sm:$0xff]
    %v631 = vld [vmem:[#allocation8 + $0x398] sm:$0xff]
    %v632 = vld [vmem:[#allocation8 + $0x3a0] sm:$0xff]
    %v633 = vld [vmem:[#allocation8 + $0x3a8] sm:$0xff]
    %v634 = vld [vmem:[#allocation8 + $0x3b0] sm:$0xff]
    %v635 = vld [vmem:[#allocation8 + $0x3b8] sm:$0xff]
    %v636 = vld [vmem:[#allocation8 + $0x3c0] sm:$0xff]
    %v637 = vld [vmem:[#allocation8 + $0x3c8] sm:$0xff]
    %v638 = vld [vmem:[#allocation8 + $0x3d0] sm:$0xff]
    %v639 = vld [vmem:[#allocation8 + $0x3d8] sm:$0xff]
    %v640 = vld [vmem:[#allocation8 + $0x3e0] sm:$0xff]
    %v641 = vld [vmem:[#allocation8 + $0x3e8] sm:$0xff]
    %v642 = vld [vmem:[#allocation8 + $0x3f0] sm:$0xff]
    %v643 = vld [vmem:[#allocation8 + $0x3f8] sm:$0xff]
    %v644 = vld [vmem:[#allocation8 + $0x400] sm:$0xff]
    %v645 = vld [vmem:[#allocation8 + $0x408] sm:$0xff]
    %v646 = vld [vmem:[#allocation8 + $0x410] sm:$0xff]
    %v647 = vld [vmem:[#allocation8 + $0x418] sm:$0xff]
    %v648 = vld [vmem:[#allocation8 + $0x420] sm:$0xff]
    %v649 = vld [vmem:[#allocation8 + $0x428] sm:$0xff]
    %v650 = vld [vmem:[#allocation8 + $0x430] sm:$0xff]
    %v651 = vld [vmem:[#allocation8 + $0x438] sm:$0xff]
    %v652 = vld [vmem:[#allocation8 + $0x440] sm:$0xff]
    %v653 = vld [vmem:[#allocation8 + $0x448] sm:$0xff]
    %v654 = vld [vmem:[#allocation8 + $0x450] sm:$0xff]
    %v655 = vld [vmem:[#allocation8 + $0x458] sm:$0xff]
    %v656 = vld [vmem:[#allocation8 + $0x460] sm:$0xff]
    %v657 = vld [vmem:[#allocation8 + $0x468] sm:$0xff]
    %v658 = vld [vmem:[#allocation8 + $0x470] sm:$0xff]
    %v659 = vld [vmem:[#allocation8 + $0x478] sm:$0xff]
    %v660 = vld [vmem:[#allocation8 + $0x480] sm:$0xff]
    %v661 = vld [vmem:[#allocation8 + $0x488] sm:$0xff]
    %v662 = vld [vmem:[#allocation8 + $0x490] sm:$0xff]
    %v663 = vld [vmem:[#allocation8 + $0x498] sm:$0xff]
    %v664 = vld [vmem:[#allocation8 + $0x4a0] sm:$0xff]
    %v665 = vld [vmem:[#allocation8 + $0x4a8] sm:$0xff]
    %v666 = vld [vmem:[#allocation8 + $0x4b0] sm:$0xff]
    %v667 = vld [vmem:[#allocation8 + $0x4b8] sm:$0xff]
    %v668 = vld [vmem:[#allocation8 + $0x4c0] sm:$0xff]
    %v669 = vld [vmem:[#allocation8 + $0x4c8] sm:$0xff]
    %v670 = vld [vmem:[#allocation8 + $0x4d0] sm:$0xff]
    %v671 = vld [vmem:[#allocation8 + $0x4d8] sm:$0xff]
    %v672 = vld [vmem:[#allocation8 + $0x4e0] sm:$0xff]
    %v673 = vld [vmem:[#allocation8 + $0x4e8] sm:$0xff]
    %v674 = vld [vmem:[#allocation8 + $0x4f0] sm:$0xff]
    %v675 = vld [vmem:[#allocation8 + $0x4f8] sm:$0xff]
    %v676 = vld [vmem:[#allocation8 + $0x500] sm:$0xff]
    %v677 = vld [vmem:[#allocation8 + $0x508] sm:$0xff]
    %v678 = vld [vmem:[#allocation8 + $0x510] sm:$0xff]
    %v679 = vld [vmem:[#allocation8 + $0x518] sm:$0xff]
    %v680 = vld [vmem:[#allocation8 + $0x520] sm:$0xff]
    %v681 = vld [vmem:[#allocation8 + $0x528] sm:$0xff]
    %v682 = vld [vmem:[#allocation8 + $0x530] sm:$0xff]
    %v683 = vld [vmem:[#allocation8 + $0x538] sm:$0xff]
    %v684 = vld [vmem:[#allocation8 + $0x540] sm:$0xff]
    %v685 = vld [vmem:[#allocation8 + $0x548] sm:$0xff]
    %v686 = vld [vmem:[#allocation8 + $0x550] sm:$0xff]
    %v687 = vld [vmem:[#allocation8 + $0x558] sm:$0xff]
    %v688 = vld [vmem:[#allocation8 + $0x560] sm:$0xff]
    %v689 = vld [vmem:[#allocation8 + $0x568] sm:$0xff]
    %v690 = vld [vmem:[#allocation8 + $0x570] sm:$0xff]
    %v691 = vld [vmem:[#allocation8 + $0x578] sm:$0xff]
    %v692 = vld [vmem:[#allocation8 + $0x580] sm:$0xff]
    %v693 = vld [vmem:[#allocation8 + $0x588] sm:$0xff]
    %v694 = vld [vmem:[#allocation8 + $0x590] sm:$0xff]
    %v695 = vld [vmem:[#allocation8 + $0x598] sm:$0xff]
    %v696 = vld [vmem:[#allocation8 + $0x5a0] sm:$0xff]
    %v697 = vld [vmem:[#allocation8 + $0x5a8] sm:$0xff]
    %v698 = vld [vmem:[#allocation8 + $0x5b0] sm:$0xff]
    %v699 = vld [vmem:[#allocation8 + $0x5b8] sm:$0xff]
    %v700 = vld [vmem:[#allocation8 + $0x5c0] sm:$0xff]
    %v701 = vld [vmem:[#allocation8 + $0x5c8] sm:$0xff]
    %v702 = vld [vmem:[#allocation8 + $0x5d0] sm:$0xff]
    %v703 = vld [vmem:[#allocation8 + $0x5d8] sm:$0xff]
    %v704 = vld [vmem:[#allocation8 + $0x5e0] sm:$0xff]
    %v705 = vld [vmem:[#allocation8 + $0x5e8] sm:$0xff]
    %v706 = vld [vmem:[#allocation8 + $0x5f0] sm:$0xff]
    %v707 = vld [vmem:[#allocation8 + $0x5f8] sm:$0xff]
    %v708 = vld [vmem:[#allocation8 + $0x600] sm:$0xff]
    %v709 = vld [vmem:[#allocation8 + $0x608] sm:$0xff]
    %v710 = vld [vmem:[#allocation8 + $0x610] sm:$0xff]
    %v711 = vld [vmem:[#allocation8 + $0x618] sm:$0xff]
    %v712 = vld [vmem:[#allocation8 + $0x620] sm:$0xff]
    %v713 = vld [vmem:[#allocation8 + $0x628] sm:$0xff]
    %v714 = vld [vmem:[#allocation8 + $0x630] sm:$0xff]
    %v715 = vld [vmem:[#allocation8 + $0x638] sm:$0xff]
    %v716 = vld [vmem:[#allocation8 + $0x640] sm:$0xff]
    %v717 = vld [vmem:[#allocation8 + $0x648] sm:$0xff]
    %v718 = vld [vmem:[#allocation8 + $0x650] sm:$0xff]
    %v719 = vld [vmem:[#allocation8 + $0x658] sm:$0xff]
    %v720 = vld [vmem:[#allocation8 + $0x660] sm:$0xff]
    %v721 = vld [vmem:[#allocation8 + $0x668] sm:$0xff]
    %v722 = vld [vmem:[#allocation8 + $0x670] sm:$0xff]
    %v723 = vld [vmem:[#allocation8 + $0x678] sm:$0xff]
    %v724 = vld [vmem:[#allocation8 + $0x680] sm:$0xff]
    %v725 = vld [vmem:[#allocation8 + $0x688] sm:$0xff]
    %v726 = vld [vmem:[#allocation8 + $0x690] sm:$0xff]
    %v727 = vld [vmem:[#allocation8 + $0x698] sm:$0xff]
    %v728 = vld [vmem:[#allocation8 + $0x6a0] sm:$0xff]
    %v729 = vld [vmem:[#allocation8 + $0x6a8] sm:$0xff]
    %v730 = vld [vmem:[#allocation8 + $0x6b0] sm:$0xff]
    %v731 = vld [vmem:[#allocation8 + $0x6b8] sm:$0xff]
    %v732 = vld [vmem:[#allocation8 + $0x6c0] sm:$0xff]
    %v733 = vld [vmem:[#allocation8 + $0x6c8] sm:$0xff]
    %v734 = vld [vmem:[#allocation8 + $0x6d0] sm:$0xff]
    %v735 = vld [vmem:[#allocation8 + $0x6d8] sm:$0xff]
    %v736 = vld [vmem:[#allocation8 + $0x6e0] sm:$0xff]
    %v737 = vld [vmem:[#allocation8 + $0x6e8] sm:$0xff]
    %v738 = vld [vmem:[#allocation8 + $0x6f0] sm:$0xff]
    %v739 = vld [vmem:[#allocation8 + $0x6f8] sm:$0xff]
    %v740 = vld [vmem:[#allocation8 + $0x700] sm:$0xff]
    %v741 = vld [vmem:[#allocation8 + $0x708] sm:$0xff]
    %v742 = vld [vmem:[#allocation8 + $0x710] sm:$0xff]
    %v743 = vld [vmem:[#allocation8 + $0x718] sm:$0xff]
    %v744 = vld [vmem:[#allocation8 + $0x720] sm:$0xff]
    %v745 = vld [vmem:[#allocation8 + $0x728] sm:$0xff]
    %v746 = vld [vmem:[#allocation8 + $0x730] sm:$0xff]
    %v747 = vld [vmem:[#allocation8 + $0x738] sm:$0xff]
    %v748 = vld [vmem:[#allocation8 + $0x740] sm:$0xff]
    %v749 = vld [vmem:[#allocation8 + $0x748] sm:$0xff]
    %v750 = vld [vmem:[#allocation8 + $0x750] sm:$0xff]
    %v751 = vld [vmem:[#allocation8 + $0x758] sm:$0xff]
    %v752 = vld [vmem:[#allocation8 + $0x760] sm:$0xff]
    %v753 = vld [vmem:[#allocation8 + $0x768] sm:$0xff]
    %v754 = vld [vmem:[#allocation8 + $0x770] sm:$0xff]
    %v755 = vld [vmem:[#allocation8 + $0x778] sm:$0xff]
    %v756 = vld [vmem:[#allocation8 + $0x780] sm:$0xff]
    %v757 = vld [vmem:[#allocation8 + $0x788] sm:$0xff]
    %v758 = vld [vmem:[#allocation8 + $0x790] sm:$0xff]
    %v759 = vld [vmem:[#allocation8 + $0x798] sm:$0xff]
    %v760 = vld [vmem:[#allocation8 + $0x7a0] sm:$0xff]
    %v761 = vld [vmem:[#allocation8 + $0x7a8] sm:$0xff]
    %v762 = vld [vmem:[#allocation8 + $0x7b0] sm:$0xff]
    %v763 = vld [vmem:[#allocation8 + $0x7b8] sm:$0xff]
    %v764 = vld [vmem:[#allocation8 + $0x7c0] sm:$0xff]
    %v765 = vld [vmem:[#allocation8 + $0x7c8] sm:$0xff]
    %v766 = vld [vmem:[#allocation8 + $0x7d0] sm:$0xff]
    %v767 = vld [vmem:[#allocation8 + $0x7d8] sm:$0xff]
    %v768 = vld [vmem:[#allocation8 + $0x7e0] sm:$0xff]
    %v769 = vld [vmem:[#allocation8 + $0x7e8] sm:$0xff]
    %v770 = vld [vmem:[#allocation8 + $0x7f0] sm:$0xff]
    %v771 = vld [vmem:[#allocation8 + $0x7f8] sm:$0xff]
    %v772 = vld [vmem:[#allocation8 + $0x800] sm:$0xff]
    %v773 = vld [vmem:[#allocation8 + $0x808] sm:$0xff]
    %v774 = vld [vmem:[#allocation8 + $0x810] sm:$0xff]
    %v775 = vld [vmem:[#allocation8 + $0x818] sm:$0xff]
    %v776 = vld [vmem:[#allocation8 + $0x820] sm:$0xff]
    %v777 = vld [vmem:[#allocation8 + $0x828] sm:$0xff]
    %v778 = vld [vmem:[#allocation8 + $0x830] sm:$0xff]
    %v779 = vld [vmem:[#allocation8 + $0x838] sm:$0xff]
    %v780 = vld [vmem:[#allocation8 + $0x840] sm:$0xff]
    %v781 = vld [vmem:[#allocation8 + $0x848] sm:$0xff]
    %v782 = vld [vmem:[#allocation8 + $0x850] sm:$0xff]
    %v783 = vld [vmem:[#allocation8 + $0x858] sm:$0xff]
    %v784 = vld [vmem:[#allocation8 + $0x860] sm:$0xff]
    %v785 = vld [vmem:[#allocation8 + $0x868] sm:$0xff]
    %v786 = vld [vmem:[#allocation8 + $0x870] sm:$0xff]
    %v787 = vld [vmem:[#allocation8 + $0x878] sm:$0xff]
    %v788 = vld [vmem:[#allocation8 + $0x880] sm:$0xff]
    %v789 = vld [vmem:[#allocation8 + $0x888] sm:$0xff]
    %v790 = vld [vmem:[#allocation8 + $0x890] sm:$0xff]
    %v791 = vld [vmem:[#allocation8 + $0x898] sm:$0xff]
    %v792 = vld [vmem:[#allocation8 + $0x8a0] sm:$0xff]
    %v793 = vld [vmem:[#allocation8 + $0x8a8] sm:$0xff]
    %v794 = vld [vmem:[#allocation8 + $0x8b0] sm:$0xff]
    %v795 = vld [vmem:[#allocation8 + $0x8b8] sm:$0xff]
    %v796 = vld [vmem:[#allocation8 + $0x8c0] sm:$0xff]
    %v797 = vld [vmem:[#allocation8 + $0x8c8] sm:$0xff]
    %v798 = vld [vmem:[#allocation8 + $0x8d0] sm:$0xff]
    %v799 = vld [vmem:[#allocation8 + $0x8d8] sm:$0xff]
    %v800 = vld [vmem:[#allocation8 + $0x8e0] sm:$0xff]
    %v801 = vld [vmem:[#allocation8 + $0x8e8] sm:$0xff]
    %v802 = vld [vmem:[#allocation8 + $0x8f0] sm:$0xff]
    %v803 = vld [vmem:[#allocation8 + $0x8f8] sm:$0xff]
    %v1092 = vunpack.c.l.b16 %v516
    %v1093 = vunpack.c.h.b16 %v516
    %v1094 = vunpack.c.l.b16 %v517
    %v1095 = vunpack.c.h.b16 %v517
    %v1096 = vunpack.c.l.b16 %v518
    %v1097 = vunpack.c.h.b16 %v518
    %v1098 = vunpack.c.l.b16 %v519
    %v1099 = vunpack.c.h.b16 %v519
    %v1100 = vunpack.c.l.b16 %v520
    %v1101 = vunpack.c.h.b16 %v520
    %v1102 = vunpack.c.l.b16 %v521
    %v1103 = vunpack.c.h.b16 %v521
    %v1104 = vunpack.c.l.b16 %v522
    %v1105 = vunpack.c.h.b16 %v522
    %v1106 = vunpack.c.l.b16 %v523
    %v1107 = vunpack.c.h.b16 %v523
    %v1108 = vunpack.c.l.b16 %v524
    %v1109 = vunpack.c.h.b16 %v524
    %v1110 = vunpack.c.l.b16 %v525
    %v1111 = vunpack.c.h.b16 %v525
    %v1112 = vunpack.c.l.b16 %v526
    %v1113 = vunpack.c.h.b16 %v526
    %v1114 = vunpack.c.l.b16 %v527
    %v1115 = vunpack.c.h.b16 %v527
    %v1116 = vunpack.c.l.b16 %v528
    %v1117 = vunpack.c.h.b16 %v528
    %v1118 = vunpack.c.l.b16 %v529
    %v1119 = vunpack.c.h.b16 %v529
    %v1120 = vunpack.c.l.b16 %v530
    %v1121 = vunpack.c.h.b16 %v530
    %v1122 = vunpack.c.l.b16 %v531
    %v1123 = vunpack.c.h.b16 %v531
    %v1124 = vunpack.c.l.b16 %v532
    %v1125 = vunpack.c.h.b16 %v532
    %v1126 = vunpack.c.l.b16 %v533
    %v1127 = vunpack.c.h.b16 %v533
    %v1128 = vunpack.c.l.b16 %v534
    %v1129 = vunpack.c.h.b16 %v534
    %v1130 = vunpack.c.l.b16 %v535
    %v1131 = vunpack.c.h.b16 %v535
    %v1132 = vunpack.c.l.b16 %v536
    %v1133 = vunpack.c.h.b16 %v536
    %v1134 = vunpack.c.l.b16 %v537
    %v1135 = vunpack.c.h.b16 %v537
    %v1136 = vunpack.c.l.b16 %v538
    %v1137 = vunpack.c.h.b16 %v538
    %v1138 = vunpack.c.l.b16 %v539
    %v1139 = vunpack.c.h.b16 %v539
    %v1140 = vunpack.c.l.b16 %v540
    %v1141 = vunpack.c.h.b16 %v540
    %v1142 = vunpack.c.l.b16 %v541
    %v1143 = vunpack.c.h.b16 %v541
    %v1144 = vunpack.c.l.b16 %v542
    %v1145 = vunpack.c.h.b16 %v542
    %v1146 = vunpack.c.l.b16 %v543
    %v1147 = vunpack.c.h.b16 %v543
    %v1148 = vunpack.c.l.b16 %v544
    %v1149 = vunpack.c.h.b16 %v544
    %v1150 = vunpack.c.l.b16 %v545
    %v1151 = vunpack.c.h.b16 %v545
    %v1152 = vunpack.c.l.b16 %v546
    %v1153 = vunpack.c.h.b16 %v546
    %v1154 = vunpack.c.l.b16 %v547
    %v1155 = vunpack.c.h.b16 %v547
    %v1156 = vunpack.c.l.b16 %v548
    %v1157 = vunpack.c.h.b16 %v548
    %v1158 = vunpack.c.l.b16 %v549
    %v1159 = vunpack.c.h.b16 %v549
    %v1160 = vunpack.c.l.b16 %v550
    %v1161 = vunpack.c.h.b16 %v550
    %v1162 = vunpack.c.l.b16 %v551
    %v1163 = vunpack.c.h.b16 %v551
    %v1164 = vunpack.c.l.b16 %v552
    %v1165 = vunpack.c.h.b16 %v552
    %v1166 = vunpack.c.l.b16 %v553
    %v1167 = vunpack.c.h.b16 %v553
    %v1168 = vunpack.c.l.b16 %v554
    %v1169 = vunpack.c.h.b16 %v554
    %v1170 = vunpack.c.l.b16 %v555
    %v1171 = vunpack.c.h.b16 %v555
    %v1172 = vunpack.c.l.b16 %v556
    %v1173 = vunpack.c.h.b16 %v556
    %v1174 = vunpack.c.l.b16 %v557
    %v1175 = vunpack.c.h.b16 %v557
    %v1176 = vunpack.c.l.b16 %v558
    %v1177 = vunpack.c.h.b16 %v558
    %v1178 = vunpack.c.l.b16 %v559
    %v1179 = vunpack.c.h.b16 %v559
    %v1180 = vunpack.c.l.b16 %v560
    %v1181 = vunpack.c.h.b16 %v560
    %v1182 = vunpack.c.l.b16 %v561
    %v1183 = vunpack.c.h.b16 %v561
    %v1184 = vunpack.c.l.b16 %v562
    %v1185 = vunpack.c.h.b16 %v562
    %v1186 = vunpack.c.l.b16 %v563
    %v1187 = vunpack.c.h.b16 %v563
    %v1188 = vunpack.c.l.b16 %v564
    %v1189 = vunpack.c.h.b16 %v564
    %v1190 = vunpack.c.l.b16 %v565
    %v1191 = vunpack.c.h.b16 %v565
    %v1192 = vunpack.c.l.b16 %v566
    %v1193 = vunpack.c.h.b16 %v566
    %v1194 = vunpack.c.l.b16 %v567
    %v1195 = vunpack.c.h.b16 %v567
    %v1196 = vunpack.c.l.b16 %v568
    %v1197 = vunpack.c.h.b16 %v568
    %v1198 = vunpack.c.l.b16 %v569
    %v1199 = vunpack.c.h.b16 %v569
    %v1200 = vunpack.c.l.b16 %v570
    %v1201 = vunpack.c.h.b16 %v570
    %v1202 = vunpack.c.l.b16 %v571
    %v1203 = vunpack.c.h.b16 %v571
    %v1204 = vunpack.c.l.b16 %v572
    %v1205 = vunpack.c.h.b16 %v572
    %v1206 = vunpack.c.l.b16 %v573
    %v1207 = vunpack.c.h.b16 %v573
    %v1208 = vunpack.c.l.b16 %v574
    %v1209 = vunpack.c.h.b16 %v574
    %v1210 = vunpack.c.l.b16 %v575
    %v1211 = vunpack.c.h.b16 %v575
    %v1212 = vunpack.c.l.b16 %v576
    %v1213 = vunpack.c.h.b16 %v576
    %v1214 = vunpack.c.l.b16 %v577
    %v1215 = vunpack.c.h.b16 %v577
    %v1216 = vunpack.c.l.b16 %v578
    %v1217 = vunpack.c.h.b16 %v578
    %v1218 = vunpack.c.l.b16 %v579
    %v1219 = vunpack.c.h.b16 %v579
    %v1220 = vunpack.c.l.b16 %v580
    %v1221 = vunpack.c.h.b16 %v580
    %v1222 = vunpack.c.l.b16 %v581
    %v1223 = vunpack.c.h.b16 %v581
    %v1224 = vunpack.c.l.b16 %v582
    %v1225 = vunpack.c.h.b16 %v582
    %v1226 = vunpack.c.l.b16 %v583
    %v1227 = vunpack.c.h.b16 %v583
    %v1228 = vunpack.c.l.b16 %v584
    %v1229 = vunpack.c.h.b16 %v584
    %v1230 = vunpack.c.l.b16 %v585
    %v1231 = vunpack.c.h.b16 %v585
    %v1232 = vunpack.c.l.b16 %v586
    %v1233 = vunpack.c.h.b16 %v586
    %v1234 = vunpack.c.l.b16 %v587
    %v1235 = vunpack.c.h.b16 %v587
    %v1236 = vunpack.c.l.b16 %v588
    %v1237 = vunpack.c.h.b16 %v588
    %v1238 = vunpack.c.l.b16 %v589
    %v1239 = vunpack.c.h.b16 %v589
    %v1240 = vunpack.c.l.b16 %v590
    %v1241 = vunpack.c.h.b16 %v590
    %v1242 = vunpack.c.l.b16 %v591
    %v1243 = vunpack.c.h.b16 %v591
    %v1244 = vunpack.c.l.b16 %v592
    %v1245 = vunpack.c.h.b16 %v592
    %v1246 = vunpack.c.l.b16 %v593
    %v1247 = vunpack.c.h.b16 %v593
    %v1248 = vunpack.c.l.b16 %v594
    %v1249 = vunpack.c.h.b16 %v594
    %v1250 = vunpack.c.l.b16 %v595
    %v1251 = vunpack.c.h.b16 %v595
    %v1252 = vunpack.c.l.b16 %v596
    %v1253 = vunpack.c.h.b16 %v596
    %v1254 = vunpack.c.l.b16 %v597
    %v1255 = vunpack.c.h.b16 %v597
    %v1256 = vunpack.c.l.b16 %v598
    %v1257 = vunpack.c.h.b16 %v598
    %v1258 = vunpack.c.l.b16 %v599
    %v1259 = vunpack.c.h.b16 %v599
    %v1260 = vunpack.c.l.b16 %v600
    %v1261 = vunpack.c.h.b16 %v600
    %v1262 = vunpack.c.l.b16 %v601
    %v1263 = vunpack.c.h.b16 %v601
    %v1264 = vunpack.c.l.b16 %v602
    %v1265 = vunpack.c.h.b16 %v602
    %v1266 = vunpack.c.l.b16 %v603
    %v1267 = vunpack.c.h.b16 %v603
    %v1268 = vunpack.c.l.b16 %v604
    %v1269 = vunpack.c.h.b16 %v604
    %v1270 = vunpack.c.l.b16 %v605
    %v1271 = vunpack.c.h.b16 %v605
    %v1272 = vunpack.c.l.b16 %v606
    %v1273 = vunpack.c.h.b16 %v606
    %v1274 = vunpack.c.l.b16 %v607
    %v1275 = vunpack.c.h.b16 %v607
    %v1276 = vunpack.c.l.b16 %v608
    %v1277 = vunpack.c.h.b16 %v608
    %v1278 = vunpack.c.l.b16 %v609
    %v1279 = vunpack.c.h.b16 %v609
    %v1280 = vunpack.c.l.b16 %v610
    %v1281 = vunpack.c.h.b16 %v610
    %v1282 = vunpack.c.l.b16 %v611
    %v1283 = vunpack.c.h.b16 %v611
    %v1284 = vunpack.c.l.b16 %v612
    %v1285 = vunpack.c.h.b16 %v612
    %v1286 = vunpack.c.l.b16 %v613
    %v1287 = vunpack.c.h.b16 %v613
    %v1288 = vunpack.c.l.b16 %v614
    %v1289 = vunpack.c.h.b16 %v614
    %v1290 = vunpack.c.l.b16 %v615
    %v1291 = vunpack.c.h.b16 %v615
    %v1292 = vunpack.c.l.b16 %v616
    %v1293 = vunpack.c.h.b16 %v616
    %v1294 = vunpack.c.l.b16 %v617
    %v1295 = vunpack.c.h.b16 %v617
    %v1296 = vunpack.c.l.b16 %v618
    %v1297 = vunpack.c.h.b16 %v618
    %v1298 = vunpack.c.l.b16 %v619
    %v1299 = vunpack.c.h.b16 %v619
    %v1300 = vunpack.c.l.b16 %v620
    %v1301 = vunpack.c.h.b16 %v620
    %v1302 = vunpack.c.l.b16 %v621
    %v1303 = vunpack.c.h.b16 %v621
    %v1304 = vunpack.c.l.b16 %v622
    %v1305 = vunpack.c.h.b16 %v622
    %v1306 = vunpack.c.l.b16 %v623
    %v1307 = vunpack.c.h.b16 %v623
    %v1308 = vunpack.c.l.b16 %v624
    %v1309 = vunpack.c.h.b16 %v624
    %v1310 = vunpack.c.l.b16 %v625
    %v1311 = vunpack.c.h.b16 %v625
    %v1312 = vunpack.c.l.b16 %v626
    %v1313 = vunpack.c.h.b16 %v626
    %v1314 = vunpack.c.l.b16 %v627
    %v1315 = vunpack.c.h.b16 %v627
    %v1316 = vunpack.c.l.b16 %v628
    %v1317 = vunpack.c.h.b16 %v628
    %v1318 = vunpack.c.l.b16 %v629
    %v1319 = vunpack.c.h.b16 %v629
    %v1320 = vunpack.c.l.b16 %v630
    %v1321 = vunpack.c.h.b16 %v630
    %v1322 = vunpack.c.l.b16 %v631
    %v1323 = vunpack.c.h.b16 %v631
    %v1324 = vunpack.c.l.b16 %v632
    %v1325 = vunpack.c.h.b16 %v632
    %v1326 = vunpack.c.l.b16 %v633
    %v1327 = vunpack.c.h.b16 %v633
    %v1328 = vunpack.c.l.b16 %v634
    %v1329 = vunpack.c.h.b16 %v634
    %v1330 = vunpack.c.l.b16 %v635
    %v1331 = vunpack.c.h.b16 %v635
    %v1332 = vunpack.c.l.b16 %v636
    %v1333 = vunpack.c.h.b16 %v636
    %v1334 = vunpack.c.l.b16 %v637
    %v1335 = vunpack.c.h.b16 %v637
    %v1336 = vunpack.c.l.b16 %v638
    %v1337 = vunpack.c.h.b16 %v638
    %v1338 = vunpack.c.l.b16 %v639
    %v1339 = vunpack.c.h.b16 %v639
    %v1340 = vunpack.c.l.b16 %v640
    %v1341 = vunpack.c.h.b16 %v640
    %v1342 = vunpack.c.l.b16 %v641
    %v1343 = vunpack.c.h.b16 %v641
    %v1344 = vunpack.c.l.b16 %v642
    %v1345 = vunpack.c.h.b16 %v642
    %v1346 = vunpack.c.l.b16 %v643
    %v1347 = vunpack.c.h.b16 %v643
    %v1348 = vunpack.c.l.b16 %v644
    %v1349 = vunpack.c.h.b16 %v644
    %v1350 = vunpack.c.l.b16 %v645
    %v1351 = vunpack.c.h.b16 %v645
    %v1352 = vunpack.c.l.b16 %v646
    %v1353 = vunpack.c.h.b16 %v646
    %v1354 = vunpack.c.l.b16 %v647
    %v1355 = vunpack.c.h.b16 %v647
    %v1356 = vunpack.c.l.b16 %v648
    %v1357 = vunpack.c.h.b16 %v648
    %v1358 = vunpack.c.l.b16 %v649
    %v1359 = vunpack.c.h.b16 %v649
    %v1360 = vunpack.c.l.b16 %v650
    %v1361 = vunpack.c.h.b16 %v650
    %v1362 = vunpack.c.l.b16 %v651
    %v1363 = vunpack.c.h.b16 %v651
    %v1364 = vunpack.c.l.b16 %v652
    %v1365 = vunpack.c.h.b16 %v652
    %v1366 = vunpack.c.l.b16 %v653
    %v1367 = vunpack.c.h.b16 %v653
    %v1368 = vunpack.c.l.b16 %v654
    %v1369 = vunpack.c.h.b16 %v654
    %v1370 = vunpack.c.l.b16 %v655
    %v1371 = vunpack.c.h.b16 %v655
    %v1372 = vunpack.c.l.b16 %v656
    %v1373 = vunpack.c.h.b16 %v656
    %v1374 = vunpack.c.l.b16 %v657
    %v1375 = vunpack.c.h.b16 %v657
    %v1376 = vunpack.c.l.b16 %v658
    %v1377 = vunpack.c.h.b16 %v658
    %v1378 = vunpack.c.l.b16 %v659
    %v1379 = vunpack.c.h.b16 %v659
    %v1380 = vunpack.c.l.b16 %v660
    %v1381 = vunpack.c.h.b16 %v660
    %v1382 = vunpack.c.l.b16 %v661
    %v1383 = vunpack.c.h.b16 %v661
    %v1384 = vunpack.c.l.b16 %v662
    %v1385 = vunpack.c.h.b16 %v662
    %v1386 = vunpack.c.l.b16 %v663
    %v1387 = vunpack.c.h.b16 %v663
    %v1388 = vunpack.c.l.b16 %v664
    %v1389 = vunpack.c.h.b16 %v664
    %v1390 = vunpack.c.l.b16 %v665
    %v1391 = vunpack.c.h.b16 %v665
    %v1392 = vunpack.c.l.b16 %v666
    %v1393 = vunpack.c.h.b16 %v666
    %v1394 = vunpack.c.l.b16 %v667
    %v1395 = vunpack.c.h.b16 %v667
    %v1396 = vunpack.c.l.b16 %v668
    %v1397 = vunpack.c.h.b16 %v668
    %v1398 = vunpack.c.l.b16 %v669
    %v1399 = vunpack.c.h.b16 %v669
    %v1400 = vunpack.c.l.b16 %v670
    %v1401 = vunpack.c.h.b16 %v670
    %v1402 = vunpack.c.l.b16 %v671
    %v1403 = vunpack.c.h.b16 %v671
    %v1404 = vunpack.c.l.b16 %v672
    %v1405 = vunpack.c.h.b16 %v672
    %v1406 = vunpack.c.l.b16 %v673
    %v1407 = vunpack.c.h.b16 %v673
    %v1408 = vunpack.c.l.b16 %v674
    %v1409 = vunpack.c.h.b16 %v674
    %v1410 = vunpack.c.l.b16 %v675
    %v1411 = vunpack.c.h.b16 %v675
    %v1412 = vunpack.c.l.b16 %v676
    %v1413 = vunpack.c.h.b16 %v676
    %v1414 = vunpack.c.l.b16 %v677
    %v1415 = vunpack.c.h.b16 %v677
    %v1416 = vunpack.c.l.b16 %v678
    %v1417 = vunpack.c.h.b16 %v678
    %v1418 = vunpack.c.l.b16 %v679
    %v1419 = vunpack.c.h.b16 %v679
    %v1420 = vunpack.c.l.b16 %v680
    %v1421 = vunpack.c.h.b16 %v680
    %v1422 = vunpack.c.l.b16 %v681
    %v1423 = vunpack.c.h.b16 %v681
    %v1424 = vunpack.c.l.b16 %v682
    %v1425 = vunpack.c.h.b16 %v682
    %v1426 = vunpack.c.l.b16 %v683
    %v1427 = vunpack.c.h.b16 %v683
    %v1428 = vunpack.c.l.b16 %v684
    %v1429 = vunpack.c.h.b16 %v684
    %v1430 = vunpack.c.l.b16 %v685
    %v1431 = vunpack.c.h.b16 %v685
    %v1432 = vunpack.c.l.b16 %v686
    %v1433 = vunpack.c.h.b16 %v686
    %v1434 = vunpack.c.l.b16 %v687
    %v1435 = vunpack.c.h.b16 %v687
    %v1436 = vunpack.c.l.b16 %v688
    %v1437 = vunpack.c.h.b16 %v688
    %v1438 = vunpack.c.l.b16 %v689
    %v1439 = vunpack.c.h.b16 %v689
    %v1440 = vunpack.c.l.b16 %v690
    %v1441 = vunpack.c.h.b16 %v690
    %v1442 = vunpack.c.l.b16 %v691
    %v1443 = vunpack.c.h.b16 %v691
    %v1444 = vunpack.c.l.b16 %v692
    %v1445 = vunpack.c.h.b16 %v692
    %v1446 = vunpack.c.l.b16 %v693
    %v1447 = vunpack.c.h.b16 %v693
    %v1448 = vunpack.c.l.b16 %v694
    %v1449 = vunpack.c.h.b16 %v694
    %v1450 = vunpack.c.l.b16 %v695
    %v1451 = vunpack.c.h.b16 %v695
    %v1452 = vunpack.c.l.b16 %v696
    %v1453 = vunpack.c.h.b16 %v696
    %v1454 = vunpack.c.l.b16 %v697
    %v1455 = vunpack.c.h.b16 %v697
    %v1456 = vunpack.c.l.b16 %v698
    %v1457 = vunpack.c.h.b16 %v698
    %v1458 = vunpack.c.l.b16 %v699
    %v1459 = vunpack.c.h.b16 %v699
    %v1460 = vunpack.c.l.b16 %v700
    %v1461 = vunpack.c.h.b16 %v700
    %v1462 = vunpack.c.l.b16 %v701
    %v1463 = vunpack.c.h.b16 %v701
    %v1464 = vunpack.c.l.b16 %v702
    %v1465 = vunpack.c.h.b16 %v702
    %v1466 = vunpack.c.l.b16 %v703
    %v1467 = vunpack.c.h.b16 %v703
    %v1468 = vunpack.c.l.b16 %v704
    %v1469 = vunpack.c.h.b16 %v704
    %v1470 = vunpack.c.l.b16 %v705
    %v1471 = vunpack.c.h.b16 %v705
    %v1472 = vunpack.c.l.b16 %v706
    %v1473 = vunpack.c.h.b16 %v706
    %v1474 = vunpack.c.l.b16 %v707
    %v1475 = vunpack.c.h.b16 %v707
    %v1476 = vunpack.c.l.b16 %v708
    %v1477 = vunpack.c.h.b16 %v708
    %v1478 = vunpack.c.l.b16 %v709
    %v1479 = vunpack.c.h.b16 %v709
    %v1480 = vunpack.c.l.b16 %v710
    %v1481 = vunpack.c.h.b16 %v710
    %v1482 = vunpack.c.l.b16 %v711
    %v1483 = vunpack.c.h.b16 %v711
    %v1484 = vunpack.c.l.b16 %v712
    %v1485 = vunpack.c.h.b16 %v712
    %v1486 = vunpack.c.l.b16 %v713
    %v1487 = vunpack.c.h.b16 %v713
    %v1488 = vunpack.c.l.b16 %v714
    %v1489 = vunpack.c.h.b16 %v714
    %v1490 = vunpack.c.l.b16 %v715
    %v1491 = vunpack.c.h.b16 %v715
    %v1492 = vunpack.c.l.b16 %v716
    %v1493 = vunpack.c.h.b16 %v716
    %v1494 = vunpack.c.l.b16 %v717
    %v1495 = vunpack.c.h.b16 %v717
    %v1496 = vunpack.c.l.b16 %v718
    %v1497 = vunpack.c.h.b16 %v718
    %v1498 = vunpack.c.l.b16 %v719
    %v1499 = vunpack.c.h.b16 %v719
    %v1500 = vunpack.c.l.b16 %v720
    %v1501 = vunpack.c.h.b16 %v720
    %v1502 = vunpack.c.l.b16 %v721
    %v1503 = vunpack.c.h.b16 %v721
    %v1504 = vunpack.c.l.b16 %v722
    %v1505 = vunpack.c.h.b16 %v722
    %v1506 = vunpack.c.l.b16 %v723
    %v1507 = vunpack.c.h.b16 %v723
    %v1508 = vunpack.c.l.b16 %v724
    %v1509 = vunpack.c.h.b16 %v724
    %v1510 = vunpack.c.l.b16 %v725
    %v1511 = vunpack.c.h.b16 %v725
    %v1512 = vunpack.c.l.b16 %v726
    %v1513 = vunpack.c.h.b16 %v726
    %v1514 = vunpack.c.l.b16 %v727
    %v1515 = vunpack.c.h.b16 %v727
    %v1516 = vunpack.c.l.b16 %v728
    %v1517 = vunpack.c.h.b16 %v728
    %v1518 = vunpack.c.l.b16 %v729
    %v1519 = vunpack.c.h.b16 %v729
    %v1520 = vunpack.c.l.b16 %v730
    %v1521 = vunpack.c.h.b16 %v730
    %v1522 = vunpack.c.l.b16 %v731
    %v1523 = vunpack.c.h.b16 %v731
    %v1524 = vunpack.c.l.b16 %v732
    %v1525 = vunpack.c.h.b16 %v732
    %v1526 = vunpack.c.l.b16 %v733
    %v1527 = vunpack.c.h.b16 %v733
    %v1528 = vunpack.c.l.b16 %v734
    %v1529 = vunpack.c.h.b16 %v734
    %v1530 = vunpack.c.l.b16 %v735
    %v1531 = vunpack.c.h.b16 %v735
    %v1532 = vunpack.c.l.b16 %v736
    %v1533 = vunpack.c.h.b16 %v736
    %v1534 = vunpack.c.l.b16 %v737
    %v1535 = vunpack.c.h.b16 %v737
    %v1536 = vunpack.c.l.b16 %v738
    %v1537 = vunpack.c.h.b16 %v738
    %v1538 = vunpack.c.l.b16 %v739
    %v1539 = vunpack.c.h.b16 %v739
    %v1540 = vunpack.c.l.b16 %v740
    %v1541 = vunpack.c.h.b16 %v740
    %v1542 = vunpack.c.l.b16 %v741
    %v1543 = vunpack.c.h.b16 %v741
    %v1544 = vunpack.c.l.b16 %v742
    %v1545 = vunpack.c.h.b16 %v742
    %v1546 = vunpack.c.l.b16 %v743
    %v1547 = vunpack.c.h.b16 %v743
    %v1548 = vunpack.c.l.b16 %v744
    %v1549 = vunpack.c.h.b16 %v744
    %v1550 = vunpack.c.l.b16 %v745
    %v1551 = vunpack.c.h.b16 %v745
    %v1552 = vunpack.c.l.b16 %v746
    %v1553 = vunpack.c.h.b16 %v746
    %v1554 = vunpack.c.l.b16 %v747
    %v1555 = vunpack.c.h.b16 %v747
    %v1556 = vunpack.c.l.b16 %v748
    %v1557 = vunpack.c.h.b16 %v748
    %v1558 = vunpack.c.l.b16 %v749
    %v1559 = vunpack.c.h.b16 %v749
    %v1560 = vunpack.c.l.b16 %v750
    %v1561 = vunpack.c.h.b16 %v750
    %v1562 = vunpack.c.l.b16 %v751
    %v1563 = vunpack.c.h.b16 %v751
    %v1564 = vunpack.c.l.b16 %v752
    %v1565 = vunpack.c.h.b16 %v752
    %v1566 = vunpack.c.l.b16 %v753
    %v1567 = vunpack.c.h.b16 %v753
    %v1568 = vunpack.c.l.b16 %v754
    %v1569 = vunpack.c.h.b16 %v754
    %v1570 = vunpack.c.l.b16 %v755
    %v1571 = vunpack.c.h.b16 %v755
    %v1572 = vunpack.c.l.b16 %v756
    %v1573 = vunpack.c.h.b16 %v756
    %v1574 = vunpack.c.l.b16 %v757
    %v1575 = vunpack.c.h.b16 %v757
    %v1576 = vunpack.c.l.b16 %v758
    %v1577 = vunpack.c.h.b16 %v758
    %v1578 = vunpack.c.l.b16 %v759
    %v1579 = vunpack.c.h.b16 %v759
    %v1580 = vunpack.c.l.b16 %v760
    %v1581 = vunpack.c.h.b16 %v760
    %v1582 = vunpack.c.l.b16 %v761
    %v1583 = vunpack.c.h.b16 %v761
    %v1584 = vunpack.c.l.b16 %v762
    %v1585 = vunpack.c.h.b16 %v762
    %v1586 = vunpack.c.l.b16 %v763
    %v1587 = vunpack.c.h.b16 %v763
    %v1588 = vunpack.c.l.b16 %v764
    %v1589 = vunpack.c.h.b16 %v764
    %v1590 = vunpack.c.l.b16 %v765
    %v1591 = vunpack.c.h.b16 %v765
    %v1592 = vunpack.c.l.b16 %v766
    %v1593 = vunpack.c.h.b16 %v766
    %v1594 = vunpack.c.l.b16 %v767
    %v1595 = vunpack.c.h.b16 %v767
    %v1596 = vunpack.c.l.b16 %v768
    %v1597 = vunpack.c.h.b16 %v768
    %v1598 = vunpack.c.l.b16 %v769
    %v1599 = vunpack.c.h.b16 %v769
    %v1600 = vunpack.c.l.b16 %v770
    %v1601 = vunpack.c.h.b16 %v770
    %v1602 = vunpack.c.l.b16 %v771
    %v1603 = vunpack.c.h.b16 %v771
    %v1604 = vunpack.c.l.b16 %v772
    %v1605 = vunpack.c.h.b16 %v772
    %v1606 = vunpack.c.l.b16 %v773
    %v1607 = vunpack.c.h.b16 %v773
    %v1608 = vunpack.c.l.b16 %v774
    %v1609 = vunpack.c.h.b16 %v774
    %v1610 = vunpack.c.l.b16 %v775
    %v1611 = vunpack.c.h.b16 %v775
    %v1612 = vunpack.c.l.b16 %v776
    %v1613 = vunpack.c.h.b16 %v776
    %v1614 = vunpack.c.l.b16 %v777
    %v1615 = vunpack.c.h.b16 %v777
    %v1616 = vunpack.c.l.b16 %v778
    %v1617 = vunpack.c.h.b16 %v778
    %v1618 = vunpack.c.l.b16 %v779
    %v1619 = vunpack.c.h.b16 %v779
    %v1620 = vunpack.c.l.b16 %v780
    %v1621 = vunpack.c.h.b16 %v780
    %v1622 = vunpack.c.l.b16 %v781
    %v1623 = vunpack.c.h.b16 %v781
    %v1624 = vunpack.c.l.b16 %v782
    %v1625 = vunpack.c.h.b16 %v782
    %v1626 = vunpack.c.l.b16 %v783
    %v1627 = vunpack.c.h.b16 %v783
    %v1628 = vunpack.c.l.b16 %v784
    %v1629 = vunpack.c.h.b16 %v784
    %v1630 = vunpack.c.l.b16 %v785
    %v1631 = vunpack.c.h.b16 %v785
    %v1632 = vunpack.c.l.b16 %v786
    %v1633 = vunpack.c.h.b16 %v786
    %v1634 = vunpack.c.l.b16 %v787
    %v1635 = vunpack.c.h.b16 %v787
    %v1636 = vunpack.c.l.b16 %v788
    %v1637 = vunpack.c.h.b16 %v788
    %v1638 = vunpack.c.l.b16 %v789
    %v1639 = vunpack.c.h.b16 %v789
    %v1640 = vunpack.c.l.b16 %v790
    %v1641 = vunpack.c.h.b16 %v790
    %v1642 = vunpack.c.l.b16 %v791
    %v1643 = vunpack.c.h.b16 %v791
    %v1644 = vunpack.c.l.b16 %v792
    %v1645 = vunpack.c.h.b16 %v792
    %v1646 = vunpack.c.l.b16 %v793
    %v1647 = vunpack.c.h.b16 %v793
    %v1648 = vunpack.c.l.b16 %v794
    %v1649 = vunpack.c.h.b16 %v794
    %v1650 = vunpack.c.l.b16 %v795
    %v1651 = vunpack.c.h.b16 %v795
    %v1652 = vunpack.c.l.b16 %v796
    %v1653 = vunpack.c.h.b16 %v796
    %v1654 = vunpack.c.l.b16 %v797
    %v1655 = vunpack.c.h.b16 %v797
    %v1656 = vunpack.c.l.b16 %v798
    %v1657 = vunpack.c.h.b16 %v798
    %v1658 = vunpack.c.l.b16 %v799
    %v1659 = vunpack.c.h.b16 %v799
    %v1660 = vunpack.c.l.b16 %v800
    %v1661 = vunpack.c.h.b16 %v800
    %v1662 = vunpack.c.l.b16 %v801
    %v1663 = vunpack.c.h.b16 %v801
    %v1664 = vunpack.c.l.b16 %v802
    %v1665 = vunpack.c.h.b16 %v802
    %v1666 = vunpack.c.l.b16 %v803
    %v1667 = vunpack.c.h.b16 %v803
    %v1668 = vpack.c.b16 %v1098, %v1092
    %v1669 = vpack.c.b16 %v1099, %v1093
    %v1670 = vpack.c.b16 %v1100, %v1094
    %v1671 = vpack.c.b16 %v1101, %v1095
    %v1672 = vpack.c.b16 %v1102, %v1096
    %v1673 = vpack.c.b16 %v1103, %v1097
    %v1674 = vpack.c.b16 %v1110, %v1104
    %v1675 = vpack.c.b16 %v1111, %v1105
    %v1676 = vpack.c.b16 %v1112, %v1106
    %v1677 = vpack.c.b16 %v1113, %v1107
    %v1678 = vpack.c.b16 %v1114, %v1108
    %v1679 = vpack.c.b16 %v1115, %v1109
    %v1680 = vpack.c.b16 %v1122, %v1116
    %v1681 = vpack.c.b16 %v1123, %v1117
    %v1682 = vpack.c.b16 %v1124, %v1118
    %v1683 = vpack.c.b16 %v1125, %v1119
    %v1684 = vpack.c.b16 %v1126, %v1120
    %v1685 = vpack.c.b16 %v1127, %v1121
    %v1686 = vpack.c.b16 %v1134, %v1128
    %v1687 = vpack.c.b16 %v1135, %v1129
    %v1688 = vpack.c.b16 %v1136, %v1130
    %v1689 = vpack.c.b16 %v1137, %v1131
    %v1690 = vpack.c.b16 %v1138, %v1132
    %v1691 = vpack.c.b16 %v1139, %v1133
    %v1692 = vpack.c.b16 %v1146, %v1140
    %v1693 = vpack.c.b16 %v1147, %v1141
    %v1694 = vpack.c.b16 %v1148, %v1142
    %v1695 = vpack.c.b16 %v1149, %v1143
    %v1696 = vpack.c.b16 %v1150, %v1144
    %v1697 = vpack.c.b16 %v1151, %v1145
    %v1698 = vpack.c.b16 %v1158, %v1152
    %v1699 = vpack.c.b16 %v1159, %v1153
    %v1700 = vpack.c.b16 %v1160, %v1154
    %v1701 = vpack.c.b16 %v1161, %v1155
    %v1702 = vpack.c.b16 %v1162, %v1156
    %v1703 = vpack.c.b16 %v1163, %v1157
    %v1704 = vpack.c.b16 %v1170, %v1164
    %v1705 = vpack.c.b16 %v1171, %v1165
    %v1706 = vpack.c.b16 %v1172, %v1166
    %v1707 = vpack.c.b16 %v1173, %v1167
    %v1708 = vpack.c.b16 %v1174, %v1168
    %v1709 = vpack.c.b16 %v1175, %v1169
    %v1710 = vpack.c.b16 %v1182, %v1176
    %v1711 = vpack.c.b16 %v1183, %v1177
    %v1712 = vpack.c.b16 %v1184, %v1178
    %v1713 = vpack.c.b16 %v1185, %v1179
    %v1714 = vpack.c.b16 %v1186, %v1180
    %v1715 = vpack.c.b16 %v1187, %v1181
    %v1716 = vpack.c.b16 %v1194, %v1188
    %v1717 = vpack.c.b16 %v1195, %v1189
    %v1718 = vpack.c.b16 %v1196, %v1190
    %v1719 = vpack.c.b16 %v1197, %v1191
    %v1720 = vpack.c.b16 %v1198, %v1192
    %v1721 = vpack.c.b16 %v1199, %v1193
    %v1722 = vpack.c.b16 %v1206, %v1200
    %v1723 = vpack.c.b16 %v1207, %v1201
    %v1724 = vpack.c.b16 %v1208, %v1202
    %v1725 = vpack.c.b16 %v1209, %v1203
    %v1726 = vpack.c.b16 %v1210, %v1204
    %v1727 = vpack.c.b16 %v1211, %v1205
    %v1728 = vpack.c.b16 %v1218, %v1212
    %v1729 = vpack.c.b16 %v1219, %v1213
    %v1730 = vpack.c.b16 %v1220, %v1214
    %v1731 = vpack.c.b16 %v1221, %v1215
    %v1732 = vpack.c.b16 %v1222, %v1216
    %v1733 = vpack.c.b16 %v1223, %v1217
    %v1734 = vpack.c.b16 %v1230, %v1224
    %v1735 = vpack.c.b16 %v1231, %v1225
    %v1736 = vpack.c.b16 %v1232, %v1226
    %v1737 = vpack.c.b16 %v1233, %v1227
    %v1738 = vpack.c.b16 %v1234, %v1228
    %v1739 = vpack.c.b16 %v1235, %v1229
    %v1740 = vpack.c.b16 %v1242, %v1236
    %v1741 = vpack.c.b16 %v1243, %v1237
    %v1742 = vpack.c.b16 %v1244, %v1238
    %v1743 = vpack.c.b16 %v1245, %v1239
    %v1744 = vpack.c.b16 %v1246, %v1240
    %v1745 = vpack.c.b16 %v1247, %v1241
    %v1746 = vpack.c.b16 %v1254, %v1248
    %v1747 = vpack.c.b16 %v1255, %v1249
    %v1748 = vpack.c.b16 %v1256, %v1250
    %v1749 = vpack.c.b16 %v1257, %v1251
    %v1750 = vpack.c.b16 %v1258, %v1252
    %v1751 = vpack.c.b16 %v1259, %v1253
    %v1752 = vpack.c.b16 %v1266, %v1260
    %v1753 = vpack.c.b16 %v1267, %v1261
    %v1754 = vpack.c.b16 %v1268, %v1262
    %v1755 = vpack.c.b16 %v1269, %v1263
    %v1756 = vpack.c.b16 %v1270, %v1264
    %v1757 = vpack.c.b16 %v1271, %v1265
    %v1758 = vpack.c.b16 %v1278, %v1272
    %v1759 = vpack.c.b16 %v1279, %v1273
    %v1760 = vpack.c.b16 %v1280, %v1274
    %v1761 = vpack.c.b16 %v1281, %v1275
    %v1762 = vpack.c.b16 %v1282, %v1276
    %v1763 = vpack.c.b16 %v1283, %v1277
    %v1764 = vpack.c.b16 %v1290, %v1284
    %v1765 = vpack.c.b16 %v1291, %v1285
    %v1766 = vpack.c.b16 %v1292, %v1286
    %v1767 = vpack.c.b16 %v1293, %v1287
    %v1768 = vpack.c.b16 %v1294, %v1288
    %v1769 = vpack.c.b16 %v1295, %v1289
    %v1770 = vpack.c.b16 %v1302, %v1296
    %v1771 = vpack.c.b16 %v1303, %v1297
    %v1772 = vpack.c.b16 %v1304, %v1298
    %v1773 = vpack.c.b16 %v1305, %v1299
    %v1774 = vpack.c.b16 %v1306, %v1300
    %v1775 = vpack.c.b16 %v1307, %v1301
    %v1776 = vpack.c.b16 %v1314, %v1308
    %v1777 = vpack.c.b16 %v1315, %v1309
    %v1778 = vpack.c.b16 %v1316, %v1310
    %v1779 = vpack.c.b16 %v1317, %v1311
    %v1780 = vpack.c.b16 %v1318, %v1312
    %v1781 = vpack.c.b16 %v1319, %v1313
    %v1782 = vpack.c.b16 %v1326, %v1320
    %v1783 = vpack.c.b16 %v1327, %v1321
    %v1784 = vpack.c.b16 %v1328, %v1322
    %v1785 = vpack.c.b16 %v1329, %v1323
    %v1786 = vpack.c.b16 %v1330, %v1324
    %v1787 = vpack.c.b16 %v1331, %v1325
    %v1788 = vpack.c.b16 %v1338, %v1332
    %v1789 = vpack.c.b16 %v1339, %v1333
    %v1790 = vpack.c.b16 %v1340, %v1334
    %v1791 = vpack.c.b16 %v1341, %v1335
    %v1792 = vpack.c.b16 %v1342, %v1336
    %v1793 = vpack.c.b16 %v1343, %v1337
    %v1794 = vpack.c.b16 %v1350, %v1344
    %v1795 = vpack.c.b16 %v1351, %v1345
    %v1796 = vpack.c.b16 %v1352, %v1346
    %v1797 = vpack.c.b16 %v1353, %v1347
    %v1798 = vpack.c.b16 %v1354, %v1348
    %v1799 = vpack.c.b16 %v1355, %v1349
    %v1800 = vpack.c.b16 %v1362, %v1356
    %v1801 = vpack.c.b16 %v1363, %v1357
    %v1802 = vpack.c.b16 %v1364, %v1358
    %v1803 = vpack.c.b16 %v1365, %v1359
    %v1804 = vpack.c.b16 %v1366, %v1360
    %v1805 = vpack.c.b16 %v1367, %v1361
    %v1806 = vpack.c.b16 %v1374, %v1368
    %v1807 = vpack.c.b16 %v1375, %v1369
    %v1808 = vpack.c.b16 %v1376, %v1370
    %v1809 = vpack.c.b16 %v1377, %v1371
    %v1810 = vpack.c.b16 %v1378, %v1372
    %v1811 = vpack.c.b16 %v1379, %v1373
    %v1812 = vpack.c.b16 %v1386, %v1380
    %v1813 = vpack.c.b16 %v1387, %v1381
    %v1814 = vpack.c.b16 %v1388, %v1382
    %v1815 = vpack.c.b16 %v1389, %v1383
    %v1816 = vpack.c.b16 %v1390, %v1384
    %v1817 = vpack.c.b16 %v1391, %v1385
    %v1818 = vpack.c.b16 %v1398, %v1392
    %v1819 = vpack.c.b16 %v1399, %v1393
    %v1820 = vpack.c.b16 %v1400, %v1394
    %v1821 = vpack.c.b16 %v1401, %v1395
    %v1822 = vpack.c.b16 %v1402, %v1396
    %v1823 = vpack.c.b16 %v1403, %v1397
    %v1824 = vpack.c.b16 %v1410, %v1404
    %v1825 = vpack.c.b16 %v1411, %v1405
    %v1826 = vpack.c.b16 %v1412, %v1406
    %v1827 = vpack.c.b16 %v1413, %v1407
    %v1828 = vpack.c.b16 %v1414, %v1408
    %v1829 = vpack.c.b16 %v1415, %v1409
    %v1830 = vpack.c.b16 %v1422, %v1416
    %v1831 = vpack.c.b16 %v1423, %v1417
    %v1832 = vpack.c.b16 %v1424, %v1418
    %v1833 = vpack.c.b16 %v1425, %v1419
    %v1834 = vpack.c.b16 %v1426, %v1420
    %v1835 = vpack.c.b16 %v1427, %v1421
    %v1836 = vpack.c.b16 %v1434, %v1428
    %v1837 = vpack.c.b16 %v1435, %v1429
    %v1838 = vpack.c.b16 %v1436, %v1430
    %v1839 = vpack.c.b16 %v1437, %v1431
    %v1840 = vpack.c.b16 %v1438, %v1432
    %v1841 = vpack.c.b16 %v1439, %v1433
    %v1842 = vpack.c.b16 %v1446, %v1440
    %v1843 = vpack.c.b16 %v1447, %v1441
    %v1844 = vpack.c.b16 %v1448, %v1442
    %v1845 = vpack.c.b16 %v1449, %v1443
    %v1846 = vpack.c.b16 %v1450, %v1444
    %v1847 = vpack.c.b16 %v1451, %v1445
    %v1848 = vpack.c.b16 %v1458, %v1452
    %v1849 = vpack.c.b16 %v1459, %v1453
    %v1850 = vpack.c.b16 %v1460, %v1454
    %v1851 = vpack.c.b16 %v1461, %v1455
    %v1852 = vpack.c.b16 %v1462, %v1456
    %v1853 = vpack.c.b16 %v1463, %v1457
    %v1854 = vpack.c.b16 %v1470, %v1464
    %v1855 = vpack.c.b16 %v1471, %v1465
    %v1856 = vpack.c.b16 %v1472, %v1466
    %v1857 = vpack.c.b16 %v1473, %v1467
    %v1858 = vpack.c.b16 %v1474, %v1468
    %v1859 = vpack.c.b16 %v1475, %v1469
    %v1860 = vpack.c.b16 %v1482, %v1476
    %v1861 = vpack.c.b16 %v1483, %v1477
    %v1862 = vpack.c.b16 %v1484, %v1478
    %v1863 = vpack.c.b16 %v1485, %v1479
    %v1864 = vpack.c.b16 %v1486, %v1480
    %v1865 = vpack.c.b16 %v1487, %v1481
    %v1866 = vpack.c.b16 %v1494, %v1488
    %v1867 = vpack.c.b16 %v1495, %v1489
    %v1868 = vpack.c.b16 %v1496, %v1490
    %v1869 = vpack.c.b16 %v1497, %v1491
    %v1870 = vpack.c.b16 %v1498, %v1492
    %v1871 = vpack.c.b16 %v1499, %v1493
    %v1872 = vpack.c.b16 %v1506, %v1500
    %v1873 = vpack.c.b16 %v1507, %v1501
    %v1874 = vpack.c.b16 %v1508, %v1502
    %v1875 = vpack.c.b16 %v1509, %v1503
    %v1876 = vpack.c.b16 %v1510, %v1504
    %v1877 = vpack.c.b16 %v1511, %v1505
    %v1878 = vpack.c.b16 %v1518, %v1512
    %v1879 = vpack.c.b16 %v1519, %v1513
    %v1880 = vpack.c.b16 %v1520, %v1514
    %v1881 = vpack.c.b16 %v1521, %v1515
    %v1882 = vpack.c.b16 %v1522, %v1516
    %v1883 = vpack.c.b16 %v1523, %v1517
    %v1884 = vpack.c.b16 %v1530, %v1524
    %v1885 = vpack.c.b16 %v1531, %v1525
    %v1886 = vpack.c.b16 %v1532, %v1526
    %v1887 = vpack.c.b16 %v1533, %v1527
    %v1888 = vpack.c.b16 %v1534, %v1528
    %v1889 = vpack.c.b16 %v1535, %v1529
    %v1890 = vpack.c.b16 %v1542, %v1536
    %v1891 = vpack.c.b16 %v1543, %v1537
    %v1892 = vpack.c.b16 %v1544, %v1538
    %v1893 = vpack.c.b16 %v1545, %v1539
    %v1894 = vpack.c.b16 %v1546, %v1540
    %v1895 = vpack.c.b16 %v1547, %v1541
    %v1896 = vpack.c.b16 %v1554, %v1548
    %v1897 = vpack.c.b16 %v1555, %v1549
    %v1898 = vpack.c.b16 %v1556, %v1550
    %v1899 = vpack.c.b16 %v1557, %v1551
    %v1900 = vpack.c.b16 %v1558, %v1552
    %v1901 = vpack.c.b16 %v1559, %v1553
    %v1902 = vpack.c.b16 %v1566, %v1560
    %v1903 = vpack.c.b16 %v1567, %v1561
    %v1904 = vpack.c.b16 %v1568, %v1562
    %v1905 = vpack.c.b16 %v1569, %v1563
    %v1906 = vpack.c.b16 %v1570, %v1564
    %v1907 = vpack.c.b16 %v1571, %v1565
    %v1908 = vpack.c.b16 %v1578, %v1572
    %v1909 = vpack.c.b16 %v1579, %v1573
    %v1910 = vpack.c.b16 %v1580, %v1574
    %v1911 = vpack.c.b16 %v1581, %v1575
    %v1912 = vpack.c.b16 %v1582, %v1576
    %v1913 = vpack.c.b16 %v1583, %v1577
    %v1914 = vpack.c.b16 %v1590, %v1584
    %v1915 = vpack.c.b16 %v1591, %v1585
    %v1916 = vpack.c.b16 %v1592, %v1586
    %v1917 = vpack.c.b16 %v1593, %v1587
    %v1918 = vpack.c.b16 %v1594, %v1588
    %v1919 = vpack.c.b16 %v1595, %v1589
    %v1920 = vpack.c.b16 %v1602, %v1596
    %v1921 = vpack.c.b16 %v1603, %v1597
    %v1922 = vpack.c.b16 %v1604, %v1598
    %v1923 = vpack.c.b16 %v1605, %v1599
    %v1924 = vpack.c.b16 %v1606, %v1600
    %v1925 = vpack.c.b16 %v1607, %v1601
    %v1926 = vpack.c.b16 %v1614, %v1608
    %v1927 = vpack.c.b16 %v1615, %v1609
    %v1928 = vpack.c.b16 %v1616, %v1610
    %v1929 = vpack.c.b16 %v1617, %v1611
    %v1930 = vpack.c.b16 %v1618, %v1612
    %v1931 = vpack.c.b16 %v1619, %v1613
    %v1932 = vpack.c.b16 %v1626, %v1620
    %v1933 = vpack.c.b16 %v1627, %v1621
    %v1934 = vpack.c.b16 %v1628, %v1622
    %v1935 = vpack.c.b16 %v1629, %v1623
    %v1936 = vpack.c.b16 %v1630, %v1624
    %v1937 = vpack.c.b16 %v1631, %v1625
    %v1938 = vpack.c.b16 %v1638, %v1632
    %v1939 = vpack.c.b16 %v1639, %v1633
    %v1940 = vpack.c.b16 %v1640, %v1634
    %v1941 = vpack.c.b16 %v1641, %v1635
    %v1942 = vpack.c.b16 %v1642, %v1636
    %v1943 = vpack.c.b16 %v1643, %v1637
    %v1944 = vpack.c.b16 %v1650, %v1644
    %v1945 = vpack.c.b16 %v1651, %v1645
    %v1946 = vpack.c.b16 %v1652, %v1646
    %v1947 = vpack.c.b16 %v1653, %v1647
    %v1948 = vpack.c.b16 %v1654, %v1648
    %v1949 = vpack.c.b16 %v1655, %v1649
    %v1950 = vpack.c.b16 %v1662, %v1656
    %v1951 = vpack.c.b16 %v1663, %v1657
    %v1952 = vpack.c.b16 %v1664, %v1658
    %v1953 = vpack.c.b16 %v1665, %v1659
    %v1954 = vpack.c.b16 %v1666, %v1660
    %v1955 = vpack.c.b16 %v1667, %v1661
    %2244 = vmatprep.subr.bf16.mxu0 %v1711
    %2245 = vmatpush1.bf16.msra.mxu0 %v1710
    %2246 = vmatprep.subr.bf16.mxu0 %v1705
    %2247 = vmatpush1.bf16.msra.mxu0 %v1704
    %2248 = vmatprep.subr.bf16.mxu0 %v1699
    %2249 = vmatpush1.bf16.msra.mxu0 %v1698
    %2250 = vmatprep.subr.bf16.mxu0 %v1693
    %2251 = vmatpush1.bf16.msra.mxu0 %v1692
    %2252 = vmatprep.subr.bf16.mxu0 %v1687
    %2253 = vmatpush1.bf16.msra.mxu0 %v1686
    %2254 = vmatprep.subr.bf16.mxu0 %v1681
    %2255 = vmatpush1.bf16.msra.mxu0 %v1680
    %2256 = vmatprep.subr.bf16.mxu0 %v1675
    %2257 = vmatpush1.bf16.msra.mxu0 %v1674
    %2258 = vmatprep.subr.bf16.mxu0 %v1669
    %2259 = vmatpush1.bf16.msra.mxu0 %v1668
    %2260 = vmatprep.subr.bf16.mxu0 %v1759
    %2261 = vmatpush2.bf16.msra.mxu0 %v1758
    %2262 = vmatprep.subr.bf16.mxu0 %v1753
    %2263 = vmatpush2.bf16.msra.mxu0 %v1752
    %2264 = vmatprep.subr.bf16.mxu0 %v1747
    %2265 = vmatpush2.bf16.msra.mxu0 %v1746
    %2266 = vmatprep.subr.bf16.mxu0 %v1741
    %2267 = vmatpush2.bf16.msra.mxu0 %v1740
    %2268 = vmatprep.subr.bf16.mxu0 %v1735
    %2269 = vmatpush2.bf16.msra.mxu0 %v1734
    %2270 = vmatprep.subr.bf16.mxu0 %v1729
    %2271 = vmatpush2.bf16.msra.mxu0 %v1728
    %2272 = vmatprep.subr.bf16.mxu0 %v1723
    %2273 = vmatpush2.bf16.msra.mxu0 %v1722
    %2274 = vmatprep.subr.bf16.mxu0 %v1717
    %2275 = vmatpush2.bf16.msra.mxu0 %v1716
    %2276 = vmatprep.mubr.bf16.mxu0 %v223
    %2277 = vmatmul.mubr.bf16.gmra.mxu0 %v222
    %v2278 = vpop.f32.mrf.mxu0
    %v2279 = vadd.f32 0.0, %v2278
    %v2280 = vpop.f32.mrf.mxu0
    %v2281 = vadd.f32 0.0, %v2280
    %v2282 = vpop.f32.mrf.mxu0
    %v2283 = vpop.f32.mrf.mxu0
    %2284 = vdwg.mxu0
    %2285 = vmatprep.subr.bf16.mxu0 %v1807
    %2286 = vmatpush1.bf16.msra.mxu0 %v1806
    %2287 = vmatprep.subr.bf16.mxu0 %v1801
    %2288 = vmatpush1.bf16.msra.mxu0 %v1800
    %2289 = vmatprep.subr.bf16.mxu0 %v1795
    %2290 = vmatpush1.bf16.msra.mxu0 %v1794
    %2291 = vmatprep.subr.bf16.mxu0 %v1789
    %2292 = vmatpush1.bf16.msra.mxu0 %v1788
    %2293 = vmatprep.subr.bf16.mxu0 %v1783
    %2294 = vmatpush1.bf16.msra.mxu0 %v1782
    %2295 = vmatprep.subr.bf16.mxu0 %v1777
    %2296 = vmatpush1.bf16.msra.mxu0 %v1776
    %2297 = vmatprep.subr.bf16.mxu0 %v1771
    %2298 = vmatpush1.bf16.msra.mxu0 %v1770
    %2299 = vmatprep.subr.bf16.mxu0 %v1765
    %2300 = vmatpush1.bf16.msra.mxu0 %v1764
    %2301 = vmatprep.subr.bf16.mxu0 %v1855
    %2302 = vmatpush2.bf16.msra.mxu0 %v1854
    %2303 = vmatprep.subr.bf16.mxu0 %v1849
    %2304 = vmatpush2.bf16.msra.mxu0 %v1848
    %2305 = vmatprep.subr.bf16.mxu0 %v1843
    %2306 = vmatpush2.bf16.msra.mxu0 %v1842
    %2307 = vmatprep.subr.bf16.mxu0 %v1837
    %2308 = vmatpush2.bf16.msra.mxu0 %v1836
    %2309 = vmatprep.subr.bf16.mxu0 %v1831
    %2310 = vmatpush2.bf16.msra.mxu0 %v1830
    %2311 = vmatprep.subr.bf16.mxu0 %v1825
    %2312 = vmatpush2.bf16.msra.mxu0 %v1824
    %2313 = vmatprep.subr.bf16.mxu0 %v1819
    %2314 = vmatpush2.bf16.msra.mxu0 %v1818
    %2315 = vmatprep.subr.bf16.mxu0 %v1813
    %2316 = vmatpush2.bf16.msra.mxu0 %v1812
    %2317 = vmatprep.mubr.bf16.mxu0 %v225
    %2318 = vmatmul.mubr.bf16.gmra.mxu0 %v224
    %v2319 = vpop.f32.mrf.mxu0
    %v2320 = vadd.f32 %v2279, %v2319
    %v2321 = vpop.f32.mrf.mxu0
    %v2322 = vadd.f32 %v2281, %v2321
    %v2323 = vpop.f32.mrf.mxu0
    %v2324 = vpop.f32.mrf.mxu0
    %2325 = vdwg.mxu0
    %2326 = vmatprep.subr.bf16.mxu0 %v1903
    %2327 = vmatpush1.bf16.msra.mxu0 %v1902
    %2328 = vmatprep.subr.bf16.mxu0 %v1897
    %2329 = vmatpush1.bf16.msra.mxu0 %v1896
    %2330 = vmatprep.subr.bf16.mxu0 %v1891
    %2331 = vmatpush1.bf16.msra.mxu0 %v1890
    %2332 = vmatprep.subr.bf16.mxu0 %v1885
    %2333 = vmatpush1.bf16.msra.mxu0 %v1884
    %2334 = vmatprep.subr.bf16.mxu0 %v1879
    %2335 = vmatpush1.bf16.msra.mxu0 %v1878
    %2336 = vmatprep.subr.bf16.mxu0 %v1873
    %2337 = vmatpush1.bf16.msra.mxu0 %v1872
    %2338 = vmatprep.subr.bf16.mxu0 %v1867
    %2339 = vmatpush1.bf16.msra.mxu0 %v1866
    %2340 = vmatprep.subr.bf16.mxu0 %v1861
    %2341 = vmatpush1.bf16.msra.mxu0 %v1860
    %2342 = vmatprep.subr.bf16.mxu0 %v1951
    %2343 = vmatpush2.bf16.msra.mxu0 %v1950
    %2344 = vmatprep.subr.bf16.mxu0 %v1945
    %2345 = vmatpush2.bf16.msra.mxu0 %v1944
    %2346 = vmatprep.subr.bf16.mxu0 %v1939
    %2347 = vmatpush2.bf16.msra.mxu0 %v1938
    %2348 = vmatprep.subr.bf16.mxu0 %v1933
    %2349 = vmatpush2.bf16.msra.mxu0 %v1932
    %2350 = vmatprep.subr.bf16.mxu0 %v1927
    %2351 = vmatpush2.bf16.msra.mxu0 %v1926
    %2352 = vmatprep.subr.bf16.mxu0 %v1921
    %2353 = vmatpush2.bf16.msra.mxu0 %v1920
    %2354 = vmatprep.subr.bf16.mxu0 %v1915
    %2355 = vmatpush2.bf16.msra.mxu0 %v1914
    %2356 = vmatprep.subr.bf16.mxu0 %v1909
    %2357 = vmatpush2.bf16.msra.mxu0 %v1908
    %2358 = vmatprep.mubr.bf16.mxu0 %v227
    %2359 = vmatmul.mubr.bf16.gmra.mxu0 %v226
    %v2360 = vpop.f32.mrf.mxu0
    %v2361 = vadd.f32 %v2320, %v2360
    %v2362 = vpop.f32.mrf.mxu0
    %v2363 = vadd.f32 %v2322, %v2362
    %v2364 = vpop.f32.mrf.mxu0
    %v2365 = vpop.f32.mrf.mxu0
    %2366 = vdwg.mxu0
    %2367 = vmatprep.subr.bf16.mxu0 %v1713
    %2368 = vmatpush1.bf16.msra.mxu0 %v1712
    %2369 = vmatprep.subr.bf16.mxu0 %v1707
    %2370 = vmatpush1.bf16.msra.mxu0 %v1706
    %2371 = vmatprep.subr.bf16.mxu0 %v1701
    %2372 = vmatpush1.bf16.msra.mxu0 %v1700
    %2373 = vmatprep.subr.bf16.mxu0 %v1695
    %2374 = vmatpush1.bf16.msra.mxu0 %v1694
    %2375 = vmatprep.subr.bf16.mxu0 %v1689
    %2376 = vmatpush1.bf16.msra.mxu0 %v1688
    %2377 = vmatprep.subr.bf16.mxu0 %v1683
    %2378 = vmatpush1.bf16.msra.mxu0 %v1682
    %2379 = vmatprep.subr.bf16.mxu0 %v1677
    %2380 = vmatpush1.bf16.msra.mxu0 %v1676
    %2381 = vmatprep.subr.bf16.mxu0 %v1671
    %2382 = vmatpush1.bf16.msra.mxu0 %v1670
    %2383 = vmatprep.subr.bf16.mxu0 %v1761
    %2384 = vmatpush2.bf16.msra.mxu0 %v1760
    %2385 = vmatprep.subr.bf16.mxu0 %v1755
    %2386 = vmatpush2.bf16.msra.mxu0 %v1754
    %2387 = vmatprep.subr.bf16.mxu0 %v1749
    %2388 = vmatpush2.bf16.msra.mxu0 %v1748
    %2389 = vmatprep.subr.bf16.mxu0 %v1743
    %2390 = vmatpush2.bf16.msra.mxu0 %v1742
    %2391 = vmatprep.subr.bf16.mxu0 %v1737
    %2392 = vmatpush2.bf16.msra.mxu0 %v1736
    %2393 = vmatprep.subr.bf16.mxu0 %v1731
    %2394 = vmatpush2.bf16.msra.mxu0 %v1730
    %2395 = vmatprep.subr.bf16.mxu0 %v1725
    %2396 = vmatpush2.bf16.msra.mxu0 %v1724
    %2397 = vmatprep.subr.bf16.mxu0 %v1719
    %2398 = vmatpush2.bf16.msra.mxu0 %v1718
    %2399 = vmatprep.mubr.bf16.mxu0 %v223
    %2400 = vmatmul.mubr.bf16.gmra.mxu0 %v222
    %v2401 = vpop.f32.mrf.mxu0
    %v2402 = vadd.f32 0.0, %v2401
    %v2403 = vpop.f32.mrf.mxu0
    %v2404 = vadd.f32 0.0, %v2403
    %v2405 = vpop.f32.mrf.mxu0
    %v2406 = vpop.f32.mrf.mxu0
    %2407 = vdwg.mxu0
    %2408 = vmatprep.subr.bf16.mxu0 %v1809
    %2409 = vmatpush1.bf16.msra.mxu0 %v1808
    %2410 = vmatprep.subr.bf16.mxu0 %v1803
    %2411 = vmatpush1.bf16.msra.mxu0 %v1802
    %2412 = vmatprep.subr.bf16.mxu0 %v1797
    %2413 = vmatpush1.bf16.msra.mxu0 %v1796
    %2414 = vmatprep.subr.bf16.mxu0 %v1791
    %2415 = vmatpush1.bf16.msra.mxu0 %v1790
    %2416 = vmatprep.subr.bf16.mxu0 %v1785
    %2417 = vmatpush1.bf16.msra.mxu0 %v1784
    %2418 = vmatprep.subr.bf16.mxu0 %v1779
    %2419 = vmatpush1.bf16.msra.mxu0 %v1778
    %2420 = vmatprep.subr.bf16.mxu0 %v1773
    %2421 = vmatpush1.bf16.msra.mxu0 %v1772
    %2422 = vmatprep.subr.bf16.mxu0 %v1767
    %2423 = vmatpush1.bf16.msra.mxu0 %v1766
    %2424 = vmatprep.subr.bf16.mxu0 %v1857
    %2425 = vmatpush2.bf16.msra.mxu0 %v1856
    %2426 = vmatprep.subr.bf16.mxu0 %v1851
    %2427 = vmatpush2.bf16.msra.mxu0 %v1850
    %2428 = vmatprep.subr.bf16.mxu0 %v1845
    %2429 = vmatpush2.bf16.msra.mxu0 %v1844
    %2430 = vmatprep.subr.bf16.mxu0 %v1839
    %2431 = vmatpush2.bf16.msra.mxu0 %v1838
    %2432 = vmatprep.subr.bf16.mxu0 %v1833
    %2433 = vmatpush2.bf16.msra.mxu0 %v1832
    %2434 = vmatprep.subr.bf16.mxu0 %v1827
    %2435 = vmatpush2.bf16.msra.mxu0 %v1826
    %2436 = vmatprep.subr.bf16.mxu0 %v1821
    %2437 = vmatpush2.bf16.msra.mxu0 %v1820
    %2438 = vmatprep.subr.bf16.mxu0 %v1815
    %2439 = vmatpush2.bf16.msra.mxu0 %v1814
    %2440 = vmatprep.mubr.bf16.mxu0 %v225
    %2441 = vmatmul.mubr.bf16.gmra.mxu0 %v224
    %v2442 = vpop.f32.mrf.mxu0
    %v2443 = vadd.f32 %v2402, %v2442
    %v2444 = vpop.f32.mrf.mxu0
    %v2445 = vadd.f32 %v2404, %v2444
    %v2446 = vpop.f32.mrf.mxu0
    %v2447 = vpop.f32.mrf.mxu0
    %2448 = vdwg.mxu0
    %2449 = vmatprep.subr.bf16.mxu0 %v1905
    %2450 = vmatpush1.bf16.msra.mxu0 %v1904
    %2451 = vmatprep.subr.bf16.mxu0 %v1899
    %2452 = vmatpush1.bf16.msra.mxu0 %v1898
    %2453 = vmatprep.subr.bf16.mxu0 %v1893
    %2454 = vmatpush1.bf16.msra.mxu0 %v1892
    %2455 = vmatprep.subr.bf16.mxu0 %v1887
    %2456 = vmatpush1.bf16.msra.mxu0 %v1886
    %2457 = vmatprep.subr.bf16.mxu0 %v1881
    %2458 = vmatpush1.bf16.msra.mxu0 %v1880
    %2459 = vmatprep.subr.bf16.mxu0 %v1875
    %2460 = vmatpush1.bf16.msra.mxu0 %v1874
    %2461 = vmatprep.subr.bf16.mxu0 %v1869
    %2462 = vmatpush1.bf16.msra.mxu0 %v1868
    %2463 = vmatprep.subr.bf16.mxu0 %v1863
    %2464 = vmatpush1.bf16.msra.mxu0 %v1862
    %2465 = vmatprep.subr.bf16.mxu0 %v1953
    %2466 = vmatpush2.bf16.msra.mxu0 %v1952
    %2467 = vmatprep.subr.bf16.mxu0 %v1947
    %2468 = vmatpush2.bf16.msra.mxu0 %v1946
    %2469 = vmatprep.subr.bf16.mxu0 %v1941
    %2470 = vmatpush2.bf16.msra.mxu0 %v1940
    %2471 = vmatprep.subr.bf16.mxu0 %v1935
    %2472 = vmatpush2.bf16.msra.mxu0 %v1934
    %2473 = vmatprep.subr.bf16.mxu0 %v1929
    %2474 = vmatpush2.bf16.msra.mxu0 %v1928
    %2475 = vmatprep.subr.bf16.mxu0 %v1923
    %2476 = vmatpush2.bf16.msra.mxu0 %v1922
    %2477 = vmatprep.subr.bf16.mxu0 %v1917
    %2478 = vmatpush2.bf16.msra.mxu0 %v1916
    %2479 = vmatprep.subr.bf16.mxu0 %v1911
    %2480 = vmatpush2.bf16.msra.mxu0 %v1910
    %2481 = vmatprep.mubr.bf16.mxu0 %v227
    %2482 = vmatmul.mubr.bf16.gmra.mxu0 %v226
    %v2483 = vpop.f32.mrf.mxu0
    %v2484 = vadd.f32 %v2443, %v2483
    %v2485 = vpop.f32.mrf.mxu0
    %v2486 = vadd.f32 %v2445, %v2485
    %v2487 = vpop.f32.mrf.mxu0
    %v2488 = vpop.f32.mrf.mxu0
    %2489 = vdwg.mxu0
    %2490 = vmatprep.subr.bf16.mxu0 %v1715
    %2491 = vmatpush1.bf16.msra.mxu0 %v1714
    %2492 = vmatprep.subr.bf16.mxu0 %v1709
    %2493 = vmatpush1.bf16.msra.mxu0 %v1708
    %2494 = vmatprep.subr.bf16.mxu0 %v1703
    %2495 = vmatpush1.bf16.msra.mxu0 %v1702
    %2496 = vmatprep.subr.bf16.mxu0 %v1697
    %2497 = vmatpush1.bf16.msra.mxu0 %v1696
    %2498 = vmatprep.subr.bf16.mxu0 %v1691
    %2499 = vmatpush1.bf16.msra.mxu0 %v1690
    %2500 = vmatprep.subr.bf16.mxu0 %v1685
    %2501 = vmatpush1.bf16.msra.mxu0 %v1684
    %2502 = vmatprep.subr.bf16.mxu0 %v1679
    %2503 = vmatpush1.bf16.msra.mxu0 %v1678
    %2504 = vmatprep.subr.bf16.mxu0 %v1673
    %2505 = vmatpush1.bf16.msra.mxu0 %v1672
    %2506 = vmatprep.subr.bf16.mxu0 %v1763
    %2507 = vmatpush2.bf16.msra.mxu0 %v1762
    %2508 = vmatprep.subr.bf16.mxu0 %v1757
    %2509 = vmatpush2.bf16.msra.mxu0 %v1756
    %2510 = vmatprep.subr.bf16.mxu0 %v1751
    %2511 = vmatpush2.bf16.msra.mxu0 %v1750
    %2512 = vmatprep.subr.bf16.mxu0 %v1745
    %2513 = vmatpush2.bf16.msra.mxu0 %v1744
    %2514 = vmatprep.subr.bf16.mxu0 %v1739
    %2515 = vmatpush2.bf16.msra.mxu0 %v1738
    %2516 = vmatprep.subr.bf16.mxu0 %v1733
    %2517 = vmatpush2.bf16.msra.mxu0 %v1732
    %2518 = vmatprep.subr.bf16.mxu0 %v1727
    %2519 = vmatpush2.bf16.msra.mxu0 %v1726
    %2520 = vmatprep.subr.bf16.mxu0 %v1721
    %2521 = vmatpush2.bf16.msra.mxu0 %v1720
    %2522 = vmatprep.mubr.bf16.mxu0 %v223
    %2523 = vmatmul.mubr.bf16.gmra.mxu0 %v222
    %v2524 = vpop.f32.mrf.mxu0
    %v2525 = vadd.f32 0.0, %v2524
    %v2526 = vpop.f32.mrf.mxu0
    %v2527 = vadd.f32 0.0, %v2526
    %v2528 = vpop.f32.mrf.mxu0
    %v2529 = vpop.f32.mrf.mxu0
    %2530 = vdwg.mxu0
    %2531 = vmatprep.subr.bf16.mxu0 %v1811
    %2532 = vmatpush1.bf16.msra.mxu0 %v1810
    %2533 = vmatprep.subr.bf16.mxu0 %v1805
    %2534 = vmatpush1.bf16.msra.mxu0 %v1804
    %2535 = vmatprep.subr.bf16.mxu0 %v1799
    %2536 = vmatpush1.bf16.msra.mxu0 %v1798
    %2537 = vmatprep.subr.bf16.mxu0 %v1793
    %2538 = vmatpush1.bf16.msra.mxu0 %v1792
    %2539 = vmatprep.subr.bf16.mxu0 %v1787
    %2540 = vmatpush1.bf16.msra.mxu0 %v1786
    %2541 = vmatprep.subr.bf16.mxu0 %v1781
    %2542 = vmatpush1.bf16.msra.mxu0 %v1780
    %2543 = vmatprep.subr.bf16.mxu0 %v1775
    %2544 = vmatpush1.bf16.msra.mxu0 %v1774
    %2545 = vmatprep.subr.bf16.mxu0 %v1769
    %2546 = vmatpush1.bf16.msra.mxu0 %v1768
    %2547 = vmatprep.subr.bf16.mxu0 %v1859
    %2548 = vmatpush2.bf16.msra.mxu0 %v1858
    %2549 = vmatprep.subr.bf16.mxu0 %v1853
    %2550 = vmatpush2.bf16.msra.mxu0 %v1852
    %2551 = vmatprep.subr.bf16.mxu0 %v1847
    %2552 = vmatpush2.bf16.msra.mxu0 %v1846
    %2553 = vmatprep.subr.bf16.mxu0 %v1841
    %2554 = vmatpush2.bf16.msra.mxu0 %v1840
    %2555 = vmatprep.subr.bf16.mxu0 %v1835
    %2556 = vmatpush2.bf16.msra.mxu0 %v1834
    %2557 = vmatprep.subr.bf16.mxu0 %v1829
    %2558 = vmatpush2.bf16.msra.mxu0 %v1828
    %2559 = vmatprep.subr.bf16.mxu0 %v1823
    %2560 = vmatpush2.bf16.msra.mxu0 %v1822
    %2561 = vmatprep.subr.bf16.mxu0 %v1817
    %2562 = vmatpush2.bf16.msra.mxu0 %v1816
    %2563 = vmatprep.mubr.bf16.mxu0 %v225
    %2564 = vmatmul.mubr.bf16.gmra.mxu0 %v224
    %v2565 = vpop.f32.mrf.mxu0
    %v2566 = vadd.f32 %v2525, %v2565
    %v2567 = vpop.f32.mrf.mxu0
    %v2568 = vadd.f32 %v2527, %v2567
    %v2569 = vpop.f32.mrf.mxu0
    %v2570 = vpop.f32.mrf.mxu0
    %2571 = vdwg.mxu0
    %2572 = vmatprep.subr.bf16.mxu0 %v1907
    %2573 = vmatpush1.bf16.msra.mxu0 %v1906
    %2574 = vmatprep.subr.bf16.mxu0 %v1901
    %2575 = vmatpush1.bf16.msra.mxu0 %v1900
    %2576 = vmatprep.subr.bf16.mxu0 %v1895
    %2577 = vmatpush1.bf16.msra.mxu0 %v1894
    %2578 = vmatprep.subr.bf16.mxu0 %v1889
    %2579 = vmatpush1.bf16.msra.mxu0 %v1888
    %2580 = vmatprep.subr.bf16.mxu0 %v1883
    %2581 = vmatpush1.bf16.msra.mxu0 %v1882
    %2582 = vmatprep.subr.bf16.mxu0 %v1877
    %2583 = vmatpush1.bf16.msra.mxu0 %v1876
    %2584 = vmatprep.subr.bf16.mxu0 %v1871
    %2585 = vmatpush1.bf16.msra.mxu0 %v1870
    %2586 = vmatprep.subr.bf16.mxu0 %v1865
    %2587 = vmatpush1.bf16.msra.mxu0 %v1864
    %2588 = vmatprep.subr.bf16.mxu0 %v1955
    %2589 = vmatpush2.bf16.msra.mxu0 %v1954
    %2590 = vmatprep.subr.bf16.mxu0 %v1949
    %2591 = vmatpush2.bf16.msra.mxu0 %v1948
    %2592 = vmatprep.subr.bf16.mxu0 %v1943
    %2593 = vmatpush2.bf16.msra.mxu0 %v1942
    %2594 = vmatprep.subr.bf16.mxu0 %v1937
    %2595 = vmatpush2.bf16.msra.mxu0 %v1936
    %2596 = vmatprep.subr.bf16.mxu0 %v1931
    %2597 = vmatpush2.bf16.msra.mxu0 %v1930
    %2598 = vmatprep.subr.bf16.mxu0 %v1925
    %2599 = vmatpush2.bf16.msra.mxu0 %v1924
    %2600 = vmatprep.subr.bf16.mxu0 %v1919
    %2601 = vmatpush2.bf16.msra.mxu0 %v1918
    %2602 = vmatprep.subr.bf16.mxu0 %v1913
    %2603 = vmatpush2.bf16.msra.mxu0 %v1912
    %2604 = vmatprep.mubr.bf16.mxu0 %v227
    %2605 = vmatmul.mubr.bf16.gmra.mxu0 %v226
    %v2606 = vpop.f32.mrf.mxu0
    %v2607 = vadd.f32 %v2566, %v2606
    %v2608 = vpop.f32.mrf.mxu0
    %v2609 = vadd.f32 %v2568, %v2608
    %v2610 = vpop.f32.mrf.mxu0
    %v2611 = vpop.f32.mrf.mxu0
    %2612 = vdwg.mxu0
    %v2901 = vunpack.c.l.b16 %v228
    %v2902 = vunpack.c.h.b16 %v228
    %v2903 = vunpack.c.l.b16 %v229
    %v2904 = vunpack.c.h.b16 %v229
    %v2905 = vunpack.c.l.b16 %v230
    %v2906 = vunpack.c.h.b16 %v230
    %v2907 = vunpack.c.l.b16 %v231
    %v2908 = vunpack.c.h.b16 %v231
    %v2909 = vunpack.c.l.b16 %v232
    %v2910 = vunpack.c.h.b16 %v232
    %v2911 = vunpack.c.l.b16 %v233
    %v2912 = vunpack.c.h.b16 %v233
    %v2913 = vunpack.c.l.b16 %v234
    %v2914 = vunpack.c.h.b16 %v234
    %v2915 = vunpack.c.l.b16 %v235
    %v2916 = vunpack.c.h.b16 %v235
    %v2917 = vunpack.c.l.b16 %v236
    %v2918 = vunpack.c.h.b16 %v236
    %v2919 = vunpack.c.l.b16 %v237
    %v2920 = vunpack.c.h.b16 %v237
    %v2921 = vunpack.c.l.b16 %v238
    %v2922 = vunpack.c.h.b16 %v238
    %v2923 = vunpack.c.l.b16 %v239
    %v2924 = vunpack.c.h.b16 %v239
    %v2925 = vunpack.c.l.b16 %v240
    %v2926 = vunpack.c.h.b16 %v240
    %v2927 = vunpack.c.l.b16 %v241
    %v2928 = vunpack.c.h.b16 %v241
    %v2929 = vunpack.c.l.b16 %v242
    %v2930 = vunpack.c.h.b16 %v242
    %v2931 = vunpack.c.l.b16 %v243
    %v2932 = vunpack.c.h.b16 %v243
    %v2933 = vunpack.c.l.b16 %v244
    %v2934 = vunpack.c.h.b16 %v244
    %v2935 = vunpack.c.l.b16 %v245
    %v2936 = vunpack.c.h.b16 %v245
    %v2937 = vunpack.c.l.b16 %v246
    %v2938 = vunpack.c.h.b16 %v246
    %v2939 = vunpack.c.l.b16 %v247
    %v2940 = vunpack.c.h.b16 %v247
    %v2941 = vunpack.c.l.b16 %v248
    %v2942 = vunpack.c.h.b16 %v248
    %v2943 = vunpack.c.l.b16 %v249
    %v2944 = vunpack.c.h.b16 %v249
    %v2945 = vunpack.c.l.b16 %v250
    %v2946 = vunpack.c.h.b16 %v250
    %v2947 = vunpack.c.l.b16 %v251
    %v2948 = vunpack.c.h.b16 %v251
    %v2949 = vunpack.c.l.b16 %v252
    %v2950 = vunpack.c.h.b16 %v252
    %v2951 = vunpack.c.l.b16 %v253
    %v2952 = vunpack.c.h.b16 %v253
    %v2953 = vunpack.c.l.b16 %v254
    %v2954 = vunpack.c.h.b16 %v254
    %v2955 = vunpack.c.l.b16 %v255
    %v2956 = vunpack.c.h.b16 %v255
    %v2957 = vunpack.c.l.b16 %v256
    %v2958 = vunpack.c.h.b16 %v256
    %v2959 = vunpack.c.l.b16 %v257
    %v2960 = vunpack.c.h.b16 %v257
    %v2961 = vunpack.c.l.b16 %v258
    %v2962 = vunpack.c.h.b16 %v258
    %v2963 = vunpack.c.l.b16 %v259
    %v2964 = vunpack.c.h.b16 %v259
    %v2965 = vunpack.c.l.b16 %v260
    %v2966 = vunpack.c.h.b16 %v260
    %v2967 = vunpack.c.l.b16 %v261
    %v2968 = vunpack.c.h.b16 %v261
    %v2969 = vunpack.c.l.b16 %v262
    %v2970 = vunpack.c.h.b16 %v262
    %v2971 = vunpack.c.l.b16 %v263
    %v2972 = vunpack.c.h.b16 %v263
    %v2973 = vunpack.c.l.b16 %v264
    %v2974 = vunpack.c.h.b16 %v264
    %v2975 = vunpack.c.l.b16 %v265
    %v2976 = vunpack.c.h.b16 %v265
    %v2977 = vunpack.c.l.b16 %v266
    %v2978 = vunpack.c.h.b16 %v266
    %v2979 = vunpack.c.l.b16 %v267
    %v2980 = vunpack.c.h.b16 %v267
    %v2981 = vunpack.c.l.b16 %v268
    %v2982 = vunpack.c.h.b16 %v268
    %v2983 = vunpack.c.l.b16 %v269
    %v2984 = vunpack.c.h.b16 %v269
    %v2985 = vunpack.c.l.b16 %v270
    %v2986 = vunpack.c.h.b16 %v270
    %v2987 = vunpack.c.l.b16 %v271
    %v2988 = vunpack.c.h.b16 %v271
    %v2989 = vunpack.c.l.b16 %v272
    %v2990 = vunpack.c.h.b16 %v272
    %v2991 = vunpack.c.l.b16 %v273
    %v2992 = vunpack.c.h.b16 %v273
    %v2993 = vunpack.c.l.b16 %v274
    %v2994 = vunpack.c.h.b16 %v274
    %v2995 = vunpack.c.l.b16 %v275
    %v2996 = vunpack.c.h.b16 %v275
    %v2997 = vunpack.c.l.b16 %v276
    %v2998 = vunpack.c.h.b16 %v276
    %v2999 = vunpack.c.l.b16 %v277
    %v3000 = vunpack.c.h.b16 %v277
    %v3001 = vunpack.c.l.b16 %v278
    %v3002 = vunpack.c.h.b16 %v278
    %v3003 = vunpack.c.l.b16 %v279
    %v3004 = vunpack.c.h.b16 %v279
    %v3005 = vunpack.c.l.b16 %v280
    %v3006 = vunpack.c.h.b16 %v280
    %v3007 = vunpack.c.l.b16 %v281
    %v3008 = vunpack.c.h.b16 %v281
    %v3009 = vunpack.c.l.b16 %v282
    %v3010 = vunpack.c.h.b16 %v282
    %v3011 = vunpack.c.l.b16 %v283
    %v3012 = vunpack.c.h.b16 %v283
    %v3013 = vunpack.c.l.b16 %v284
    %v3014 = vunpack.c.h.b16 %v284
    %v3015 = vunpack.c.l.b16 %v285
    %v3016 = vunpack.c.h.b16 %v285
    %v3017 = vunpack.c.l.b16 %v286
    %v3018 = vunpack.c.h.b16 %v286
    %v3019 = vunpack.c.l.b16 %v287
    %v3020 = vunpack.c.h.b16 %v287
    %v3021 = vunpack.c.l.b16 %v288
    %v3022 = vunpack.c.h.b16 %v288
    %v3023 = vunpack.c.l.b16 %v289
    %v3024 = vunpack.c.h.b16 %v289
    %v3025 = vunpack.c.l.b16 %v290
    %v3026 = vunpack.c.h.b16 %v290
    %v3027 = vunpack.c.l.b16 %v291
    %v3028 = vunpack.c.h.b16 %v291
    %v3029 = vunpack.c.l.b16 %v292
    %v3030 = vunpack.c.h.b16 %v292
    %v3031 = vunpack.c.l.b16 %v293
    %v3032 = vunpack.c.h.b16 %v293
    %v3033 = vunpack.c.l.b16 %v294
    %v3034 = vunpack.c.h.b16 %v294
    %v3035 = vunpack.c.l.b16 %v295
    %v3036 = vunpack.c.h.b16 %v295
    %v3037 = vunpack.c.l.b16 %v296
    %v3038 = vunpack.c.h.b16 %v296
    %v3039 = vunpack.c.l.b16 %v297
    %v3040 = vunpack.c.h.b16 %v297
    %v3041 = vunpack.c.l.b16 %v298
    %v3042 = vunpack.c.h.b16 %v298
    %v3043 = vunpack.c.l.b16 %v299
    %v3044 = vunpack.c.h.b16 %v299
    %v3045 = vunpack.c.l.b16 %v300
    %v3046 = vunpack.c.h.b16 %v300
    %v3047 = vunpack.c.l.b16 %v301
    %v3048 = vunpack.c.h.b16 %v301
    %v3049 = vunpack.c.l.b16 %v302
    %v3050 = vunpack.c.h.b16 %v302
    %v3051 = vunpack.c.l.b16 %v303
    %v3052 = vunpack.c.h.b16 %v303
    %v3053 = vunpack.c.l.b16 %v304
    %v3054 = vunpack.c.h.b16 %v304
    %v3055 = vunpack.c.l.b16 %v305
    %v3056 = vunpack.c.h.b16 %v305
    %v3057 = vunpack.c.l.b16 %v306
    %v3058 = vunpack.c.h.b16 %v306
    %v3059 = vunpack.c.l.b16 %v307
    %v3060 = vunpack.c.h.b16 %v307
    %v3061 = vunpack.c.l.b16 %v308
    %v3062 = vunpack.c.h.b16 %v308
    %v3063 = vunpack.c.l.b16 %v309
    %v3064 = vunpack.c.h.b16 %v309
    %v3065 = vunpack.c.l.b16 %v310
    %v3066 = vunpack.c.h.b16 %v310
    %v3067 = vunpack.c.l.b16 %v311
    %v3068 = vunpack.c.h.b16 %v311
    %v3069 = vunpack.c.l.b16 %v312
    %v3070 = vunpack.c.h.b16 %v312
    %v3071 = vunpack.c.l.b16 %v313
    %v3072 = vunpack.c.h.b16 %v313
    %v3073 = vunpack.c.l.b16 %v314
    %v3074 = vunpack.c.h.b16 %v314
    %v3075 = vunpack.c.l.b16 %v315
    %v3076 = vunpack.c.h.b16 %v315
    %v3077 = vunpack.c.l.b16 %v316
    %v3078 = vunpack.c.h.b16 %v316
    %v3079 = vunpack.c.l.b16 %v317
    %v3080 = vunpack.c.h.b16 %v317
    %v3081 = vunpack.c.l.b16 %v318
    %v3082 = vunpack.c.h.b16 %v318
    %v3083 = vunpack.c.l.b16 %v319
    %v3084 = vunpack.c.h.b16 %v319
    %v3085 = vunpack.c.l.b16 %v320
    %v3086 = vunpack.c.h.b16 %v320
    %v3087 = vunpack.c.l.b16 %v321
    %v3088 = vunpack.c.h.b16 %v321
    %v3089 = vunpack.c.l.b16 %v322
    %v3090 = vunpack.c.h.b16 %v322
    %v3091 = vunpack.c.l.b16 %v323
    %v3092 = vunpack.c.h.b16 %v323
    %v3093 = vunpack.c.l.b16 %v324
    %v3094 = vunpack.c.h.b16 %v324
    %v3095 = vunpack.c.l.b16 %v325
    %v3096 = vunpack.c.h.b16 %v325
    %v3097 = vunpack.c.l.b16 %v326
    %v3098 = vunpack.c.h.b16 %v326
    %v3099 = vunpack.c.l.b16 %v327
    %v3100 = vunpack.c.h.b16 %v327
    %v3101 = vunpack.c.l.b16 %v328
    %v3102 = vunpack.c.h.b16 %v328
    %v3103 = vunpack.c.l.b16 %v329
    %v3104 = vunpack.c.h.b16 %v329
    %v3105 = vunpack.c.l.b16 %v330
    %v3106 = vunpack.c.h.b16 %v330
    %v3107 = vunpack.c.l.b16 %v331
    %v3108 = vunpack.c.h.b16 %v331
    %v3109 = vunpack.c.l.b16 %v332
    %v3110 = vunpack.c.h.b16 %v332
    %v3111 = vunpack.c.l.b16 %v333
    %v3112 = vunpack.c.h.b16 %v333
    %v3113 = vunpack.c.l.b16 %v334
    %v3114 = vunpack.c.h.b16 %v334
    %v3115 = vunpack.c.l.b16 %v335
    %v3116 = vunpack.c.h.b16 %v335
    %v3117 = vunpack.c.l.b16 %v336
    %v3118 = vunpack.c.h.b16 %v336
    %v3119 = vunpack.c.l.b16 %v337
    %v3120 = vunpack.c.h.b16 %v337
    %v3121 = vunpack.c.l.b16 %v338
    %v3122 = vunpack.c.h.b16 %v338
    %v3123 = vunpack.c.l.b16 %v339
    %v3124 = vunpack.c.h.b16 %v339
    %v3125 = vunpack.c.l.b16 %v340
    %v3126 = vunpack.c.h.b16 %v340
    %v3127 = vunpack.c.l.b16 %v341
    %v3128 = vunpack.c.h.b16 %v341
    %v3129 = vunpack.c.l.b16 %v342
    %v3130 = vunpack.c.h.b16 %v342
    %v3131 = vunpack.c.l.b16 %v343
    %v3132 = vunpack.c.h.b16 %v343
    %v3133 = vunpack.c.l.b16 %v344
    %v3134 = vunpack.c.h.b16 %v344
    %v3135 = vunpack.c.l.b16 %v345
    %v3136 = vunpack.c.h.b16 %v345
    %v3137 = vunpack.c.l.b16 %v346
    %v3138 = vunpack.c.h.b16 %v346
    %v3139 = vunpack.c.l.b16 %v347
    %v3140 = vunpack.c.h.b16 %v347
    %v3141 = vunpack.c.l.b16 %v348
    %v3142 = vunpack.c.h.b16 %v348
    %v3143 = vunpack.c.l.b16 %v349
    %v3144 = vunpack.c.h.b16 %v349
    %v3145 = vunpack.c.l.b16 %v350
    %v3146 = vunpack.c.h.b16 %v350
    %v3147 = vunpack.c.l.b16 %v351
    %v3148 = vunpack.c.h.b16 %v351
    %v3149 = vunpack.c.l.b16 %v352
    %v3150 = vunpack.c.h.b16 %v352
    %v3151 = vunpack.c.l.b16 %v353
    %v3152 = vunpack.c.h.b16 %v353
    %v3153 = vunpack.c.l.b16 %v354
    %v3154 = vunpack.c.h.b16 %v354
    %v3155 = vunpack.c.l.b16 %v355
    %v3156 = vunpack.c.h.b16 %v355
    %v3157 = vunpack.c.l.b16 %v356
    %v3158 = vunpack.c.h.b16 %v356
    %v3159 = vunpack.c.l.b16 %v357
    %v3160 = vunpack.c.h.b16 %v357
    %v3161 = vunpack.c.l.b16 %v358
    %v3162 = vunpack.c.h.b16 %v358
    %v3163 = vunpack.c.l.b16 %v359
    %v3164 = vunpack.c.h.b16 %v359
    %v3165 = vunpack.c.l.b16 %v360
    %v3166 = vunpack.c.h.b16 %v360
    %v3167 = vunpack.c.l.b16 %v361
    %v3168 = vunpack.c.h.b16 %v361
    %v3169 = vunpack.c.l.b16 %v362
    %v3170 = vunpack.c.h.b16 %v362
    %v3171 = vunpack.c.l.b16 %v363
    %v3172 = vunpack.c.h.b16 %v363
    %v3173 = vunpack.c.l.b16 %v364
    %v3174 = vunpack.c.h.b16 %v364
    %v3175 = vunpack.c.l.b16 %v365
    %v3176 = vunpack.c.h.b16 %v365
    %v3177 = vunpack.c.l.b16 %v366
    %v3178 = vunpack.c.h.b16 %v366
    %v3179 = vunpack.c.l.b16 %v367
    %v3180 = vunpack.c.h.b16 %v367
    %v3181 = vunpack.c.l.b16 %v368
    %v3182 = vunpack.c.h.b16 %v368
    %v3183 = vunpack.c.l.b16 %v369
    %v3184 = vunpack.c.h.b16 %v369
    %v3185 = vunpack.c.l.b16 %v370
    %v3186 = vunpack.c.h.b16 %v370
    %v3187 = vunpack.c.l.b16 %v371
    %v3188 = vunpack.c.h.b16 %v371
    %v3189 = vunpack.c.l.b16 %v372
    %v3190 = vunpack.c.h.b16 %v372
    %v3191 = vunpack.c.l.b16 %v373
    %v3192 = vunpack.c.h.b16 %v373
    %v3193 = vunpack.c.l.b16 %v374
    %v3194 = vunpack.c.h.b16 %v374
    %v3195 = vunpack.c.l.b16 %v375
    %v3196 = vunpack.c.h.b16 %v375
    %v3197 = vunpack.c.l.b16 %v376
    %v3198 = vunpack.c.h.b16 %v376
    %v3199 = vunpack.c.l.b16 %v377
    %v3200 = vunpack.c.h.b16 %v377
    %v3201 = vunpack.c.l.b16 %v378
    %v3202 = vunpack.c.h.b16 %v378
    %v3203 = vunpack.c.l.b16 %v379
    %v3204 = vunpack.c.h.b16 %v379
    %v3205 = vunpack.c.l.b16 %v380
    %v3206 = vunpack.c.h.b16 %v380
    %v3207 = vunpack.c.l.b16 %v381
    %v3208 = vunpack.c.h.b16 %v381
    %v3209 = vunpack.c.l.b16 %v382
    %v3210 = vunpack.c.h.b16 %v382
    %v3211 = vunpack.c.l.b16 %v383
    %v3212 = vunpack.c.h.b16 %v383
    %v3213 = vunpack.c.l.b16 %v384
    %v3214 = vunpack.c.h.b16 %v384
    %v3215 = vunpack.c.l.b16 %v385
    %v3216 = vunpack.c.h.b16 %v385
    %v3217 = vunpack.c.l.b16 %v386
    %v3218 = vunpack.c.h.b16 %v386
    %v3219 = vunpack.c.l.b16 %v387
    %v3220 = vunpack.c.h.b16 %v387
    %v3221 = vunpack.c.l.b16 %v388
    %v3222 = vunpack.c.h.b16 %v388
    %v3223 = vunpack.c.l.b16 %v389
    %v3224 = vunpack.c.h.b16 %v389
    %v3225 = vunpack.c.l.b16 %v390
    %v3226 = vunpack.c.h.b16 %v390
    %v3227 = vunpack.c.l.b16 %v391
    %v3228 = vunpack.c.h.b16 %v391
    %v3229 = vunpack.c.l.b16 %v392
    %v3230 = vunpack.c.h.b16 %v392
    %v3231 = vunpack.c.l.b16 %v393
    %v3232 = vunpack.c.h.b16 %v393
    %v3233 = vunpack.c.l.b16 %v394
    %v3234 = vunpack.c.h.b16 %v394
    %v3235 = vunpack.c.l.b16 %v395
    %v3236 = vunpack.c.h.b16 %v395
    %v3237 = vunpack.c.l.b16 %v396
    %v3238 = vunpack.c.h.b16 %v396
    %v3239 = vunpack.c.l.b16 %v397
    %v3240 = vunpack.c.h.b16 %v397
    %v3241 = vunpack.c.l.b16 %v398
    %v3242 = vunpack.c.h.b16 %v398
    %v3243 = vunpack.c.l.b16 %v399
    %v3244 = vunpack.c.h.b16 %v399
    %v3245 = vunpack.c.l.b16 %v400
    %v3246 = vunpack.c.h.b16 %v400
    %v3247 = vunpack.c.l.b16 %v401
    %v3248 = vunpack.c.h.b16 %v401
    %v3249 = vunpack.c.l.b16 %v402
    %v3250 = vunpack.c.h.b16 %v402
    %v3251 = vunpack.c.l.b16 %v403
    %v3252 = vunpack.c.h.b16 %v403
    %v3253 = vunpack.c.l.b16 %v404
    %v3254 = vunpack.c.h.b16 %v404
    %v3255 = vunpack.c.l.b16 %v405
    %v3256 = vunpack.c.h.b16 %v405
    %v3257 = vunpack.c.l.b16 %v406
    %v3258 = vunpack.c.h.b16 %v406
    %v3259 = vunpack.c.l.b16 %v407
    %v3260 = vunpack.c.h.b16 %v407
    %v3261 = vunpack.c.l.b16 %v408
    %v3262 = vunpack.c.h.b16 %v408
    %v3263 = vunpack.c.l.b16 %v409
    %v3264 = vunpack.c.h.b16 %v409
    %v3265 = vunpack.c.l.b16 %v410
    %v3266 = vunpack.c.h.b16 %v410
    %v3267 = vunpack.c.l.b16 %v411
    %v3268 = vunpack.c.h.b16 %v411
    %v3269 = vunpack.c.l.b16 %v412
    %v3270 = vunpack.c.h.b16 %v412
    %v3271 = vunpack.c.l.b16 %v413
    %v3272 = vunpack.c.h.b16 %v413
    %v3273 = vunpack.c.l.b16 %v414
    %v3274 = vunpack.c.h.b16 %v414
    %v3275 = vunpack.c.l.b16 %v415
    %v3276 = vunpack.c.h.b16 %v415
    %v3277 = vunpack.c.l.b16 %v416
    %v3278 = vunpack.c.h.b16 %v416
    %v3279 = vunpack.c.l.b16 %v417
    %v3280 = vunpack.c.h.b16 %v417
    %v3281 = vunpack.c.l.b16 %v418
    %v3282 = vunpack.c.h.b16 %v418
    %v3283 = vunpack.c.l.b16 %v419
    %v3284 = vunpack.c.h.b16 %v419
    %v3285 = vunpack.c.l.b16 %v420
    %v3286 = vunpack.c.h.b16 %v420
    %v3287 = vunpack.c.l.b16 %v421
    %v3288 = vunpack.c.h.b16 %v421
    %v3289 = vunpack.c.l.b16 %v422
    %v3290 = vunpack.c.h.b16 %v422
    %v3291 = vunpack.c.l.b16 %v423
    %v3292 = vunpack.c.h.b16 %v423
    %v3293 = vunpack.c.l.b16 %v424
    %v3294 = vunpack.c.h.b16 %v424
    %v3295 = vunpack.c.l.b16 %v425
    %v3296 = vunpack.c.h.b16 %v425
    %v3297 = vunpack.c.l.b16 %v426
    %v3298 = vunpack.c.h.b16 %v426
    %v3299 = vunpack.c.l.b16 %v427
    %v3300 = vunpack.c.h.b16 %v427
    %v3301 = vunpack.c.l.b16 %v428
    %v3302 = vunpack.c.h.b16 %v428
    %v3303 = vunpack.c.l.b16 %v429
    %v3304 = vunpack.c.h.b16 %v429
    %v3305 = vunpack.c.l.b16 %v430
    %v3306 = vunpack.c.h.b16 %v430
    %v3307 = vunpack.c.l.b16 %v431
    %v3308 = vunpack.c.h.b16 %v431
    %v3309 = vunpack.c.l.b16 %v432
    %v3310 = vunpack.c.h.b16 %v432
    %v3311 = vunpack.c.l.b16 %v433
    %v3312 = vunpack.c.h.b16 %v433
    %v3313 = vunpack.c.l.b16 %v434
    %v3314 = vunpack.c.h.b16 %v434
    %v3315 = vunpack.c.l.b16 %v435
    %v3316 = vunpack.c.h.b16 %v435
    %v3317 = vunpack.c.l.b16 %v436
    %v3318 = vunpack.c.h.b16 %v436
    %v3319 = vunpack.c.l.b16 %v437
    %v3320 = vunpack.c.h.b16 %v437
    %v3321 = vunpack.c.l.b16 %v438
    %v3322 = vunpack.c.h.b16 %v438
    %v3323 = vunpack.c.l.b16 %v439
    %v3324 = vunpack.c.h.b16 %v439
    %v3325 = vunpack.c.l.b16 %v440
    %v3326 = vunpack.c.h.b16 %v440
    %v3327 = vunpack.c.l.b16 %v441
    %v3328 = vunpack.c.h.b16 %v441
    %v3329 = vunpack.c.l.b16 %v442
    %v3330 = vunpack.c.h.b16 %v442
    %v3331 = vunpack.c.l.b16 %v443
    %v3332 = vunpack.c.h.b16 %v443
    %v3333 = vunpack.c.l.b16 %v444
    %v3334 = vunpack.c.h.b16 %v444
    %v3335 = vunpack.c.l.b16 %v445
    %v3336 = vunpack.c.h.b16 %v445
    %v3337 = vunpack.c.l.b16 %v446
    %v3338 = vunpack.c.h.b16 %v446
    %v3339 = vunpack.c.l.b16 %v447
    %v3340 = vunpack.c.h.b16 %v447
    %v3341 = vunpack.c.l.b16 %v448
    %v3342 = vunpack.c.h.b16 %v448
    %v3343 = vunpack.c.l.b16 %v449
    %v3344 = vunpack.c.h.b16 %v449
    %v3345 = vunpack.c.l.b16 %v450
    %v3346 = vunpack.c.h.b16 %v450
    %v3347 = vunpack.c.l.b16 %v451
    %v3348 = vunpack.c.h.b16 %v451
    %v3349 = vunpack.c.l.b16 %v452
    %v3350 = vunpack.c.h.b16 %v452
    %v3351 = vunpack.c.l.b16 %v453
    %v3352 = vunpack.c.h.b16 %v453
    %v3353 = vunpack.c.l.b16 %v454
    %v3354 = vunpack.c.h.b16 %v454
    %v3355 = vunpack.c.l.b16 %v455
    %v3356 = vunpack.c.h.b16 %v455
    %v3357 = vunpack.c.l.b16 %v456
    %v3358 = vunpack.c.h.b16 %v456
    %v3359 = vunpack.c.l.b16 %v457
    %v3360 = vunpack.c.h.b16 %v457
    %v3361 = vunpack.c.l.b16 %v458
    %v3362 = vunpack.c.h.b16 %v458
    %v3363 = vunpack.c.l.b16 %v459
    %v3364 = vunpack.c.h.b16 %v459
    %v3365 = vunpack.c.l.b16 %v460
    %v3366 = vunpack.c.h.b16 %v460
    %v3367 = vunpack.c.l.b16 %v461
    %v3368 = vunpack.c.h.b16 %v461
    %v3369 = vunpack.c.l.b16 %v462
    %v3370 = vunpack.c.h.b16 %v462
    %v3371 = vunpack.c.l.b16 %v463
    %v3372 = vunpack.c.h.b16 %v463
    %v3373 = vunpack.c.l.b16 %v464
    %v3374 = vunpack.c.h.b16 %v464
    %v3375 = vunpack.c.l.b16 %v465
    %v3376 = vunpack.c.h.b16 %v465
    %v3377 = vunpack.c.l.b16 %v466
    %v3378 = vunpack.c.h.b16 %v466
    %v3379 = vunpack.c.l.b16 %v467
    %v3380 = vunpack.c.h.b16 %v467
    %v3381 = vunpack.c.l.b16 %v468
    %v3382 = vunpack.c.h.b16 %v468
    %v3383 = vunpack.c.l.b16 %v469
    %v3384 = vunpack.c.h.b16 %v469
    %v3385 = vunpack.c.l.b16 %v470
    %v3386 = vunpack.c.h.b16 %v470
    %v3387 = vunpack.c.l.b16 %v471
    %v3388 = vunpack.c.h.b16 %v471
    %v3389 = vunpack.c.l.b16 %v472
    %v3390 = vunpack.c.h.b16 %v472
    %v3391 = vunpack.c.l.b16 %v473
    %v3392 = vunpack.c.h.b16 %v473
    %v3393 = vunpack.c.l.b16 %v474
    %v3394 = vunpack.c.h.b16 %v474
    %v3395 = vunpack.c.l.b16 %v475
    %v3396 = vunpack.c.h.b16 %v475
    %v3397 = vunpack.c.l.b16 %v476
    %v3398 = vunpack.c.h.b16 %v476
    %v3399 = vunpack.c.l.b16 %v477
    %v3400 = vunpack.c.h.b16 %v477
    %v3401 = vunpack.c.l.b16 %v478
    %v3402 = vunpack.c.h.b16 %v478
    %v3403 = vunpack.c.l.b16 %v479
    %v3404 = vunpack.c.h.b16 %v479
    %v3405 = vunpack.c.l.b16 %v480
    %v3406 = vunpack.c.h.b16 %v480
    %v3407 = vunpack.c.l.b16 %v481
    %v3408 = vunpack.c.h.b16 %v481
    %v3409 = vunpack.c.l.b16 %v482
    %v3410 = vunpack.c.h.b16 %v482
    %v3411 = vunpack.c.l.b16 %v483
    %v3412 = vunpack.c.h.b16 %v483
    %v3413 = vunpack.c.l.b16 %v484
    %v3414 = vunpack.c.h.b16 %v484
    %v3415 = vunpack.c.l.b16 %v485
    %v3416 = vunpack.c.h.b16 %v485
    %v3417 = vunpack.c.l.b16 %v486
    %v3418 = vunpack.c.h.b16 %v486
    %v3419 = vunpack.c.l.b16 %v487
    %v3420 = vunpack.c.h.b16 %v487
    %v3421 = vunpack.c.l.b16 %v488
    %v3422 = vunpack.c.h.b16 %v488
    %v3423 = vunpack.c.l.b16 %v489
    %v3424 = vunpack.c.h.b16 %v489
    %v3425 = vunpack.c.l.b16 %v490
    %v3426 = vunpack.c.h.b16 %v490
    %v3427 = vunpack.c.l.b16 %v491
    %v3428 = vunpack.c.h.b16 %v491
    %v3429 = vunpack.c.l.b16 %v492
    %v3430 = vunpack.c.h.b16 %v492
    %v3431 = vunpack.c.l.b16 %v493
    %v3432 = vunpack.c.h.b16 %v493
    %v3433 = vunpack.c.l.b16 %v494
    %v3434 = vunpack.c.h.b16 %v494
    %v3435 = vunpack.c.l.b16 %v495
    %v3436 = vunpack.c.h.b16 %v495
    %v3437 = vunpack.c.l.b16 %v496
    %v3438 = vunpack.c.h.b16 %v496
    %v3439 = vunpack.c.l.b16 %v497
    %v3440 = vunpack.c.h.b16 %v497
    %v3441 = vunpack.c.l.b16 %v498
    %v3442 = vunpack.c.h.b16 %v498
    %v3443 = vunpack.c.l.b16 %v499
    %v3444 = vunpack.c.h.b16 %v499
    %v3445 = vunpack.c.l.b16 %v500
    %v3446 = vunpack.c.h.b16 %v500
    %v3447 = vunpack.c.l.b16 %v501
    %v3448 = vunpack.c.h.b16 %v501
    %v3449 = vunpack.c.l.b16 %v502
    %v3450 = vunpack.c.h.b16 %v502
    %v3451 = vunpack.c.l.b16 %v503
    %v3452 = vunpack.c.h.b16 %v503
    %v3453 = vunpack.c.l.b16 %v504
    %v3454 = vunpack.c.h.b16 %v504
    %v3455 = vunpack.c.l.b16 %v505
    %v3456 = vunpack.c.h.b16 %v505
    %v3457 = vunpack.c.l.b16 %v506
    %v3458 = vunpack.c.h.b16 %v506
    %v3459 = vunpack.c.l.b16 %v507
    %v3460 = vunpack.c.h.b16 %v507
    %v3461 = vunpack.c.l.b16 %v508
    %v3462 = vunpack.c.h.b16 %v508
    %v3463 = vunpack.c.l.b16 %v509
    %v3464 = vunpack.c.h.b16 %v509
    %v3465 = vunpack.c.l.b16 %v510
    %v3466 = vunpack.c.h.b16 %v510
    %v3467 = vunpack.c.l.b16 %v511
    %v3468 = vunpack.c.h.b16 %v511
    %v3469 = vunpack.c.l.b16 %v512
    %v3470 = vunpack.c.h.b16 %v512
    %v3471 = vunpack.c.l.b16 %v513
    %v3472 = vunpack.c.h.b16 %v513
    %v3473 = vunpack.c.l.b16 %v514
    %v3474 = vunpack.c.h.b16 %v514
    %v3475 = vunpack.c.l.b16 %v515
    %v3476 = vunpack.c.h.b16 %v515
    %v3477 = vpack.c.b16 %v2907, %v2901
    %v3478 = vpack.c.b16 %v2908, %v2902
    %v3479 = vpack.c.b16 %v2909, %v2903
    %v3480 = vpack.c.b16 %v2910, %v2904
    %v3481 = vpack.c.b16 %v2911, %v2905
    %v3482 = vpack.c.b16 %v2912, %v2906
    %v3483 = vpack.c.b16 %v2919, %v2913
    %v3484 = vpack.c.b16 %v2920, %v2914
    %v3485 = vpack.c.b16 %v2921, %v2915
    %v3486 = vpack.c.b16 %v2922, %v2916
    %v3487 = vpack.c.b16 %v2923, %v2917
    %v3488 = vpack.c.b16 %v2924, %v2918
    %v3489 = vpack.c.b16 %v2931, %v2925
    %v3490 = vpack.c.b16 %v2932, %v2926
    %v3491 = vpack.c.b16 %v2933, %v2927
    %v3492 = vpack.c.b16 %v2934, %v2928
    %v3493 = vpack.c.b16 %v2935, %v2929
    %v3494 = vpack.c.b16 %v2936, %v2930
    %v3495 = vpack.c.b16 %v2943, %v2937
    %v3496 = vpack.c.b16 %v2944, %v2938
    %v3497 = vpack.c.b16 %v2945, %v2939
    %v3498 = vpack.c.b16 %v2946, %v2940
    %v3499 = vpack.c.b16 %v2947, %v2941
    %v3500 = vpack.c.b16 %v2948, %v2942
    %v3501 = vpack.c.b16 %v2955, %v2949
    %v3502 = vpack.c.b16 %v2956, %v2950
    %v3503 = vpack.c.b16 %v2957, %v2951
    %v3504 = vpack.c.b16 %v2958, %v2952
    %v3505 = vpack.c.b16 %v2959, %v2953
    %v3506 = vpack.c.b16 %v2960, %v2954
    %v3507 = vpack.c.b16 %v2967, %v2961
    %v3508 = vpack.c.b16 %v2968, %v2962
    %v3509 = vpack.c.b16 %v2969, %v2963
    %v3510 = vpack.c.b16 %v2970, %v2964
    %v3511 = vpack.c.b16 %v2971, %v2965
    %v3512 = vpack.c.b16 %v2972, %v2966
    %v3513 = vpack.c.b16 %v2979, %v2973
    %v3514 = vpack.c.b16 %v2980, %v2974
    %v3515 = vpack.c.b16 %v2981, %v2975
    %v3516 = vpack.c.b16 %v2982, %v2976
    %v3517 = vpack.c.b16 %v2983, %v2977
    %v3518 = vpack.c.b16 %v2984, %v2978
    %v3519 = vpack.c.b16 %v2991, %v2985
    %v3520 = vpack.c.b16 %v2992, %v2986
    %v3521 = vpack.c.b16 %v2993, %v2987
    %v3522 = vpack.c.b16 %v2994, %v2988
    %v3523 = vpack.c.b16 %v2995, %v2989
    %v3524 = vpack.c.b16 %v2996, %v2990
    %v3525 = vpack.c.b16 %v3003, %v2997
    %v3526 = vpack.c.b16 %v3004, %v2998
    %v3527 = vpack.c.b16 %v3005, %v2999
    %v3528 = vpack.c.b16 %v3006, %v3000
    %v3529 = vpack.c.b16 %v3007, %v3001
    %v3530 = vpack.c.b16 %v3008, %v3002
    %v3531 = vpack.c.b16 %v3015, %v3009
    %v3532 = vpack.c.b16 %v3016, %v3010
    %v3533 = vpack.c.b16 %v3017, %v3011
    %v3534 = vpack.c.b16 %v3018, %v3012
    %v3535 = vpack.c.b16 %v3019, %v3013
    %v3536 = vpack.c.b16 %v3020, %v3014
    %v3537 = vpack.c.b16 %v3027, %v3021
    %v3538 = vpack.c.b16 %v3028, %v3022
    %v3539 = vpack.c.b16 %v3029, %v3023
    %v3540 = vpack.c.b16 %v3030, %v3024
    %v3541 = vpack.c.b16 %v3031, %v3025
    %v3542 = vpack.c.b16 %v3032, %v3026
    %v3543 = vpack.c.b16 %v3039, %v3033
    %v3544 = vpack.c.b16 %v3040, %v3034
    %v3545 = vpack.c.b16 %v3041, %v3035
    %v3546 = vpack.c.b16 %v3042, %v3036
    %v3547 = vpack.c.b16 %v3043, %v3037
    %v3548 = vpack.c.b16 %v3044, %v3038
    %v3549 = vpack.c.b16 %v3051, %v3045
    %v3550 = vpack.c.b16 %v3052, %v3046
    %v3551 = vpack.c.b16 %v3053, %v3047
    %v3552 = vpack.c.b16 %v3054, %v3048
    %v3553 = vpack.c.b16 %v3055, %v3049
    %v3554 = vpack.c.b16 %v3056, %v3050
    %v3555 = vpack.c.b16 %v3063, %v3057
    %v3556 = vpack.c.b16 %v3064, %v3058
    %v3557 = vpack.c.b16 %v3065, %v3059
    %v3558 = vpack.c.b16 %v3066, %v3060
    %v3559 = vpack.c.b16 %v3067, %v3061
    %v3560 = vpack.c.b16 %v3068, %v3062
    %v3561 = vpack.c.b16 %v3075, %v3069
    %v3562 = vpack.c.b16 %v3076, %v3070
    %v3563 = vpack.c.b16 %v3077, %v3071
    %v3564 = vpack.c.b16 %v3078, %v3072
    %v3565 = vpack.c.b16 %v3079, %v3073
    %v3566 = vpack.c.b16 %v3080, %v3074
    %v3567 = vpack.c.b16 %v3087, %v3081
    %v3568 = vpack.c.b16 %v3088, %v3082
    %v3569 = vpack.c.b16 %v3089, %v3083
    %v3570 = vpack.c.b16 %v3090, %v3084
    %v3571 = vpack.c.b16 %v3091, %v3085
    %v3572 = vpack.c.b16 %v3092, %v3086
    %v3573 = vpack.c.b16 %v3099, %v3093
    %v3574 = vpack.c.b16 %v3100, %v3094
    %v3575 = vpack.c.b16 %v3101, %v3095
    %v3576 = vpack.c.b16 %v3102, %v3096
    %v3577 = vpack.c.b16 %v3103, %v3097
    %v3578 = vpack.c.b16 %v3104, %v3098
    %v3579 = vpack.c.b16 %v3111, %v3105
    %v3580 = vpack.c.b16 %v3112, %v3106
    %v3581 = vpack.c.b16 %v3113, %v3107
    %v3582 = vpack.c.b16 %v3114, %v3108
    %v3583 = vpack.c.b16 %v3115, %v3109
    %v3584 = vpack.c.b16 %v3116, %v3110
    %v3585 = vpack.c.b16 %v3123, %v3117
    %v3586 = vpack.c.b16 %v3124, %v3118
    %v3587 = vpack.c.b16 %v3125, %v3119
    %v3588 = vpack.c.b16 %v3126, %v3120
    %v3589 = vpack.c.b16 %v3127, %v3121
    %v3590 = vpack.c.b16 %v3128, %v3122
    %v3591 = vpack.c.b16 %v3135, %v3129
    %v3592 = vpack.c.b16 %v3136, %v3130
    %v3593 = vpack.c.b16 %v3137, %v3131
    %v3594 = vpack.c.b16 %v3138, %v3132
    %v3595 = vpack.c.b16 %v3139, %v3133
    %v3596 = vpack.c.b16 %v3140, %v3134
    %v3597 = vpack.c.b16 %v3147, %v3141
    %v3598 = vpack.c.b16 %v3148, %v3142
    %v3599 = vpack.c.b16 %v3149, %v3143
    %v3600 = vpack.c.b16 %v3150, %v3144
    %v3601 = vpack.c.b16 %v3151, %v3145
    %v3602 = vpack.c.b16 %v3152, %v3146
    %v3603 = vpack.c.b16 %v3159, %v3153
    %v3604 = vpack.c.b16 %v3160, %v3154
    %v3605 = vpack.c.b16 %v3161, %v3155
    %v3606 = vpack.c.b16 %v3162, %v3156
    %v3607 = vpack.c.b16 %v3163, %v3157
    %v3608 = vpack.c.b16 %v3164, %v3158
    %v3609 = vpack.c.b16 %v3171, %v3165
    %v3610 = vpack.c.b16 %v3172, %v3166
    %v3611 = vpack.c.b16 %v3173, %v3167
    %v3612 = vpack.c.b16 %v3174, %v3168
    %v3613 = vpack.c.b16 %v3175, %v3169
    %v3614 = vpack.c.b16 %v3176, %v3170
    %v3615 = vpack.c.b16 %v3183, %v3177
    %v3616 = vpack.c.b16 %v3184, %v3178
    %v3617 = vpack.c.b16 %v3185, %v3179
    %v3618 = vpack.c.b16 %v3186, %v3180
    %v3619 = vpack.c.b16 %v3187, %v3181
    %v3620 = vpack.c.b16 %v3188, %v3182
    %v3621 = vpack.c.b16 %v3195, %v3189
    %v3622 = vpack.c.b16 %v3196, %v3190
    %v3623 = vpack.c.b16 %v3197, %v3191
    %v3624 = vpack.c.b16 %v3198, %v3192
    %v3625 = vpack.c.b16 %v3199, %v3193
    %v3626 = vpack.c.b16 %v3200, %v3194
    %v3627 = vpack.c.b16 %v3207, %v3201
    %v3628 = vpack.c.b16 %v3208, %v3202
    %v3629 = vpack.c.b16 %v3209, %v3203
    %v3630 = vpack.c.b16 %v3210, %v3204
    %v3631 = vpack.c.b16 %v3211, %v3205
    %v3632 = vpack.c.b16 %v3212, %v3206
    %v3633 = vpack.c.b16 %v3219, %v3213
    %v3634 = vpack.c.b16 %v3220, %v3214
    %v3635 = vpack.c.b16 %v3221, %v3215
    %v3636 = vpack.c.b16 %v3222, %v3216
    %v3637 = vpack.c.b16 %v3223, %v3217
    %v3638 = vpack.c.b16 %v3224, %v3218
    %v3639 = vpack.c.b16 %v3231, %v3225
    %v3640 = vpack.c.b16 %v3232, %v3226
    %v3641 = vpack.c.b16 %v3233, %v3227
    %v3642 = vpack.c.b16 %v3234, %v3228
    %v3643 = vpack.c.b16 %v3235, %v3229
    %v3644 = vpack.c.b16 %v3236, %v3230
    %v3645 = vpack.c.b16 %v3243, %v3237
    %v3646 = vpack.c.b16 %v3244, %v3238
    %v3647 = vpack.c.b16 %v3245, %v3239
    %v3648 = vpack.c.b16 %v3246, %v3240
    %v3649 = vpack.c.b16 %v3247, %v3241
    %v3650 = vpack.c.b16 %v3248, %v3242
    %v3651 = vpack.c.b16 %v3255, %v3249
    %v3652 = vpack.c.b16 %v3256, %v3250
    %v3653 = vpack.c.b16 %v3257, %v3251
    %v3654 = vpack.c.b16 %v3258, %v3252
    %v3655 = vpack.c.b16 %v3259, %v3253
    %v3656 = vpack.c.b16 %v3260, %v3254
    %v3657 = vpack.c.b16 %v3267, %v3261
    %v3658 = vpack.c.b16 %v3268, %v3262
    %v3659 = vpack.c.b16 %v3269, %v3263
    %v3660 = vpack.c.b16 %v3270, %v3264
    %v3661 = vpack.c.b16 %v3271, %v3265
    %v3662 = vpack.c.b16 %v3272, %v3266
    %v3663 = vpack.c.b16 %v3279, %v3273
    %v3664 = vpack.c.b16 %v3280, %v3274
    %v3665 = vpack.c.b16 %v3281, %v3275
    %v3666 = vpack.c.b16 %v3282, %v3276
    %v3667 = vpack.c.b16 %v3283, %v3277
    %v3668 = vpack.c.b16 %v3284, %v3278
    %v3669 = vpack.c.b16 %v3291, %v3285
    %v3670 = vpack.c.b16 %v3292, %v3286
    %v3671 = vpack.c.b16 %v3293, %v3287
    %v3672 = vpack.c.b16 %v3294, %v3288
    %v3673 = vpack.c.b16 %v3295, %v3289
    %v3674 = vpack.c.b16 %v3296, %v3290
    %v3675 = vpack.c.b16 %v3303, %v3297
    %v3676 = vpack.c.b16 %v3304, %v3298
    %v3677 = vpack.c.b16 %v3305, %v3299
    %v3678 = vpack.c.b16 %v3306, %v3300
    %v3679 = vpack.c.b16 %v3307, %v3301
    %v3680 = vpack.c.b16 %v3308, %v3302
    %v3681 = vpack.c.b16 %v3315, %v3309
    %v3682 = vpack.c.b16 %v3316, %v3310
    %v3683 = vpack.c.b16 %v3317, %v3311
    %v3684 = vpack.c.b16 %v3318, %v3312
    %v3685 = vpack.c.b16 %v3319, %v3313
    %v3686 = vpack.c.b16 %v3320, %v3314
    %v3687 = vpack.c.b16 %v3327, %v3321
    %v3688 = vpack.c.b16 %v3328, %v3322
    %v3689 = vpack.c.b16 %v3329, %v3323
    %v3690 = vpack.c.b16 %v3330, %v3324
    %v3691 = vpack.c.b16 %v3331, %v3325
    %v3692 = vpack.c.b16 %v3332, %v3326
    %v3693 = vpack.c.b16 %v3339, %v3333
    %v3694 = vpack.c.b16 %v3340, %v3334
    %v3695 = vpack.c.b16 %v3341, %v3335
    %v3696 = vpack.c.b16 %v3342, %v3336
    %v3697 = vpack.c.b16 %v3343, %v3337
    %v3698 = vpack.c.b16 %v3344, %v3338
    %v3699 = vpack.c.b16 %v3351, %v3345
    %v3700 = vpack.c.b16 %v3352, %v3346
    %v3701 = vpack.c.b16 %v3353, %v3347
    %v3702 = vpack.c.b16 %v3354, %v3348
    %v3703 = vpack.c.b16 %v3355, %v3349
    %v3704 = vpack.c.b16 %v3356, %v3350
    %v3705 = vpack.c.b16 %v3363, %v3357
    %v3706 = vpack.c.b16 %v3364, %v3358
    %v3707 = vpack.c.b16 %v3365, %v3359
    %v3708 = vpack.c.b16 %v3366, %v3360
    %v3709 = vpack.c.b16 %v3367, %v3361
    %v3710 = vpack.c.b16 %v3368, %v3362
    %v3711 = vpack.c.b16 %v3375, %v3369
    %v3712 = vpack.c.b16 %v3376, %v3370
    %v3713 = vpack.c.b16 %v3377, %v3371
    %v3714 = vpack.c.b16 %v3378, %v3372
    %v3715 = vpack.c.b16 %v3379, %v3373
    %v3716 = vpack.c.b16 %v3380, %v3374
    %v3717 = vpack.c.b16 %v3387, %v3381
    %v3718 = vpack.c.b16 %v3388, %v3382
    %v3719 = vpack.c.b16 %v3389, %v3383
    %v3720 = vpack.c.b16 %v3390, %v3384
    %v3721 = vpack.c.b16 %v3391, %v3385
    %v3722 = vpack.c.b16 %v3392, %v3386
    %v3723 = vpack.c.b16 %v3399, %v3393
    %v3724 = vpack.c.b16 %v3400, %v3394
    %v3725 = vpack.c.b16 %v3401, %v3395
    %v3726 = vpack.c.b16 %v3402, %v3396
    %v3727 = vpack.c.b16 %v3403, %v3397
    %v3728 = vpack.c.b16 %v3404, %v3398
    %v3729 = vpack.c.b16 %v3411, %v3405
    %v3730 = vpack.c.b16 %v3412, %v3406
    %v3731 = vpack.c.b16 %v3413, %v3407
    %v3732 = vpack.c.b16 %v3414, %v3408
    %v3733 = vpack.c.b16 %v3415, %v3409
    %v3734 = vpack.c.b16 %v3416, %v3410
    %v3735 = vpack.c.b16 %v3423, %v3417
    %v3736 = vpack.c.b16 %v3424, %v3418
    %v3737 = vpack.c.b16 %v3425, %v3419
    %v3738 = vpack.c.b16 %v3426, %v3420
    %v3739 = vpack.c.b16 %v3427, %v3421
    %v3740 = vpack.c.b16 %v3428, %v3422
    %v3741 = vpack.c.b16 %v3435, %v3429
    %v3742 = vpack.c.b16 %v3436, %v3430
    %v3743 = vpack.c.b16 %v3437, %v3431
    %v3744 = vpack.c.b16 %v3438, %v3432
    %v3745 = vpack.c.b16 %v3439, %v3433
    %v3746 = vpack.c.b16 %v3440, %v3434
    %v3747 = vpack.c.b16 %v3447, %v3441
    %v3748 = vpack.c.b16 %v3448, %v3442
    %v3749 = vpack.c.b16 %v3449, %v3443
    %v3750 = vpack.c.b16 %v3450, %v3444
    %v3751 = vpack.c.b16 %v3451, %v3445
    %v3752 = vpack.c.b16 %v3452, %v3446
    %v3753 = vpack.c.b16 %v3459, %v3453
    %v3754 = vpack.c.b16 %v3460, %v3454
    %v3755 = vpack.c.b16 %v3461, %v3455
    %v3756 = vpack.c.b16 %v3462, %v3456
    %v3757 = vpack.c.b16 %v3463, %v3457
    %v3758 = vpack.c.b16 %v3464, %v3458
    %v3759 = vpack.c.b16 %v3471, %v3465
    %v3760 = vpack.c.b16 %v3472, %v3466
    %v3761 = vpack.c.b16 %v3473, %v3467
    %v3762 = vpack.c.b16 %v3474, %v3468
    %v3763 = vpack.c.b16 %v3475, %v3469
    %v3764 = vpack.c.b16 %v3476, %v3470
    %4053 = vmatprep.subr.bf16.mxu0 %v3520
    %4054 = vmatpush1.bf16.msra.mxu0 %v3519
    %4055 = vmatprep.subr.bf16.mxu0 %v3514
    %4056 = vmatpush1.bf16.msra.mxu0 %v3513
    %4057 = vmatprep.subr.bf16.mxu0 %v3508
    %4058 = vmatpush1.bf16.msra.mxu0 %v3507
    %4059 = vmatprep.subr.bf16.mxu0 %v3502
    %4060 = vmatpush1.bf16.msra.mxu0 %v3501
    %4061 = vmatprep.subr.bf16.mxu0 %v3496
    %4062 = vmatpush1.bf16.msra.mxu0 %v3495
    %4063 = vmatprep.subr.bf16.mxu0 %v3490
    %4064 = vmatpush1.bf16.msra.mxu0 %v3489
    %4065 = vmatprep.subr.bf16.mxu0 %v3484
    %4066 = vmatpush1.bf16.msra.mxu0 %v3483
    %4067 = vmatprep.subr.bf16.mxu0 %v3478
    %4068 = vmatpush1.bf16.msra.mxu0 %v3477
    %4069 = vmatprep.subr.bf16.mxu0 %v3568
    %4070 = vmatpush2.bf16.msra.mxu0 %v3567
    %4071 = vmatprep.subr.bf16.mxu0 %v3562
    %4072 = vmatpush2.bf16.msra.mxu0 %v3561
    %4073 = vmatprep.subr.bf16.mxu0 %v3556
    %4074 = vmatpush2.bf16.msra.mxu0 %v3555
    %4075 = vmatprep.subr.bf16.mxu0 %v3550
    %4076 = vmatpush2.bf16.msra.mxu0 %v3549
    %4077 = vmatprep.subr.bf16.mxu0 %v3544
    %4078 = vmatpush2.bf16.msra.mxu0 %v3543
    %4079 = vmatprep.subr.bf16.mxu0 %v3538
    %4080 = vmatpush2.bf16.msra.mxu0 %v3537
    %4081 = vmatprep.subr.bf16.mxu0 %v3532
    %4082 = vmatpush2.bf16.msra.mxu0 %v3531
    %4083 = vmatprep.subr.bf16.mxu0 %v3526
    %4084 = vmatpush2.bf16.msra.mxu0 %v3525
    %4085 = vmatprep.mubr.bf16.mxu0 %v182
    %4086 = vmatmul.mubr.bf16.gmra.mxu0 %v181
    %v4087 = vpop.f32.mrf.mxu0
    %v4088 = vadd.f32 %v2361, %v4087
    %v4089 = vpop.f32.mrf.mxu0
    %v4090 = vadd.f32 %v2363, %v4089
    %v4091 = vpop.f32.mrf.mxu0
    %v4092 = vpop.f32.mrf.mxu0
    %4093 = vdwg.mxu0
    %4094 = vmatprep.subr.bf16.mxu0 %v3616
    %4095 = vmatpush1.bf16.msra.mxu0 %v3615
    %4096 = vmatprep.subr.bf16.mxu0 %v3610
    %4097 = vmatpush1.bf16.msra.mxu0 %v3609
    %4098 = vmatprep.subr.bf16.mxu0 %v3604
    %4099 = vmatpush1.bf16.msra.mxu0 %v3603
    %4100 = vmatprep.subr.bf16.mxu0 %v3598
    %4101 = vmatpush1.bf16.msra.mxu0 %v3597
    %4102 = vmatprep.subr.bf16.mxu0 %v3592
    %4103 = vmatpush1.bf16.msra.mxu0 %v3591
    %4104 = vmatprep.subr.bf16.mxu0 %v3586
    %4105 = vmatpush1.bf16.msra.mxu0 %v3585
    %4106 = vmatprep.subr.bf16.mxu0 %v3580
    %4107 = vmatpush1.bf16.msra.mxu0 %v3579
    %4108 = vmatprep.subr.bf16.mxu0 %v3574
    %4109 = vmatpush1.bf16.msra.mxu0 %v3573
    %4110 = vmatprep.subr.bf16.mxu0 %v3664
    %4111 = vmatpush2.bf16.msra.mxu0 %v3663
    %4112 = vmatprep.subr.bf16.mxu0 %v3658
    %4113 = vmatpush2.bf16.msra.mxu0 %v3657
    %4114 = vmatprep.subr.bf16.mxu0 %v3652
    %4115 = vmatpush2.bf16.msra.mxu0 %v3651
    %4116 = vmatprep.subr.bf16.mxu0 %v3646
    %4117 = vmatpush2.bf16.msra.mxu0 %v3645
    %4118 = vmatprep.subr.bf16.mxu0 %v3640
    %4119 = vmatpush2.bf16.msra.mxu0 %v3639
    %4120 = vmatprep.subr.bf16.mxu0 %v3634
    %4121 = vmatpush2.bf16.msra.mxu0 %v3633
    %4122 = vmatprep.subr.bf16.mxu0 %v3628
    %4123 = vmatpush2.bf16.msra.mxu0 %v3627
    %4124 = vmatprep.subr.bf16.mxu0 %v3622
    %4125 = vmatpush2.bf16.msra.mxu0 %v3621
    %4126 = vmatprep.mubr.bf16.mxu0 %v184
    %4127 = vmatmul.mubr.bf16.gmra.mxu0 %v183
    %v4128 = vpop.f32.mrf.mxu0
    %v4129 = vadd.f32 %v4088, %v4128
    %v4130 = vpop.f32.mrf.mxu0
    %v4131 = vadd.f32 %v4090, %v4130
    %v4132 = vpop.f32.mrf.mxu0
    %v4133 = vpop.f32.mrf.mxu0
    %4134 = vdwg.mxu0
    %4135 = vmatprep.subr.bf16.mxu0 %v3712
    %4136 = vmatpush1.bf16.msra.mxu0 %v3711
    %4137 = vmatprep.subr.bf16.mxu0 %v3706
    %4138 = vmatpush1.bf16.msra.mxu0 %v3705
    %4139 = vmatprep.subr.bf16.mxu0 %v3700
    %4140 = vmatpush1.bf16.msra.mxu0 %v3699
    %4141 = vmatprep.subr.bf16.mxu0 %v3694
    %4142 = vmatpush1.bf16.msra.mxu0 %v3693
    %4143 = vmatprep.subr.bf16.mxu0 %v3688
    %4144 = vmatpush1.bf16.msra.mxu0 %v3687
    %4145 = vmatprep.subr.bf16.mxu0 %v3682
    %4146 = vmatpush1.bf16.msra.mxu0 %v3681
    %4147 = vmatprep.subr.bf16.mxu0 %v3676
    %4148 = vmatpush1.bf16.msra.mxu0 %v3675
    %4149 = vmatprep.subr.bf16.mxu0 %v3670
    %4150 = vmatpush1.bf16.msra.mxu0 %v3669
    %4151 = vmatprep.subr.bf16.mxu0 %v3760
    %4152 = vmatpush2.bf16.msra.mxu0 %v3759
    %4153 = vmatprep.subr.bf16.mxu0 %v3754
    %4154 = vmatpush2.bf16.msra.mxu0 %v3753
    %4155 = vmatprep.subr.bf16.mxu0 %v3748
    %4156 = vmatpush2.bf16.msra.mxu0 %v3747
    %4157 = vmatprep.subr.bf16.mxu0 %v3742
    %4158 = vmatpush2.bf16.msra.mxu0 %v3741
    %4159 = vmatprep.subr.bf16.mxu0 %v3736
    %4160 = vmatpush2.bf16.msra.mxu0 %v3735
    %4161 = vmatprep.subr.bf16.mxu0 %v3730
    %4162 = vmatpush2.bf16.msra.mxu0 %v3729
    %4163 = vmatprep.subr.bf16.mxu0 %v3724
    %4164 = vmatpush2.bf16.msra.mxu0 %v3723
    %4165 = vmatprep.subr.bf16.mxu0 %v3718
    %4166 = vmatpush2.bf16.msra.mxu0 %v3717
    %4167 = vmatprep.mubr.bf16.mxu0 %v186
    %4168 = vmatmul.mubr.bf16.gmra.mxu0 %v185
    %v4169 = vpop.f32.mrf.mxu0
    %v4170 = vadd.f32 %v4129, %v4169
    %v4171 = vpop.f32.mrf.mxu0
    %v4172 = vadd.f32 %v4131, %v4171
    %v4173 = vpop.f32.mrf.mxu0
    %v4174 = vpop.f32.mrf.mxu0
    %4175 = vdwg.mxu0
    %4176 = vmatprep.subr.bf16.mxu0 %v3522
    %4177 = vmatpush1.bf16.msra.mxu0 %v3521
    %4178 = vmatprep.subr.bf16.mxu0 %v3516
    %4179 = vmatpush1.bf16.msra.mxu0 %v3515
    %4180 = vmatprep.subr.bf16.mxu0 %v3510
    %4181 = vmatpush1.bf16.msra.mxu0 %v3509
    %4182 = vmatprep.subr.bf16.mxu0 %v3504
    %4183 = vmatpush1.bf16.msra.mxu0 %v3503
    %4184 = vmatprep.subr.bf16.mxu0 %v3498
    %4185 = vmatpush1.bf16.msra.mxu0 %v3497
    %4186 = vmatprep.subr.bf16.mxu0 %v3492
    %4187 = vmatpush1.bf16.msra.mxu0 %v3491
    %4188 = vmatprep.subr.bf16.mxu0 %v3486
    %4189 = vmatpush1.bf16.msra.mxu0 %v3485
    %4190 = vmatprep.subr.bf16.mxu0 %v3480
    %4191 = vmatpush1.bf16.msra.mxu0 %v3479
    %4192 = vmatprep.subr.bf16.mxu0 %v3570
    %4193 = vmatpush2.bf16.msra.mxu0 %v3569
    %4194 = vmatprep.subr.bf16.mxu0 %v3564
    %4195 = vmatpush2.bf16.msra.mxu0 %v3563
    %4196 = vmatprep.subr.bf16.mxu0 %v3558
    %4197 = vmatpush2.bf16.msra.mxu0 %v3557
    %4198 = vmatprep.subr.bf16.mxu0 %v3552
    %4199 = vmatpush2.bf16.msra.mxu0 %v3551
    %4200 = vmatprep.subr.bf16.mxu0 %v3546
    %4201 = vmatpush2.bf16.msra.mxu0 %v3545
    %4202 = vmatprep.subr.bf16.mxu0 %v3540
    %4203 = vmatpush2.bf16.msra.mxu0 %v3539
    %4204 = vmatprep.subr.bf16.mxu0 %v3534
    %4205 = vmatpush2.bf16.msra.mxu0 %v3533
    %4206 = vmatprep.subr.bf16.mxu0 %v3528
    %4207 = vmatpush2.bf16.msra.mxu0 %v3527
    %4208 = vmatprep.mubr.bf16.mxu0 %v182
    %4209 = vmatmul.mubr.bf16.gmra.mxu0 %v181
    %v4210 = vpop.f32.mrf.mxu0
    %v4211 = vadd.f32 %v2484, %v4210
    %v4212 = vpop.f32.mrf.mxu0
    %v4213 = vadd.f32 %v2486, %v4212
    %v4214 = vpop.f32.mrf.mxu0
    %v4215 = vpop.f32.mrf.mxu0
    %4216 = vdwg.mxu0
    %4217 = vmatprep.subr.bf16.mxu0 %v3618
    %4218 = vmatpush1.bf16.msra.mxu0 %v3617
    %4219 = vmatprep.subr.bf16.mxu0 %v3612
    %4220 = vmatpush1.bf16.msra.mxu0 %v3611
    %4221 = vmatprep.subr.bf16.mxu0 %v3606
    %4222 = vmatpush1.bf16.msra.mxu0 %v3605
    %4223 = vmatprep.subr.bf16.mxu0 %v3600
    %4224 = vmatpush1.bf16.msra.mxu0 %v3599
    %4225 = vmatprep.subr.bf16.mxu0 %v3594
    %4226 = vmatpush1.bf16.msra.mxu0 %v3593
    %4227 = vmatprep.subr.bf16.mxu0 %v3588
    %4228 = vmatpush1.bf16.msra.mxu0 %v3587
    %4229 = vmatprep.subr.bf16.mxu0 %v3582
    %4230 = vmatpush1.bf16.msra.mxu0 %v3581
    %4231 = vmatprep.subr.bf16.mxu0 %v3576
    %4232 = vmatpush1.bf16.msra.mxu0 %v3575
    %4233 = vmatprep.subr.bf16.mxu0 %v3666
    %4234 = vmatpush2.bf16.msra.mxu0 %v3665
    %4235 = vmatprep.subr.bf16.mxu0 %v3660
    %4236 = vmatpush2.bf16.msra.mxu0 %v3659
    %4237 = vmatprep.subr.bf16.mxu0 %v3654
    %4238 = vmatpush2.bf16.msra.mxu0 %v3653
    %4239 = vmatprep.subr.bf16.mxu0 %v3648
    %4240 = vmatpush2.bf16.msra.mxu0 %v3647
    %4241 = vmatprep.subr.bf16.mxu0 %v3642
    %4242 = vmatpush2.bf16.msra.mxu0 %v3641
    %4243 = vmatprep.subr.bf16.mxu0 %v3636
    %4244 = vmatpush2.bf16.msra.mxu0 %v3635
    %4245 = vmatprep.subr.bf16.mxu0 %v3630
    %4246 = vmatpush2.bf16.msra.mxu0 %v3629
    %4247 = vmatprep.subr.bf16.mxu0 %v3624
    %4248 = vmatpush2.bf16.msra.mxu0 %v3623
    %4249 = vmatprep.mubr.bf16.mxu0 %v184
    %4250 = vmatmul.mubr.bf16.gmra.mxu0 %v183
    %v4251 = vpop.f32.mrf.mxu0
    %v4252 = vadd.f32 %v4211, %v4251
    %v4253 = vpop.f32.mrf.mxu0
    %v4254 = vadd.f32 %v4213, %v4253
    %v4255 = vpop.f32.mrf.mxu0
    %v4256 = vpop.f32.mrf.mxu0
    %4257 = vdwg.mxu0
    %4258 = vmatprep.subr.bf16.mxu0 %v3714
    %4259 = vmatpush1.bf16.msra.mxu0 %v3713
    %4260 = vmatprep.subr.bf16.mxu0 %v3708
    %4261 = vmatpush1.bf16.msra.mxu0 %v3707
    %4262 = vmatprep.subr.bf16.mxu0 %v3702
    %4263 = vmatpush1.bf16.msra.mxu0 %v3701
    %4264 = vmatprep.subr.bf16.mxu0 %v3696
    %4265 = vmatpush1.bf16.msra.mxu0 %v3695
    %4266 = vmatprep.subr.bf16.mxu0 %v3690
    %4267 = vmatpush1.bf16.msra.mxu0 %v3689
    %4268 = vmatprep.subr.bf16.mxu0 %v3684
    %4269 = vmatpush1.bf16.msra.mxu0 %v3683
    %4270 = vmatprep.subr.bf16.mxu0 %v3678
    %4271 = vmatpush1.bf16.msra.mxu0 %v3677
    %4272 = vmatprep.subr.bf16.mxu0 %v3672
    %4273 = vmatpush1.bf16.msra.mxu0 %v3671
    %4274 = vmatprep.subr.bf16.mxu0 %v3762
    %4275 = vmatpush2.bf16.msra.mxu0 %v3761
    %4276 = vmatprep.subr.bf16.mxu0 %v3756
    %4277 = vmatpush2.bf16.msra.mxu0 %v3755
    %4278 = vmatprep.subr.bf16.mxu0 %v3750
    %4279 = vmatpush2.bf16.msra.mxu0 %v3749
    %4280 = vmatprep.subr.bf16.mxu0 %v3744
    %4281 = vmatpush2.bf16.msra.mxu0 %v3743
    %4282 = vmatprep.subr.bf16.mxu0 %v3738
    %4283 = vmatpush2.bf16.msra.mxu0 %v3737
    %4284 = vmatprep.subr.bf16.mxu0 %v3732
    %4285 = vmatpush2.bf16.msra.mxu0 %v3731
    %4286 = vmatprep.subr.bf16.mxu0 %v3726
    %4287 = vmatpush2.bf16.msra.mxu0 %v3725
    %4288 = vmatprep.subr.bf16.mxu0 %v3720
    %4289 = vmatpush2.bf16.msra.mxu0 %v3719
    %4290 = vmatprep.mubr.bf16.mxu0 %v186
    %4291 = vmatmul.mubr.bf16.gmra.mxu0 %v185
    %v4292 = vpop.f32.mrf.mxu0
    %v4293 = vadd.f32 %v4252, %v4292
    %v4294 = vpop.f32.mrf.mxu0
    %v4295 = vadd.f32 %v4254, %v4294
    %v4296 = vpop.f32.mrf.mxu0
    %v4297 = vpop.f32.mrf.mxu0
    %4298 = vdwg.mxu0
    %4299 = vmatprep.subr.bf16.mxu0 %v3524
    %4300 = vmatpush1.bf16.msra.mxu0 %v3523
    %4301 = vmatprep.subr.bf16.mxu0 %v3518
    %4302 = vmatpush1.bf16.msra.mxu0 %v3517
    %4303 = vmatprep.subr.bf16.mxu0 %v3512
    %4304 = vmatpush1.bf16.msra.mxu0 %v3511
    %4305 = vmatprep.subr.bf16.mxu0 %v3506
    %4306 = vmatpush1.bf16.msra.mxu0 %v3505
    %4307 = vmatprep.subr.bf16.mxu0 %v3500
    %4308 = vmatpush1.bf16.msra.mxu0 %v3499
    %4309 = vmatprep.subr.bf16.mxu0 %v3494
    %4310 = vmatpush1.bf16.msra.mxu0 %v3493
    %4311 = vmatprep.subr.bf16.mxu0 %v3488
    %4312 = vmatpush1.bf16.msra.mxu0 %v3487
    %4313 = vmatprep.subr.bf16.mxu0 %v3482
    %4314 = vmatpush1.bf16.msra.mxu0 %v3481
    %4315 = vmatprep.subr.bf16.mxu0 %v3572
    %4316 = vmatpush2.bf16.msra.mxu0 %v3571
    %4317 = vmatprep.subr.bf16.mxu0 %v3566
    %4318 = vmatpush2.bf16.msra.mxu0 %v3565
    %4319 = vmatprep.subr.bf16.mxu0 %v3560
    %4320 = vmatpush2.bf16.msra.mxu0 %v3559
    %4321 = vmatprep.subr.bf16.mxu0 %v3554
    %4322 = vmatpush2.bf16.msra.mxu0 %v3553
    %4323 = vmatprep.subr.bf16.mxu0 %v3548
    %4324 = vmatpush2.bf16.msra.mxu0 %v3547
    %4325 = vmatprep.subr.bf16.mxu0 %v3542
    %4326 = vmatpush2.bf16.msra.mxu0 %v3541
    %4327 = vmatprep.subr.bf16.mxu0 %v3536
    %4328 = vmatpush2.bf16.msra.mxu0 %v3535
    %4329 = vmatprep.subr.bf16.mxu0 %v3530
    %4330 = vmatpush2.bf16.msra.mxu0 %v3529
    %4331 = vmatprep.mubr.bf16.mxu0 %v182
    %4332 = vmatmul.mubr.bf16.gmra.mxu0 %v181
    %v4333 = vpop.f32.mrf.mxu0
    %v4334 = vadd.f32 %v2607, %v4333
    %v4335 = vpop.f32.mrf.mxu0
    %v4336 = vadd.f32 %v2609, %v4335
    %v4337 = vpop.f32.mrf.mxu0
    %v4338 = vpop.f32.mrf.mxu0
    %4339 = vdwg.mxu0
    %4340 = vmatprep.subr.bf16.mxu0 %v3620
    %4341 = vmatpush1.bf16.msra.mxu0 %v3619
    %4342 = vmatprep.subr.bf16.mxu0 %v3614
    %4343 = vmatpush1.bf16.msra.mxu0 %v3613
    %4344 = vmatprep.subr.bf16.mxu0 %v3608
    %4345 = vmatpush1.bf16.msra.mxu0 %v3607
    %4346 = vmatprep.subr.bf16.mxu0 %v3602
    %4347 = vmatpush1.bf16.msra.mxu0 %v3601
    %4348 = vmatprep.subr.bf16.mxu0 %v3596
    %4349 = vmatpush1.bf16.msra.mxu0 %v3595
    %4350 = vmatprep.subr.bf16.mxu0 %v3590
    %4351 = vmatpush1.bf16.msra.mxu0 %v3589
    %4352 = vmatprep.subr.bf16.mxu0 %v3584
    %4353 = vmatpush1.bf16.msra.mxu0 %v3583
    %4354 = vmatprep.subr.bf16.mxu0 %v3578
    %4355 = vmatpush1.bf16.msra.mxu0 %v3577
    %4356 = vmatprep.subr.bf16.mxu0 %v3668
    %4357 = vmatpush2.bf16.msra.mxu0 %v3667
    %4358 = vmatprep.subr.bf16.mxu0 %v3662
    %4359 = vmatpush2.bf16.msra.mxu0 %v3661
    %4360 = vmatprep.subr.bf16.mxu0 %v3656
    %4361 = vmatpush2.bf16.msra.mxu0 %v3655
    %4362 = vmatprep.subr.bf16.mxu0 %v3650
    %4363 = vmatpush2.bf16.msra.mxu0 %v3649
    %4364 = vmatprep.subr.bf16.mxu0 %v3644
    %4365 = vmatpush2.bf16.msra.mxu0 %v3643
    %4366 = vmatprep.subr.bf16.mxu0 %v3638
    %4367 = vmatpush2.bf16.msra.mxu0 %v3637
    %4368 = vmatprep.subr.bf16.mxu0 %v3632
    %4369 = vmatpush2.bf16.msra.mxu0 %v3631
    %4370 = vmatprep.subr.bf16.mxu0 %v3626
    %4371 = vmatpush2.bf16.msra.mxu0 %v3625
    %4372 = vmatprep.mubr.bf16.mxu0 %v184
    %4373 = vmatmul.mubr.bf16.gmra.mxu0 %v183
    %v4374 = vpop.f32.mrf.mxu0
    %v4375 = vadd.f32 %v4334, %v4374
    %v4376 = vpop.f32.mrf.mxu0
    %v4377 = vadd.f32 %v4336, %v4376
    %v4378 = vpop.f32.mrf.mxu0
    %v4379 = vpop.f32.mrf.mxu0
    %4380 = vdwg.mxu0
    %4381 = vmatprep.subr.bf16.mxu0 %v3716
    %4382 = vmatpush1.bf16.msra.mxu0 %v3715
    %4383 = vmatprep.subr.bf16.mxu0 %v3710
    %4384 = vmatpush1.bf16.msra.mxu0 %v3709
    %4385 = vmatprep.subr.bf16.mxu0 %v3704
    %4386 = vmatpush1.bf16.msra.mxu0 %v3703
    %4387 = vmatprep.subr.bf16.mxu0 %v3698
    %4388 = vmatpush1.bf16.msra.mxu0 %v3697
    %4389 = vmatprep.subr.bf16.mxu0 %v3692
    %4390 = vmatpush1.bf16.msra.mxu0 %v3691
    %4391 = vmatprep.subr.bf16.mxu0 %v3686
    %4392 = vmatpush1.bf16.msra.mxu0 %v3685
    %4393 = vmatprep.subr.bf16.mxu0 %v3680
    %4394 = vmatpush1.bf16.msra.mxu0 %v3679
    %4395 = vmatprep.subr.bf16.mxu0 %v3674
    %4396 = vmatpush1.bf16.msra.mxu0 %v3673
    %4397 = vmatprep.subr.bf16.mxu0 %v3764
    %4398 = vmatpush2.bf16.msra.mxu0 %v3763
    %4399 = vmatprep.subr.bf16.mxu0 %v3758
    %4400 = vmatpush2.bf16.msra.mxu0 %v3757
    %4401 = vmatprep.subr.bf16.mxu0 %v3752
    %4402 = vmatpush2.bf16.msra.mxu0 %v3751
    %4403 = vmatprep.subr.bf16.mxu0 %v3746
    %4404 = vmatpush2.bf16.msra.mxu0 %v3745
    %4405 = vmatprep.subr.bf16.mxu0 %v3740
    %4406 = vmatpush2.bf16.msra.mxu0 %v3739
    %4407 = vmatprep.subr.bf16.mxu0 %v3734
    %4408 = vmatpush2.bf16.msra.mxu0 %v3733
    %4409 = vmatprep.subr.bf16.mxu0 %v3728
    %4410 = vmatpush2.bf16.msra.mxu0 %v3727
    %4411 = vmatprep.subr.bf16.mxu0 %v3722
    %4412 = vmatpush2.bf16.msra.mxu0 %v3721
    %4413 = vmatprep.mubr.bf16.mxu0 %v186
    %4414 = vmatmul.mubr.bf16.gmra.mxu0 %v185
    %v4415 = vpop.f32.mrf.mxu0
    %v4416 = vadd.f32 %v4375, %v4415
    %v4417 = vpop.f32.mrf.mxu0
    %v4418 = vadd.f32 %v4377, %v4417
    %v4419 = vpop.f32.mrf.mxu0
    %v4420 = vpop.f32.mrf.mxu0
    %4421 = vdwg.mxu0
    %v4422 = vld [vmem:[#allocation10] sm:$0x3f]
    %v4424 = vlaneseq
    %v4425 = vshrl.u32 %v4424, 7
    %v4426 = vsub.s32 0, %v4425
    %v4427 = vrot.slane %v4422, %v4426
    %v4428 = vlaneseq
    %v4429 = vshrl.u32 %v4428, 7
    %v4430 = vsub.s32 1, %v4429
    %v4431 = vrot.slane %v4422, %v4430
    %v4432 = vlaneseq
    %v4433 = vshrl.u32 %v4432, 7
    %v4434 = vsub.s32 2, %v4433
    %v4435 = vrot.slane %v4422, %v4434
    %v4436 = vlaneseq
    %v4437 = vshrl.u32 %v4436, 7
    %v4438 = vsub.s32 3, %v4437
    %v4439 = vrot.slane %v4422, %v4438
    %v4440 = vlaneseq
    %v4441 = vshrl.u32 %v4440, 7
    %v4442 = vsub.s32 4, %v4441
    %v4443 = vrot.slane %v4422, %v4442
    %v4444 = vlaneseq
    %v4445 = vshrl.u32 %v4444, 7
    %v4446 = vsub.s32 5, %v4445
    %v4447 = vrot.slane %v4422, %v4446
    %v4454 = vadd.f32 %v4170, %v4427
    %v4455 = vadd.f32 %v4172, %v4431
    %v4456 = vadd.f32 %v4293, %v4435
    %v4457 = vadd.f32 %v4295, %v4439
    %v4458 = vadd.f32 %v4416, %v4443
    %v4459 = vadd.f32 %v4418, %v4447
    %v4460 = vtanh.pop %v4454
    %v4461 = vtanh.pop %v4455
    %v4462 = vtanh.pop %v4456
    %v4463 = vtanh.pop %v4457
    %v4464 = vtanh.pop %v4458
    %v4465 = vtanh.pop %v4459
    %v4466 = vpack.c.bf16 %v4460, %v4460
    %v4467 = vpack.c.bf16 %v4461, %v4461
    %v4468 = vpack.c.bf16 %v4462, %v4462
    %v4469 = vpack.c.bf16 %v4463, %v4463
    %v4470 = vpack.c.bf16 %v4464, %v4464
    %v4471 = vpack.c.bf16 %v4465, %v4465
    %v4472 = vld [vmem:[#allocation11] sm:$0xff]
    %v4473 = vld [vmem:[#allocation11 + $0x8] sm:$0xff]
    %v4474 = vld [vmem:[#allocation11 + $0x10] sm:$0xff]
    %v4475 = vld [vmem:[#allocation11 + $0x18] sm:$0xff]
    %v4476 = vld [vmem:[#allocation11 + $0x20] sm:$0xff]
    %v4477 = vld [vmem:[#allocation11 + $0x28] sm:$0xff]
    %v4478 = vld [vmem:[#allocation11 + $0x30] sm:$0xff]
    %v4479 = vld [vmem:[#allocation11 + $0x38] sm:$0xff]
    %v4480 = vld [vmem:[#allocation11 + $0x40] sm:$0xff]
    %v4481 = vld [vmem:[#allocation11 + $0x48] sm:$0xff]
    %v4482 = vld [vmem:[#allocation11 + $0x50] sm:$0xff]
    %v4483 = vld [vmem:[#allocation11 + $0x58] sm:$0xff]
    %v4484 = vld [vmem:[#allocation11 + $0x60] sm:$0xff]
    %v4485 = vld [vmem:[#allocation11 + $0x68] sm:$0xff]
    %v4486 = vld [vmem:[#allocation11 + $0x70] sm:$0xff]
    %v4487 = vld [vmem:[#allocation11 + $0x78] sm:$0xff]
    %v4488 = vld [vmem:[#allocation11 + $0x80] sm:$0xff]
    %v4489 = vld [vmem:[#allocation11 + $0x88] sm:$0xff]
    %v4490 = vld [vmem:[#allocation11 + $0x90] sm:$0xff]
    %v4491 = vld [vmem:[#allocation11 + $0x98] sm:$0xff]
    %v4492 = vld [vmem:[#allocation11 + $0xa0] sm:$0xff]
    %v4493 = vld [vmem:[#allocation11 + $0xa8] sm:$0xff]
    %v4494 = vld [vmem:[#allocation11 + $0xb0] sm:$0xff]
    %v4495 = vld [vmem:[#allocation11 + $0xb8] sm:$0xff]
    %v4496 = vld [vmem:[#allocation11 + $0xc0] sm:$0xff]
    %v4497 = vld [vmem:[#allocation11 + $0xc8] sm:$0xff]
    %v4498 = vld [vmem:[#allocation11 + $0xd0] sm:$0xff]
    %v4499 = vld [vmem:[#allocation11 + $0xd8] sm:$0xff]
    %v4500 = vld [vmem:[#allocation11 + $0xe0] sm:$0xff]
    %v4501 = vld [vmem:[#allocation11 + $0xe8] sm:$0xff]
    %v4502 = vld [vmem:[#allocation11 + $0xf0] sm:$0xff]
    %v4503 = vld [vmem:[#allocation11 + $0xf8] sm:$0xff]
    %v4504 = vld [vmem:[#allocation11 + $0x100] sm:$0xff]
    %v4505 = vld [vmem:[#allocation11 + $0x108] sm:$0xff]
    %v4506 = vld [vmem:[#allocation11 + $0x110] sm:$0xff]
    %v4507 = vld [vmem:[#allocation11 + $0x118] sm:$0xff]
    %v4508 = vld [vmem:[#allocation11 + $0x120] sm:$0xff]
    %v4509 = vld [vmem:[#allocation11 + $0x128] sm:$0xff]
    %v4510 = vld [vmem:[#allocation11 + $0x130] sm:$0xff]
    %v4511 = vld [vmem:[#allocation11 + $0x138] sm:$0xff]
    %v4512 = vld [vmem:[#allocation11 + $0x140] sm:$0xff]
    %v4513 = vld [vmem:[#allocation11 + $0x148] sm:$0xff]
    %v4514 = vld [vmem:[#allocation11 + $0x150] sm:$0xff]
    %v4515 = vld [vmem:[#allocation11 + $0x158] sm:$0xff]
    %v4516 = vld [vmem:[#allocation11 + $0x160] sm:$0xff]
    %v4517 = vld [vmem:[#allocation11 + $0x168] sm:$0xff]
    %v4518 = vld [vmem:[#allocation11 + $0x170] sm:$0xff]
    %v4519 = vld [vmem:[#allocation11 + $0x178] sm:$0xff]
    %v4520 = vld [vmem:[#allocation11 + $0x180] sm:$0xff]
    %v4521 = vld [vmem:[#allocation11 + $0x188] sm:$0xff]
    %v4522 = vld [vmem:[#allocation11 + $0x190] sm:$0xff]
    %v4523 = vld [vmem:[#allocation11 + $0x198] sm:$0xff]
    %v4524 = vld [vmem:[#allocation11 + $0x1a0] sm:$0xff]
    %v4525 = vld [vmem:[#allocation11 + $0x1a8] sm:$0xff]
    %v4526 = vld [vmem:[#allocation11 + $0x1b0] sm:$0xff]
    %v4527 = vld [vmem:[#allocation11 + $0x1b8] sm:$0xff]
    %v4528 = vld [vmem:[#allocation11 + $0x1c0] sm:$0xff]
    %v4529 = vld [vmem:[#allocation11 + $0x1c8] sm:$0xff]
    %v4530 = vld [vmem:[#allocation11 + $0x1d0] sm:$0xff]
    %v4531 = vld [vmem:[#allocation11 + $0x1d8] sm:$0xff]
    %v4532 = vld [vmem:[#allocation11 + $0x1e0] sm:$0xff]
    %v4533 = vld [vmem:[#allocation11 + $0x1e8] sm:$0xff]
    %v4534 = vld [vmem:[#allocation11 + $0x1f0] sm:$0xff]
    %v4535 = vld [vmem:[#allocation11 + $0x1f8] sm:$0xff]
    %v4536 = vld [vmem:[#allocation11 + $0x200] sm:$0xff]
    %v4537 = vld [vmem:[#allocation11 + $0x208] sm:$0xff]
    %v4538 = vld [vmem:[#allocation11 + $0x210] sm:$0xff]
    %v4539 = vld [vmem:[#allocation11 + $0x218] sm:$0xff]
    %v4540 = vld [vmem:[#allocation11 + $0x220] sm:$0xff]
    %v4541 = vld [vmem:[#allocation11 + $0x228] sm:$0xff]
    %v4542 = vld [vmem:[#allocation11 + $0x230] sm:$0xff]
    %v4543 = vld [vmem:[#allocation11 + $0x238] sm:$0xff]
    %v4544 = vld [vmem:[#allocation11 + $0x240] sm:$0xff]
    %v4545 = vld [vmem:[#allocation11 + $0x248] sm:$0xff]
    %v4546 = vld [vmem:[#allocation11 + $0x250] sm:$0xff]
    %v4547 = vld [vmem:[#allocation11 + $0x258] sm:$0xff]
    %v4548 = vld [vmem:[#allocation11 + $0x260] sm:$0xff]
    %v4549 = vld [vmem:[#allocation11 + $0x268] sm:$0xff]
    %v4550 = vld [vmem:[#allocation11 + $0x270] sm:$0xff]
    %v4551 = vld [vmem:[#allocation11 + $0x278] sm:$0xff]
    %v4552 = vld [vmem:[#allocation11 + $0x280] sm:$0xff]
    %v4553 = vld [vmem:[#allocation11 + $0x288] sm:$0xff]
    %v4554 = vld [vmem:[#allocation11 + $0x290] sm:$0xff]
    %v4555 = vld [vmem:[#allocation11 + $0x298] sm:$0xff]
    %v4556 = vld [vmem:[#allocation11 + $0x2a0] sm:$0xff]
    %v4557 = vld [vmem:[#allocation11 + $0x2a8] sm:$0xff]
    %v4558 = vld [vmem:[#allocation11 + $0x2b0] sm:$0xff]
    %v4559 = vld [vmem:[#allocation11 + $0x2b8] sm:$0xff]
    %v4560 = vld [vmem:[#allocation11 + $0x2c0] sm:$0xff]
    %v4561 = vld [vmem:[#allocation11 + $0x2c8] sm:$0xff]
    %v4562 = vld [vmem:[#allocation11 + $0x2d0] sm:$0xff]
    %v4563 = vld [vmem:[#allocation11 + $0x2d8] sm:$0xff]
    %v4564 = vld [vmem:[#allocation11 + $0x2e0] sm:$0xff]
    %v4565 = vld [vmem:[#allocation11 + $0x2e8] sm:$0xff]
    %v4566 = vld [vmem:[#allocation11 + $0x2f0] sm:$0xff]
    %v4567 = vld [vmem:[#allocation11 + $0x2f8] sm:$0xff]
    %v4568 = vld [vmem:[#allocation11 + $0x300] sm:$0xff]
    %v4569 = vld [vmem:[#allocation11 + $0x308] sm:$0xff]
    %v4570 = vld [vmem:[#allocation11 + $0x310] sm:$0xff]
    %v4571 = vld [vmem:[#allocation11 + $0x318] sm:$0xff]
    %v4572 = vld [vmem:[#allocation11 + $0x320] sm:$0xff]
    %v4573 = vld [vmem:[#allocation11 + $0x328] sm:$0xff]
    %v4574 = vld [vmem:[#allocation11 + $0x330] sm:$0xff]
    %v4575 = vld [vmem:[#allocation11 + $0x338] sm:$0xff]
    %v4576 = vld [vmem:[#allocation11 + $0x340] sm:$0xff]
    %v4577 = vld [vmem:[#allocation11 + $0x348] sm:$0xff]
    %v4578 = vld [vmem:[#allocation11 + $0x350] sm:$0xff]
    %v4579 = vld [vmem:[#allocation11 + $0x358] sm:$0xff]
    %v4580 = vld [vmem:[#allocation11 + $0x360] sm:$0xff]
    %v4581 = vld [vmem:[#allocation11 + $0x368] sm:$0xff]
    %v4582 = vld [vmem:[#allocation11 + $0x370] sm:$0xff]
    %v4583 = vld [vmem:[#allocation11 + $0x378] sm:$0xff]
    %v4584 = vld [vmem:[#allocation11 + $0x380] sm:$0xff]
    %v4585 = vld [vmem:[#allocation11 + $0x388] sm:$0xff]
    %v4586 = vld [vmem:[#allocation11 + $0x390] sm:$0xff]
    %v4587 = vld [vmem:[#allocation11 + $0x398] sm:$0xff]
    %v4588 = vld [vmem:[#allocation11 + $0x3a0] sm:$0xff]
    %v4589 = vld [vmem:[#allocation11 + $0x3a8] sm:$0xff]
    %v4590 = vld [vmem:[#allocation11 + $0x3b0] sm:$0xff]
    %v4591 = vld [vmem:[#allocation11 + $0x3b8] sm:$0xff]
    %v4592 = vld [vmem:[#allocation11 + $0x3c0] sm:$0xff]
    %v4593 = vld [vmem:[#allocation11 + $0x3c8] sm:$0xff]
    %v4594 = vld [vmem:[#allocation11 + $0x3d0] sm:$0xff]
    %v4595 = vld [vmem:[#allocation11 + $0x3d8] sm:$0xff]
    %v4596 = vld [vmem:[#allocation11 + $0x3e0] sm:$0xff]
    %v4597 = vld [vmem:[#allocation11 + $0x3e8] sm:$0xff]
    %v4598 = vld [vmem:[#allocation11 + $0x3f0] sm:$0xff]
    %v4599 = vld [vmem:[#allocation11 + $0x3f8] sm:$0xff]
    %v4600 = vld [vmem:[#allocation11 + $0x400] sm:$0xff]
    %v4601 = vld [vmem:[#allocation11 + $0x408] sm:$0xff]
    %v4602 = vld [vmem:[#allocation11 + $0x410] sm:$0xff]
    %v4603 = vld [vmem:[#allocation11 + $0x418] sm:$0xff]
    %v4604 = vld [vmem:[#allocation11 + $0x420] sm:$0xff]
    %v4605 = vld [vmem:[#allocation11 + $0x428] sm:$0xff]
    %v4606 = vld [vmem:[#allocation11 + $0x430] sm:$0xff]
    %v4607 = vld [vmem:[#allocation11 + $0x438] sm:$0xff]
    %v4608 = vld [vmem:[#allocation11 + $0x440] sm:$0xff]
    %v4609 = vld [vmem:[#allocation11 + $0x448] sm:$0xff]
    %v4610 = vld [vmem:[#allocation11 + $0x450] sm:$0xff]
    %v4611 = vld [vmem:[#allocation11 + $0x458] sm:$0xff]
    %v4612 = vld [vmem:[#allocation11 + $0x460] sm:$0xff]
    %v4613 = vld [vmem:[#allocation11 + $0x468] sm:$0xff]
    %v4614 = vld [vmem:[#allocation11 + $0x470] sm:$0xff]
    %v4615 = vld [vmem:[#allocation11 + $0x478] sm:$0xff]
    %v4616 = vld [vmem:[#allocation11 + $0x480] sm:$0xff]
    %v4617 = vld [vmem:[#allocation11 + $0x488] sm:$0xff]
    %v4618 = vld [vmem:[#allocation11 + $0x490] sm:$0xff]
    %v4619 = vld [vmem:[#allocation11 + $0x498] sm:$0xff]
    %v4620 = vld [vmem:[#allocation11 + $0x4a0] sm:$0xff]
    %v4621 = vld [vmem:[#allocation11 + $0x4a8] sm:$0xff]
    %v4622 = vld [vmem:[#allocation11 + $0x4b0] sm:$0xff]
    %v4623 = vld [vmem:[#allocation11 + $0x4b8] sm:$0xff]
    %v4624 = vld [vmem:[#allocation11 + $0x4c0] sm:$0xff]
    %v4625 = vld [vmem:[#allocation11 + $0x4c8] sm:$0xff]
    %v4626 = vld [vmem:[#allocation11 + $0x4d0] sm:$0xff]
    %v4627 = vld [vmem:[#allocation11 + $0x4d8] sm:$0xff]
    %v4628 = vld [vmem:[#allocation11 + $0x4e0] sm:$0xff]
    %v4629 = vld [vmem:[#allocation11 + $0x4e8] sm:$0xff]
    %v4630 = vld [vmem:[#allocation11 + $0x4f0] sm:$0xff]
    %v4631 = vld [vmem:[#allocation11 + $0x4f8] sm:$0xff]
    %v4632 = vld [vmem:[#allocation11 + $0x500] sm:$0xff]
    %v4633 = vld [vmem:[#allocation11 + $0x508] sm:$0xff]
    %v4634 = vld [vmem:[#allocation11 + $0x510] sm:$0xff]
    %v4635 = vld [vmem:[#allocation11 + $0x518] sm:$0xff]
    %v4636 = vld [vmem:[#allocation11 + $0x520] sm:$0xff]
    %v4637 = vld [vmem:[#allocation11 + $0x528] sm:$0xff]
    %v4638 = vld [vmem:[#allocation11 + $0x530] sm:$0xff]
    %v4639 = vld [vmem:[#allocation11 + $0x538] sm:$0xff]
    %v4640 = vld [vmem:[#allocation11 + $0x540] sm:$0xff]
    %v4641 = vld [vmem:[#allocation11 + $0x548] sm:$0xff]
    %v4642 = vld [vmem:[#allocation11 + $0x550] sm:$0xff]
    %v4643 = vld [vmem:[#allocation11 + $0x558] sm:$0xff]
    %v4644 = vld [vmem:[#allocation11 + $0x560] sm:$0xff]
    %v4645 = vld [vmem:[#allocation11 + $0x568] sm:$0xff]
    %v4646 = vld [vmem:[#allocation11 + $0x570] sm:$0xff]
    %v4647 = vld [vmem:[#allocation11 + $0x578] sm:$0xff]
    %v4648 = vld [vmem:[#allocation11 + $0x580] sm:$0xff]
    %v4649 = vld [vmem:[#allocation11 + $0x588] sm:$0xff]
    %v4650 = vld [vmem:[#allocation11 + $0x590] sm:$0xff]
    %v4651 = vld [vmem:[#allocation11 + $0x598] sm:$0xff]
    %v4652 = vld [vmem:[#allocation11 + $0x5a0] sm:$0xff]
    %v4653 = vld [vmem:[#allocation11 + $0x5a8] sm:$0xff]
    %v4654 = vld [vmem:[#allocation11 + $0x5b0] sm:$0xff]
    %v4655 = vld [vmem:[#allocation11 + $0x5b8] sm:$0xff]
    %v4656 = vld [vmem:[#allocation11 + $0x5c0] sm:$0xff]
    %v4657 = vld [vmem:[#allocation11 + $0x5c8] sm:$0xff]
    %v4658 = vld [vmem:[#allocation11 + $0x5d0] sm:$0xff]
    %v4659 = vld [vmem:[#allocation11 + $0x5d8] sm:$0xff]
    %v4660 = vld [vmem:[#allocation11 + $0x5e0] sm:$0xff]
    %v4661 = vld [vmem:[#allocation11 + $0x5e8] sm:$0xff]
    %v4662 = vld [vmem:[#allocation11 + $0x5f0] sm:$0xff]
    %v4663 = vld [vmem:[#allocation11 + $0x5f8] sm:$0xff]
    %v4664 = vld [vmem:[#allocation13] sm:$0xf]
    %v4666 = vlaneseq
    %v4667 = vshrl.u32 %v4666, 7
    %v4668 = vsub.s32 0, %v4667
    %v4669 = vrot.slane %v4664, %v4668
    %v4670 = vlaneseq
    %v4671 = vshrl.u32 %v4670, 7
    %v4672 = vsub.s32 1, %v4671
    %v4673 = vrot.slane %v4664, %v4672
    %v4674 = vlaneseq
    %v4675 = vshrl.u32 %v4674, 7
    %v4676 = vsub.s32 2, %v4675
    %v4677 = vrot.slane %v4664, %v4676
    %v4678 = vlaneseq
    %v4679 = vshrl.u32 %v4678, 7
    %v4680 = vsub.s32 3, %v4679
    %v4681 = vrot.slane %v4664, %v4680
    %v4878 = vunpack.c.l.b16 %v4472
    %v4879 = vunpack.c.h.b16 %v4472
    %v4880 = vunpack.c.l.b16 %v4473
    %v4881 = vunpack.c.h.b16 %v4473
    %v4882 = vunpack.c.l.b16 %v4474
    %v4883 = vunpack.c.h.b16 %v4474
    %v4884 = vunpack.c.l.b16 %v4475
    %v4885 = vunpack.c.h.b16 %v4475
    %v4886 = vunpack.c.l.b16 %v4476
    %v4887 = vunpack.c.h.b16 %v4476
    %v4888 = vunpack.c.l.b16 %v4477
    %v4889 = vunpack.c.h.b16 %v4477
    %v4890 = vunpack.c.l.b16 %v4478
    %v4891 = vunpack.c.h.b16 %v4478
    %v4892 = vunpack.c.l.b16 %v4479
    %v4893 = vunpack.c.h.b16 %v4479
    %v4894 = vunpack.c.l.b16 %v4480
    %v4895 = vunpack.c.h.b16 %v4480
    %v4896 = vunpack.c.l.b16 %v4481
    %v4897 = vunpack.c.h.b16 %v4481
    %v4898 = vunpack.c.l.b16 %v4482
    %v4899 = vunpack.c.h.b16 %v4482
    %v4900 = vunpack.c.l.b16 %v4483
    %v4901 = vunpack.c.h.b16 %v4483
    %v4902 = vunpack.c.l.b16 %v4484
    %v4903 = vunpack.c.h.b16 %v4484
    %v4904 = vunpack.c.l.b16 %v4485
    %v4905 = vunpack.c.h.b16 %v4485
    %v4906 = vunpack.c.l.b16 %v4486
    %v4907 = vunpack.c.h.b16 %v4486
    %v4908 = vunpack.c.l.b16 %v4487
    %v4909 = vunpack.c.h.b16 %v4487
    %v4910 = vunpack.c.l.b16 %v4488
    %v4911 = vunpack.c.h.b16 %v4488
    %v4912 = vunpack.c.l.b16 %v4489
    %v4913 = vunpack.c.h.b16 %v4489
    %v4914 = vunpack.c.l.b16 %v4490
    %v4915 = vunpack.c.h.b16 %v4490
    %v4916 = vunpack.c.l.b16 %v4491
    %v4917 = vunpack.c.h.b16 %v4491
    %v4918 = vunpack.c.l.b16 %v4492
    %v4919 = vunpack.c.h.b16 %v4492
    %v4920 = vunpack.c.l.b16 %v4493
    %v4921 = vunpack.c.h.b16 %v4493
    %v4922 = vunpack.c.l.b16 %v4494
    %v4923 = vunpack.c.h.b16 %v4494
    %v4924 = vunpack.c.l.b16 %v4495
    %v4925 = vunpack.c.h.b16 %v4495
    %v4926 = vunpack.c.l.b16 %v4496
    %v4927 = vunpack.c.h.b16 %v4496
    %v4928 = vunpack.c.l.b16 %v4497
    %v4929 = vunpack.c.h.b16 %v4497
    %v4930 = vunpack.c.l.b16 %v4498
    %v4931 = vunpack.c.h.b16 %v4498
    %v4932 = vunpack.c.l.b16 %v4499
    %v4933 = vunpack.c.h.b16 %v4499
    %v4934 = vunpack.c.l.b16 %v4500
    %v4935 = vunpack.c.h.b16 %v4500
    %v4936 = vunpack.c.l.b16 %v4501
    %v4937 = vunpack.c.h.b16 %v4501
    %v4938 = vunpack.c.l.b16 %v4502
    %v4939 = vunpack.c.h.b16 %v4502
    %v4940 = vunpack.c.l.b16 %v4503
    %v4941 = vunpack.c.h.b16 %v4503
    %v4942 = vunpack.c.l.b16 %v4504
    %v4943 = vunpack.c.h.b16 %v4504
    %v4944 = vunpack.c.l.b16 %v4505
    %v4945 = vunpack.c.h.b16 %v4505
    %v4946 = vunpack.c.l.b16 %v4506
    %v4947 = vunpack.c.h.b16 %v4506
    %v4948 = vunpack.c.l.b16 %v4507
    %v4949 = vunpack.c.h.b16 %v4507
    %v4950 = vunpack.c.l.b16 %v4508
    %v4951 = vunpack.c.h.b16 %v4508
    %v4952 = vunpack.c.l.b16 %v4509
    %v4953 = vunpack.c.h.b16 %v4509
    %v4954 = vunpack.c.l.b16 %v4510
    %v4955 = vunpack.c.h.b16 %v4510
    %v4956 = vunpack.c.l.b16 %v4511
    %v4957 = vunpack.c.h.b16 %v4511
    %v4958 = vunpack.c.l.b16 %v4512
    %v4959 = vunpack.c.h.b16 %v4512
    %v4960 = vunpack.c.l.b16 %v4513
    %v4961 = vunpack.c.h.b16 %v4513
    %v4962 = vunpack.c.l.b16 %v4514
    %v4963 = vunpack.c.h.b16 %v4514
    %v4964 = vunpack.c.l.b16 %v4515
    %v4965 = vunpack.c.h.b16 %v4515
    %v4966 = vunpack.c.l.b16 %v4516
    %v4967 = vunpack.c.h.b16 %v4516
    %v4968 = vunpack.c.l.b16 %v4517
    %v4969 = vunpack.c.h.b16 %v4517
    %v4970 = vunpack.c.l.b16 %v4518
    %v4971 = vunpack.c.h.b16 %v4518
    %v4972 = vunpack.c.l.b16 %v4519
    %v4973 = vunpack.c.h.b16 %v4519
    %v4974 = vunpack.c.l.b16 %v4520
    %v4975 = vunpack.c.h.b16 %v4520
    %v4976 = vunpack.c.l.b16 %v4521
    %v4977 = vunpack.c.h.b16 %v4521
    %v4978 = vunpack.c.l.b16 %v4522
    %v4979 = vunpack.c.h.b16 %v4522
    %v4980 = vunpack.c.l.b16 %v4523
    %v4981 = vunpack.c.h.b16 %v4523
    %v4982 = vunpack.c.l.b16 %v4524
    %v4983 = vunpack.c.h.b16 %v4524
    %v4984 = vunpack.c.l.b16 %v4525
    %v4985 = vunpack.c.h.b16 %v4525
    %v4986 = vunpack.c.l.b16 %v4526
    %v4987 = vunpack.c.h.b16 %v4526
    %v4988 = vunpack.c.l.b16 %v4527
    %v4989 = vunpack.c.h.b16 %v4527
    %v4990 = vunpack.c.l.b16 %v4528
    %v4991 = vunpack.c.h.b16 %v4528
    %v4992 = vunpack.c.l.b16 %v4529
    %v4993 = vunpack.c.h.b16 %v4529
    %v4994 = vunpack.c.l.b16 %v4530
    %v4995 = vunpack.c.h.b16 %v4530
    %v4996 = vunpack.c.l.b16 %v4531
    %v4997 = vunpack.c.h.b16 %v4531
    %v4998 = vunpack.c.l.b16 %v4532
    %v4999 = vunpack.c.h.b16 %v4532
    %v5000 = vunpack.c.l.b16 %v4533
    %v5001 = vunpack.c.h.b16 %v4533
    %v5002 = vunpack.c.l.b16 %v4534
    %v5003 = vunpack.c.h.b16 %v4534
    %v5004 = vunpack.c.l.b16 %v4535
    %v5005 = vunpack.c.h.b16 %v4535
    %v5006 = vunpack.c.l.b16 %v4536
    %v5007 = vunpack.c.h.b16 %v4536
    %v5008 = vunpack.c.l.b16 %v4537
    %v5009 = vunpack.c.h.b16 %v4537
    %v5010 = vunpack.c.l.b16 %v4538
    %v5011 = vunpack.c.h.b16 %v4538
    %v5012 = vunpack.c.l.b16 %v4539
    %v5013 = vunpack.c.h.b16 %v4539
    %v5014 = vunpack.c.l.b16 %v4540
    %v5015 = vunpack.c.h.b16 %v4540
    %v5016 = vunpack.c.l.b16 %v4541
    %v5017 = vunpack.c.h.b16 %v4541
    %v5018 = vunpack.c.l.b16 %v4542
    %v5019 = vunpack.c.h.b16 %v4542
    %v5020 = vunpack.c.l.b16 %v4543
    %v5021 = vunpack.c.h.b16 %v4543
    %v5022 = vunpack.c.l.b16 %v4544
    %v5023 = vunpack.c.h.b16 %v4544
    %v5024 = vunpack.c.l.b16 %v4545
    %v5025 = vunpack.c.h.b16 %v4545
    %v5026 = vunpack.c.l.b16 %v4546
    %v5027 = vunpack.c.h.b16 %v4546
    %v5028 = vunpack.c.l.b16 %v4547
    %v5029 = vunpack.c.h.b16 %v4547
    %v5030 = vunpack.c.l.b16 %v4548
    %v5031 = vunpack.c.h.b16 %v4548
    %v5032 = vunpack.c.l.b16 %v4549
    %v5033 = vunpack.c.h.b16 %v4549
    %v5034 = vunpack.c.l.b16 %v4550
    %v5035 = vunpack.c.h.b16 %v4550
    %v5036 = vunpack.c.l.b16 %v4551
    %v5037 = vunpack.c.h.b16 %v4551
    %v5038 = vunpack.c.l.b16 %v4552
    %v5039 = vunpack.c.h.b16 %v4552
    %v5040 = vunpack.c.l.b16 %v4553
    %v5041 = vunpack.c.h.b16 %v4553
    %v5042 = vunpack.c.l.b16 %v4554
    %v5043 = vunpack.c.h.b16 %v4554
    %v5044 = vunpack.c.l.b16 %v4555
    %v5045 = vunpack.c.h.b16 %v4555
    %v5046 = vunpack.c.l.b16 %v4556
    %v5047 = vunpack.c.h.b16 %v4556
    %v5048 = vunpack.c.l.b16 %v4557
    %v5049 = vunpack.c.h.b16 %v4557
    %v5050 = vunpack.c.l.b16 %v4558
    %v5051 = vunpack.c.h.b16 %v4558
    %v5052 = vunpack.c.l.b16 %v4559
    %v5053 = vunpack.c.h.b16 %v4559
    %v5054 = vunpack.c.l.b16 %v4560
    %v5055 = vunpack.c.h.b16 %v4560
    %v5056 = vunpack.c.l.b16 %v4561
    %v5057 = vunpack.c.h.b16 %v4561
    %v5058 = vunpack.c.l.b16 %v4562
    %v5059 = vunpack.c.h.b16 %v4562
    %v5060 = vunpack.c.l.b16 %v4563
    %v5061 = vunpack.c.h.b16 %v4563
    %v5062 = vunpack.c.l.b16 %v4564
    %v5063 = vunpack.c.h.b16 %v4564
    %v5064 = vunpack.c.l.b16 %v4565
    %v5065 = vunpack.c.h.b16 %v4565
    %v5066 = vunpack.c.l.b16 %v4566
    %v5067 = vunpack.c.h.b16 %v4566
    %v5068 = vunpack.c.l.b16 %v4567
    %v5069 = vunpack.c.h.b16 %v4567
    %v5070 = vunpack.c.l.b16 %v4568
    %v5071 = vunpack.c.h.b16 %v4568
    %v5072 = vunpack.c.l.b16 %v4569
    %v5073 = vunpack.c.h.b16 %v4569
    %v5074 = vunpack.c.l.b16 %v4570
    %v5075 = vunpack.c.h.b16 %v4570
    %v5076 = vunpack.c.l.b16 %v4571
    %v5077 = vunpack.c.h.b16 %v4571
    %v5078 = vunpack.c.l.b16 %v4572
    %v5079 = vunpack.c.h.b16 %v4572
    %v5080 = vunpack.c.l.b16 %v4573
    %v5081 = vunpack.c.h.b16 %v4573
    %v5082 = vunpack.c.l.b16 %v4574
    %v5083 = vunpack.c.h.b16 %v4574
    %v5084 = vunpack.c.l.b16 %v4575
    %v5085 = vunpack.c.h.b16 %v4575
    %v5086 = vunpack.c.l.b16 %v4576
    %v5087 = vunpack.c.h.b16 %v4576
    %v5088 = vunpack.c.l.b16 %v4577
    %v5089 = vunpack.c.h.b16 %v4577
    %v5090 = vunpack.c.l.b16 %v4578
    %v5091 = vunpack.c.h.b16 %v4578
    %v5092 = vunpack.c.l.b16 %v4579
    %v5093 = vunpack.c.h.b16 %v4579
    %v5094 = vunpack.c.l.b16 %v4580
    %v5095 = vunpack.c.h.b16 %v4580
    %v5096 = vunpack.c.l.b16 %v4581
    %v5097 = vunpack.c.h.b16 %v4581
    %v5098 = vunpack.c.l.b16 %v4582
    %v5099 = vunpack.c.h.b16 %v4582
    %v5100 = vunpack.c.l.b16 %v4583
    %v5101 = vunpack.c.h.b16 %v4583
    %v5102 = vunpack.c.l.b16 %v4584
    %v5103 = vunpack.c.h.b16 %v4584
    %v5104 = vunpack.c.l.b16 %v4585
    %v5105 = vunpack.c.h.b16 %v4585
    %v5106 = vunpack.c.l.b16 %v4586
    %v5107 = vunpack.c.h.b16 %v4586
    %v5108 = vunpack.c.l.b16 %v4587
    %v5109 = vunpack.c.h.b16 %v4587
    %v5110 = vunpack.c.l.b16 %v4588
    %v5111 = vunpack.c.h.b16 %v4588
    %v5112 = vunpack.c.l.b16 %v4589
    %v5113 = vunpack.c.h.b16 %v4589
    %v5114 = vunpack.c.l.b16 %v4590
    %v5115 = vunpack.c.h.b16 %v4590
    %v5116 = vunpack.c.l.b16 %v4591
    %v5117 = vunpack.c.h.b16 %v4591
    %v5118 = vunpack.c.l.b16 %v4592
    %v5119 = vunpack.c.h.b16 %v4592
    %v5120 = vunpack.c.l.b16 %v4593
    %v5121 = vunpack.c.h.b16 %v4593
    %v5122 = vunpack.c.l.b16 %v4594
    %v5123 = vunpack.c.h.b16 %v4594
    %v5124 = vunpack.c.l.b16 %v4595
    %v5125 = vunpack.c.h.b16 %v4595
    %v5126 = vunpack.c.l.b16 %v4596
    %v5127 = vunpack.c.h.b16 %v4596
    %v5128 = vunpack.c.l.b16 %v4597
    %v5129 = vunpack.c.h.b16 %v4597
    %v5130 = vunpack.c.l.b16 %v4598
    %v5131 = vunpack.c.h.b16 %v4598
    %v5132 = vunpack.c.l.b16 %v4599
    %v5133 = vunpack.c.h.b16 %v4599
    %v5134 = vunpack.c.l.b16 %v4600
    %v5135 = vunpack.c.h.b16 %v4600
    %v5136 = vunpack.c.l.b16 %v4601
    %v5137 = vunpack.c.h.b16 %v4601
    %v5138 = vunpack.c.l.b16 %v4602
    %v5139 = vunpack.c.h.b16 %v4602
    %v5140 = vunpack.c.l.b16 %v4603
    %v5141 = vunpack.c.h.b16 %v4603
    %v5142 = vunpack.c.l.b16 %v4604
    %v5143 = vunpack.c.h.b16 %v4604
    %v5144 = vunpack.c.l.b16 %v4605
    %v5145 = vunpack.c.h.b16 %v4605
    %v5146 = vunpack.c.l.b16 %v4606
    %v5147 = vunpack.c.h.b16 %v4606
    %v5148 = vunpack.c.l.b16 %v4607
    %v5149 = vunpack.c.h.b16 %v4607
    %v5150 = vunpack.c.l.b16 %v4608
    %v5151 = vunpack.c.h.b16 %v4608
    %v5152 = vunpack.c.l.b16 %v4609
    %v5153 = vunpack.c.h.b16 %v4609
    %v5154 = vunpack.c.l.b16 %v4610
    %v5155 = vunpack.c.h.b16 %v4610
    %v5156 = vunpack.c.l.b16 %v4611
    %v5157 = vunpack.c.h.b16 %v4611
    %v5158 = vunpack.c.l.b16 %v4612
    %v5159 = vunpack.c.h.b16 %v4612
    %v5160 = vunpack.c.l.b16 %v4613
    %v5161 = vunpack.c.h.b16 %v4613
    %v5162 = vunpack.c.l.b16 %v4614
    %v5163 = vunpack.c.h.b16 %v4614
    %v5164 = vunpack.c.l.b16 %v4615
    %v5165 = vunpack.c.h.b16 %v4615
    %v5166 = vunpack.c.l.b16 %v4616
    %v5167 = vunpack.c.h.b16 %v4616
    %v5168 = vunpack.c.l.b16 %v4617
    %v5169 = vunpack.c.h.b16 %v4617
    %v5170 = vunpack.c.l.b16 %v4618
    %v5171 = vunpack.c.h.b16 %v4618
    %v5172 = vunpack.c.l.b16 %v4619
    %v5173 = vunpack.c.h.b16 %v4619
    %v5174 = vunpack.c.l.b16 %v4620
    %v5175 = vunpack.c.h.b16 %v4620
    %v5176 = vunpack.c.l.b16 %v4621
    %v5177 = vunpack.c.h.b16 %v4621
    %v5178 = vunpack.c.l.b16 %v4622
    %v5179 = vunpack.c.h.b16 %v4622
    %v5180 = vunpack.c.l.b16 %v4623
    %v5181 = vunpack.c.h.b16 %v4623
    %v5182 = vunpack.c.l.b16 %v4624
    %v5183 = vunpack.c.h.b16 %v4624
    %v5184 = vunpack.c.l.b16 %v4625
    %v5185 = vunpack.c.h.b16 %v4625
    %v5186 = vunpack.c.l.b16 %v4626
    %v5187 = vunpack.c.h.b16 %v4626
    %v5188 = vunpack.c.l.b16 %v4627
    %v5189 = vunpack.c.h.b16 %v4627
    %v5190 = vunpack.c.l.b16 %v4628
    %v5191 = vunpack.c.h.b16 %v4628
    %v5192 = vunpack.c.l.b16 %v4629
    %v5193 = vunpack.c.h.b16 %v4629
    %v5194 = vunpack.c.l.b16 %v4630
    %v5195 = vunpack.c.h.b16 %v4630
    %v5196 = vunpack.c.l.b16 %v4631
    %v5197 = vunpack.c.h.b16 %v4631
    %v5198 = vunpack.c.l.b16 %v4632
    %v5199 = vunpack.c.h.b16 %v4632
    %v5200 = vunpack.c.l.b16 %v4633
    %v5201 = vunpack.c.h.b16 %v4633
    %v5202 = vunpack.c.l.b16 %v4634
    %v5203 = vunpack.c.h.b16 %v4634
    %v5204 = vunpack.c.l.b16 %v4635
    %v5205 = vunpack.c.h.b16 %v4635
    %v5206 = vunpack.c.l.b16 %v4636
    %v5207 = vunpack.c.h.b16 %v4636
    %v5208 = vunpack.c.l.b16 %v4637
    %v5209 = vunpack.c.h.b16 %v4637
    %v5210 = vunpack.c.l.b16 %v4638
    %v5211 = vunpack.c.h.b16 %v4638
    %v5212 = vunpack.c.l.b16 %v4639
    %v5213 = vunpack.c.h.b16 %v4639
    %v5214 = vunpack.c.l.b16 %v4640
    %v5215 = vunpack.c.h.b16 %v4640
    %v5216 = vunpack.c.l.b16 %v4641
    %v5217 = vunpack.c.h.b16 %v4641
    %v5218 = vunpack.c.l.b16 %v4642
    %v5219 = vunpack.c.h.b16 %v4642
    %v5220 = vunpack.c.l.b16 %v4643
    %v5221 = vunpack.c.h.b16 %v4643
    %v5222 = vunpack.c.l.b16 %v4644
    %v5223 = vunpack.c.h.b16 %v4644
    %v5224 = vunpack.c.l.b16 %v4645
    %v5225 = vunpack.c.h.b16 %v4645
    %v5226 = vunpack.c.l.b16 %v4646
    %v5227 = vunpack.c.h.b16 %v4646
    %v5228 = vunpack.c.l.b16 %v4647
    %v5229 = vunpack.c.h.b16 %v4647
    %v5230 = vunpack.c.l.b16 %v4648
    %v5231 = vunpack.c.h.b16 %v4648
    %v5232 = vunpack.c.l.b16 %v4649
    %v5233 = vunpack.c.h.b16 %v4649
    %v5234 = vunpack.c.l.b16 %v4650
    %v5235 = vunpack.c.h.b16 %v4650
    %v5236 = vunpack.c.l.b16 %v4651
    %v5237 = vunpack.c.h.b16 %v4651
    %v5238 = vunpack.c.l.b16 %v4652
    %v5239 = vunpack.c.h.b16 %v4652
    %v5240 = vunpack.c.l.b16 %v4653
    %v5241 = vunpack.c.h.b16 %v4653
    %v5242 = vunpack.c.l.b16 %v4654
    %v5243 = vunpack.c.h.b16 %v4654
    %v5244 = vunpack.c.l.b16 %v4655
    %v5245 = vunpack.c.h.b16 %v4655
    %v5246 = vunpack.c.l.b16 %v4656
    %v5247 = vunpack.c.h.b16 %v4656
    %v5248 = vunpack.c.l.b16 %v4657
    %v5249 = vunpack.c.h.b16 %v4657
    %v5250 = vunpack.c.l.b16 %v4658
    %v5251 = vunpack.c.h.b16 %v4658
    %v5252 = vunpack.c.l.b16 %v4659
    %v5253 = vunpack.c.h.b16 %v4659
    %v5254 = vunpack.c.l.b16 %v4660
    %v5255 = vunpack.c.h.b16 %v4660
    %v5256 = vunpack.c.l.b16 %v4661
    %v5257 = vunpack.c.h.b16 %v4661
    %v5258 = vunpack.c.l.b16 %v4662
    %v5259 = vunpack.c.h.b16 %v4662
    %v5260 = vunpack.c.l.b16 %v4663
    %v5261 = vunpack.c.h.b16 %v4663
    %v5262 = vpack.c.b16 %v4882, %v4878
    %v5263 = vpack.c.b16 %v4883, %v4879
    %v5264 = vpack.c.b16 %v4884, %v4880
    %v5265 = vpack.c.b16 %v4885, %v4881
    %v5266 = vpack.c.b16 %v4890, %v4886
    %v5267 = vpack.c.b16 %v4891, %v4887
    %v5268 = vpack.c.b16 %v4892, %v4888
    %v5269 = vpack.c.b16 %v4893, %v4889
    %v5270 = vpack.c.b16 %v4898, %v4894
    %v5271 = vpack.c.b16 %v4899, %v4895
    %v5272 = vpack.c.b16 %v4900, %v4896
    %v5273 = vpack.c.b16 %v4901, %v4897
    %v5274 = vpack.c.b16 %v4906, %v4902
    %v5275 = vpack.c.b16 %v4907, %v4903
    %v5276 = vpack.c.b16 %v4908, %v4904
    %v5277 = vpack.c.b16 %v4909, %v4905
    %v5278 = vpack.c.b16 %v4914, %v4910
    %v5279 = vpack.c.b16 %v4915, %v4911
    %v5280 = vpack.c.b16 %v4916, %v4912
    %v5281 = vpack.c.b16 %v4917, %v4913
    %v5282 = vpack.c.b16 %v4922, %v4918
    %v5283 = vpack.c.b16 %v4923, %v4919
    %v5284 = vpack.c.b16 %v4924, %v4920
    %v5285 = vpack.c.b16 %v4925, %v4921
    %v5286 = vpack.c.b16 %v4930, %v4926
    %v5287 = vpack.c.b16 %v4931, %v4927
    %v5288 = vpack.c.b16 %v4932, %v4928
    %v5289 = vpack.c.b16 %v4933, %v4929
    %v5290 = vpack.c.b16 %v4938, %v4934
    %v5291 = vpack.c.b16 %v4939, %v4935
    %v5292 = vpack.c.b16 %v4940, %v4936
    %v5293 = vpack.c.b16 %v4941, %v4937
    %v5294 = vpack.c.b16 %v4946, %v4942
    %v5295 = vpack.c.b16 %v4947, %v4943
    %v5296 = vpack.c.b16 %v4948, %v4944
    %v5297 = vpack.c.b16 %v4949, %v4945
    %v5298 = vpack.c.b16 %v4954, %v4950
    %v5299 = vpack.c.b16 %v4955, %v4951
    %v5300 = vpack.c.b16 %v4956, %v4952
    %v5301 = vpack.c.b16 %v4957, %v4953
    %v5302 = vpack.c.b16 %v4962, %v4958
    %v5303 = vpack.c.b16 %v4963, %v4959
    %v5304 = vpack.c.b16 %v4964, %v4960
    %v5305 = vpack.c.b16 %v4965, %v4961
    %v5306 = vpack.c.b16 %v4970, %v4966
    %v5307 = vpack.c.b16 %v4971, %v4967
    %v5308 = vpack.c.b16 %v4972, %v4968
    %v5309 = vpack.c.b16 %v4973, %v4969
    %v5310 = vpack.c.b16 %v4978, %v4974
    %v5311 = vpack.c.b16 %v4979, %v4975
    %v5312 = vpack.c.b16 %v4980, %v4976
    %v5313 = vpack.c.b16 %v4981, %v4977
    %v5314 = vpack.c.b16 %v4986, %v4982
    %v5315 = vpack.c.b16 %v4987, %v4983
    %v5316 = vpack.c.b16 %v4988, %v4984
    %v5317 = vpack.c.b16 %v4989, %v4985
    %v5318 = vpack.c.b16 %v4994, %v4990
    %v5319 = vpack.c.b16 %v4995, %v4991
    %v5320 = vpack.c.b16 %v4996, %v4992
    %v5321 = vpack.c.b16 %v4997, %v4993
    %v5322 = vpack.c.b16 %v5002, %v4998
    %v5323 = vpack.c.b16 %v5003, %v4999
    %v5324 = vpack.c.b16 %v5004, %v5000
    %v5325 = vpack.c.b16 %v5005, %v5001
    %v5326 = vpack.c.b16 %v5010, %v5006
    %v5327 = vpack.c.b16 %v5011, %v5007
    %v5328 = vpack.c.b16 %v5012, %v5008
    %v5329 = vpack.c.b16 %v5013, %v5009
    %v5330 = vpack.c.b16 %v5018, %v5014
    %v5331 = vpack.c.b16 %v5019, %v5015
    %v5332 = vpack.c.b16 %v5020, %v5016
    %v5333 = vpack.c.b16 %v5021, %v5017
    %v5334 = vpack.c.b16 %v5026, %v5022
    %v5335 = vpack.c.b16 %v5027, %v5023
    %v5336 = vpack.c.b16 %v5028, %v5024
    %v5337 = vpack.c.b16 %v5029, %v5025
    %v5338 = vpack.c.b16 %v5034, %v5030
    %v5339 = vpack.c.b16 %v5035, %v5031
    %v5340 = vpack.c.b16 %v5036, %v5032
    %v5341 = vpack.c.b16 %v5037, %v5033
    %v5342 = vpack.c.b16 %v5042, %v5038
    %v5343 = vpack.c.b16 %v5043, %v5039
    %v5344 = vpack.c.b16 %v5044, %v5040
    %v5345 = vpack.c.b16 %v5045, %v5041
    %v5346 = vpack.c.b16 %v5050, %v5046
    %v5347 = vpack.c.b16 %v5051, %v5047
    %v5348 = vpack.c.b16 %v5052, %v5048
    %v5349 = vpack.c.b16 %v5053, %v5049
    %v5350 = vpack.c.b16 %v5058, %v5054
    %v5351 = vpack.c.b16 %v5059, %v5055
    %v5352 = vpack.c.b16 %v5060, %v5056
    %v5353 = vpack.c.b16 %v5061, %v5057
    %v5354 = vpack.c.b16 %v5066, %v5062
    %v5355 = vpack.c.b16 %v5067, %v5063
    %v5356 = vpack.c.b16 %v5068, %v5064
    %v5357 = vpack.c.b16 %v5069, %v5065
    %v5358 = vpack.c.b16 %v5074, %v5070
    %v5359 = vpack.c.b16 %v5075, %v5071
    %v5360 = vpack.c.b16 %v5076, %v5072
    %v5361 = vpack.c.b16 %v5077, %v5073
    %v5362 = vpack.c.b16 %v5082, %v5078
    %v5363 = vpack.c.b16 %v5083, %v5079
    %v5364 = vpack.c.b16 %v5084, %v5080
    %v5365 = vpack.c.b16 %v5085, %v5081
    %v5366 = vpack.c.b16 %v5090, %v5086
    %v5367 = vpack.c.b16 %v5091, %v5087
    %v5368 = vpack.c.b16 %v5092, %v5088
    %v5369 = vpack.c.b16 %v5093, %v5089
    %v5370 = vpack.c.b16 %v5098, %v5094
    %v5371 = vpack.c.b16 %v5099, %v5095
    %v5372 = vpack.c.b16 %v5100, %v5096
    %v5373 = vpack.c.b16 %v5101, %v5097
    %v5374 = vpack.c.b16 %v5106, %v5102
    %v5375 = vpack.c.b16 %v5107, %v5103
    %v5376 = vpack.c.b16 %v5108, %v5104
    %v5377 = vpack.c.b16 %v5109, %v5105
    %v5378 = vpack.c.b16 %v5114, %v5110
    %v5379 = vpack.c.b16 %v5115, %v5111
    %v5380 = vpack.c.b16 %v5116, %v5112
    %v5381 = vpack.c.b16 %v5117, %v5113
    %v5382 = vpack.c.b16 %v5122, %v5118
    %v5383 = vpack.c.b16 %v5123, %v5119
    %v5384 = vpack.c.b16 %v5124, %v5120
    %v5385 = vpack.c.b16 %v5125, %v5121
    %v5386 = vpack.c.b16 %v5130, %v5126
    %v5387 = vpack.c.b16 %v5131, %v5127
    %v5388 = vpack.c.b16 %v5132, %v5128
    %v5389 = vpack.c.b16 %v5133, %v5129
    %v5390 = vpack.c.b16 %v5138, %v5134
    %v5391 = vpack.c.b16 %v5139, %v5135
    %v5392 = vpack.c.b16 %v5140, %v5136
    %v5393 = vpack.c.b16 %v5141, %v5137
    %v5394 = vpack.c.b16 %v5146, %v5142
    %v5395 = vpack.c.b16 %v5147, %v5143
    %v5396 = vpack.c.b16 %v5148, %v5144
    %v5397 = vpack.c.b16 %v5149, %v5145
    %v5398 = vpack.c.b16 %v5154, %v5150
    %v5399 = vpack.c.b16 %v5155, %v5151
    %v5400 = vpack.c.b16 %v5156, %v5152
    %v5401 = vpack.c.b16 %v5157, %v5153
    %v5402 = vpack.c.b16 %v5162, %v5158
    %v5403 = vpack.c.b16 %v5163, %v5159
    %v5404 = vpack.c.b16 %v5164, %v5160
    %v5405 = vpack.c.b16 %v5165, %v5161
    %v5406 = vpack.c.b16 %v5170, %v5166
    %v5407 = vpack.c.b16 %v5171, %v5167
    %v5408 = vpack.c.b16 %v5172, %v5168
    %v5409 = vpack.c.b16 %v5173, %v5169
    %v5410 = vpack.c.b16 %v5178, %v5174
    %v5411 = vpack.c.b16 %v5179, %v5175
    %v5412 = vpack.c.b16 %v5180, %v5176
    %v5413 = vpack.c.b16 %v5181, %v5177
    %v5414 = vpack.c.b16 %v5186, %v5182
    %v5415 = vpack.c.b16 %v5187, %v5183
    %v5416 = vpack.c.b16 %v5188, %v5184
    %v5417 = vpack.c.b16 %v5189, %v5185
    %v5418 = vpack.c.b16 %v5194, %v5190
    %v5419 = vpack.c.b16 %v5195, %v5191
    %v5420 = vpack.c.b16 %v5196, %v5192
    %v5421 = vpack.c.b16 %v5197, %v5193
    %v5422 = vpack.c.b16 %v5202, %v5198
    %v5423 = vpack.c.b16 %v5203, %v5199
    %v5424 = vpack.c.b16 %v5204, %v5200
    %v5425 = vpack.c.b16 %v5205, %v5201
    %v5426 = vpack.c.b16 %v5210, %v5206
    %v5427 = vpack.c.b16 %v5211, %v5207
    %v5428 = vpack.c.b16 %v5212, %v5208
    %v5429 = vpack.c.b16 %v5213, %v5209
    %v5430 = vpack.c.b16 %v5218, %v5214
    %v5431 = vpack.c.b16 %v5219, %v5215
    %v5432 = vpack.c.b16 %v5220, %v5216
    %v5433 = vpack.c.b16 %v5221, %v5217
    %v5434 = vpack.c.b16 %v5226, %v5222
    %v5435 = vpack.c.b16 %v5227, %v5223
    %v5436 = vpack.c.b16 %v5228, %v5224
    %v5437 = vpack.c.b16 %v5229, %v5225
    %v5438 = vpack.c.b16 %v5234, %v5230
    %v5439 = vpack.c.b16 %v5235, %v5231
    %v5440 = vpack.c.b16 %v5236, %v5232
    %v5441 = vpack.c.b16 %v5237, %v5233
    %v5442 = vpack.c.b16 %v5242, %v5238
    %v5443 = vpack.c.b16 %v5243, %v5239
    %v5444 = vpack.c.b16 %v5244, %v5240
    %v5445 = vpack.c.b16 %v5245, %v5241
    %v5446 = vpack.c.b16 %v5250, %v5246
    %v5447 = vpack.c.b16 %v5251, %v5247
    %v5448 = vpack.c.b16 %v5252, %v5248
    %v5449 = vpack.c.b16 %v5253, %v5249
    %v5450 = vpack.c.b16 %v5258, %v5254
    %v5451 = vpack.c.b16 %v5259, %v5255
    %v5452 = vpack.c.b16 %v5260, %v5256
    %v5453 = vpack.c.b16 %v5261, %v5257
    %5646 = vmatprep.subr.bf16.mxu0 %v5291
    %5647 = vmatpush1.bf16.msra.mxu0 %v5290
    %5648 = vmatprep.subr.bf16.mxu0 %v5287
    %5649 = vmatpush1.bf16.msra.mxu0 %v5286
    %5650 = vmatprep.subr.bf16.mxu0 %v5283
    %5651 = vmatpush1.bf16.msra.mxu0 %v5282
    %5652 = vmatprep.subr.bf16.mxu0 %v5279
    %5653 = vmatpush1.bf16.msra.mxu0 %v5278
    %5654 = vmatprep.subr.bf16.mxu0 %v5275
    %5655 = vmatpush1.bf16.msra.mxu0 %v5274
    %5656 = vmatprep.subr.bf16.mxu0 %v5271
    %5657 = vmatpush1.bf16.msra.mxu0 %v5270
    %5658 = vmatprep.subr.bf16.mxu0 %v5267
    %5659 = vmatpush1.bf16.msra.mxu0 %v5266
    %5660 = vmatprep.subr.bf16.mxu0 %v5263
    %5661 = vmatpush1.bf16.msra.mxu0 %v5262
    %5662 = vmatprep.subr.bf16.mxu0 %v5323
    %5663 = vmatpush2.bf16.msra.mxu0 %v5322
    %5664 = vmatprep.subr.bf16.mxu0 %v5319
    %5665 = vmatpush2.bf16.msra.mxu0 %v5318
    %5666 = vmatprep.subr.bf16.mxu0 %v5315
    %5667 = vmatpush2.bf16.msra.mxu0 %v5314
    %5668 = vmatprep.subr.bf16.mxu0 %v5311
    %5669 = vmatpush2.bf16.msra.mxu0 %v5310
    %5670 = vmatprep.subr.bf16.mxu0 %v5307
    %5671 = vmatpush2.bf16.msra.mxu0 %v5306
    %5672 = vmatprep.subr.bf16.mxu0 %v5303
    %5673 = vmatpush2.bf16.msra.mxu0 %v5302
    %5674 = vmatprep.subr.bf16.mxu0 %v5299
    %5675 = vmatpush2.bf16.msra.mxu0 %v5298
    %5676 = vmatprep.subr.bf16.mxu0 %v5295
    %5677 = vmatpush2.bf16.msra.mxu0 %v5294
    %5678 = vmatprep.mubr.bf16.mxu0 %v4467
    %5679 = vmatmul.mubr.bf16.gmra.mxu0 %v4466
    %v5680 = vpop.f32.mrf.mxu0
    %v5681 = vadd.f32 %v4669, %v5680
    %v5682 = vpop.f32.mrf.mxu0
    %v5683 = vadd.f32 %v4673, %v5682
    %v5684 = vpop.f32.mrf.mxu0
    %v5685 = vpop.f32.mrf.mxu0
    %5686 = vdwg.mxu0
    %5687 = vmatprep.subr.bf16.mxu0 %v5355
    %5688 = vmatpush1.bf16.msra.mxu0 %v5354
    %5689 = vmatprep.subr.bf16.mxu0 %v5351
    %5690 = vmatpush1.bf16.msra.mxu0 %v5350
    %5691 = vmatprep.subr.bf16.mxu0 %v5347
    %5692 = vmatpush1.bf16.msra.mxu0 %v5346
    %5693 = vmatprep.subr.bf16.mxu0 %v5343
    %5694 = vmatpush1.bf16.msra.mxu0 %v5342
    %5695 = vmatprep.subr.bf16.mxu0 %v5339
    %5696 = vmatpush1.bf16.msra.mxu0 %v5338
    %5697 = vmatprep.subr.bf16.mxu0 %v5335
    %5698 = vmatpush1.bf16.msra.mxu0 %v5334
    %5699 = vmatprep.subr.bf16.mxu0 %v5331
    %5700 = vmatpush1.bf16.msra.mxu0 %v5330
    %5701 = vmatprep.subr.bf16.mxu0 %v5327
    %5702 = vmatpush1.bf16.msra.mxu0 %v5326
    %5703 = vmatprep.subr.bf16.mxu0 %v5387
    %5704 = vmatpush2.bf16.msra.mxu0 %v5386
    %5705 = vmatprep.subr.bf16.mxu0 %v5383
    %5706 = vmatpush2.bf16.msra.mxu0 %v5382
    %5707 = vmatprep.subr.bf16.mxu0 %v5379
    %5708 = vmatpush2.bf16.msra.mxu0 %v5378
    %5709 = vmatprep.subr.bf16.mxu0 %v5375
    %5710 = vmatpush2.bf16.msra.mxu0 %v5374
    %5711 = vmatprep.subr.bf16.mxu0 %v5371
    %5712 = vmatpush2.bf16.msra.mxu0 %v5370
    %5713 = vmatprep.subr.bf16.mxu0 %v5367
    %5714 = vmatpush2.bf16.msra.mxu0 %v5366
    %5715 = vmatprep.subr.bf16.mxu0 %v5363
    %5716 = vmatpush2.bf16.msra.mxu0 %v5362
    %5717 = vmatprep.subr.bf16.mxu0 %v5359
    %5718 = vmatpush2.bf16.msra.mxu0 %v5358
    %5719 = vmatprep.mubr.bf16.mxu0 %v4469
    %5720 = vmatmul.mubr.bf16.gmra.mxu0 %v4468
    %v5721 = vpop.f32.mrf.mxu0
    %v5722 = vadd.f32 %v5681, %v5721
    %v5723 = vpop.f32.mrf.mxu0
    %v5724 = vadd.f32 %v5683, %v5723
    %v5725 = vpop.f32.mrf.mxu0
    %v5726 = vpop.f32.mrf.mxu0
    %5727 = vdwg.mxu0
    %5728 = vmatprep.subr.bf16.mxu0 %v5419
    %5729 = vmatpush1.bf16.msra.mxu0 %v5418
    %5730 = vmatprep.subr.bf16.mxu0 %v5415
    %5731 = vmatpush1.bf16.msra.mxu0 %v5414
    %5732 = vmatprep.subr.bf16.mxu0 %v5411
    %5733 = vmatpush1.bf16.msra.mxu0 %v5410
    %5734 = vmatprep.subr.bf16.mxu0 %v5407
    %5735 = vmatpush1.bf16.msra.mxu0 %v5406
    %5736 = vmatprep.subr.bf16.mxu0 %v5403
    %5737 = vmatpush1.bf16.msra.mxu0 %v5402
    %5738 = vmatprep.subr.bf16.mxu0 %v5399
    %5739 = vmatpush1.bf16.msra.mxu0 %v5398
    %5740 = vmatprep.subr.bf16.mxu0 %v5395
    %5741 = vmatpush1.bf16.msra.mxu0 %v5394
    %5742 = vmatprep.subr.bf16.mxu0 %v5391
    %5743 = vmatpush1.bf16.msra.mxu0 %v5390
    %5744 = vmatprep.subr.bf16.mxu0 %v5451
    %5745 = vmatpush2.bf16.msra.mxu0 %v5450
    %5746 = vmatprep.subr.bf16.mxu0 %v5447
    %5747 = vmatpush2.bf16.msra.mxu0 %v5446
    %5748 = vmatprep.subr.bf16.mxu0 %v5443
    %5749 = vmatpush2.bf16.msra.mxu0 %v5442
    %5750 = vmatprep.subr.bf16.mxu0 %v5439
    %5751 = vmatpush2.bf16.msra.mxu0 %v5438
    %5752 = vmatprep.subr.bf16.mxu0 %v5435
    %5753 = vmatpush2.bf16.msra.mxu0 %v5434
    %5754 = vmatprep.subr.bf16.mxu0 %v5431
    %5755 = vmatpush2.bf16.msra.mxu0 %v5430
    %5756 = vmatprep.subr.bf16.mxu0 %v5427
    %5757 = vmatpush2.bf16.msra.mxu0 %v5426
    %5758 = vmatprep.subr.bf16.mxu0 %v5423
    %5759 = vmatpush2.bf16.msra.mxu0 %v5422
    %5760 = vmatprep.mubr.bf16.mxu0 %v4471
    %5761 = vmatmul.mubr.bf16.gmra.mxu0 %v4470
    %v5762 = vpop.f32.mrf.mxu0
    %v5763 = vadd.f32 %v5722, %v5762
    %v5764 = vpop.f32.mrf.mxu0
    %v5765 = vadd.f32 %v5724, %v5764
    %v5766 = vpop.f32.mrf.mxu0
    %v5767 = vpop.f32.mrf.mxu0
    %5768 = vdwg.mxu0
    %5769 = vmatprep.subr.bf16.mxu0 %v5293
    %5770 = vmatpush1.bf16.msra.mxu0 %v5292
    %5771 = vmatprep.subr.bf16.mxu0 %v5289
    %5772 = vmatpush1.bf16.msra.mxu0 %v5288
    %5773 = vmatprep.subr.bf16.mxu0 %v5285
    %5774 = vmatpush1.bf16.msra.mxu0 %v5284
    %5775 = vmatprep.subr.bf16.mxu0 %v5281
    %5776 = vmatpush1.bf16.msra.mxu0 %v5280
    %5777 = vmatprep.subr.bf16.mxu0 %v5277
    %5778 = vmatpush1.bf16.msra.mxu0 %v5276
    %5779 = vmatprep.subr.bf16.mxu0 %v5273
    %5780 = vmatpush1.bf16.msra.mxu0 %v5272
    %5781 = vmatprep.subr.bf16.mxu0 %v5269
    %5782 = vmatpush1.bf16.msra.mxu0 %v5268
    %5783 = vmatprep.subr.bf16.mxu0 %v5265
    %5784 = vmatpush1.bf16.msra.mxu0 %v5264
    %5785 = vmatprep.subr.bf16.mxu0 %v5325
    %5786 = vmatpush2.bf16.msra.mxu0 %v5324
    %5787 = vmatprep.subr.bf16.mxu0 %v5321
    %5788 = vmatpush2.bf16.msra.mxu0 %v5320
    %5789 = vmatprep.subr.bf16.mxu0 %v5317
    %5790 = vmatpush2.bf16.msra.mxu0 %v5316
    %5791 = vmatprep.subr.bf16.mxu0 %v5313
    %5792 = vmatpush2.bf16.msra.mxu0 %v5312
    %5793 = vmatprep.subr.bf16.mxu0 %v5309
    %5794 = vmatpush2.bf16.msra.mxu0 %v5308
    %5795 = vmatprep.subr.bf16.mxu0 %v5305
    %5796 = vmatpush2.bf16.msra.mxu0 %v5304
    %5797 = vmatprep.subr.bf16.mxu0 %v5301
    %5798 = vmatpush2.bf16.msra.mxu0 %v5300
    %5799 = vmatprep.subr.bf16.mxu0 %v5297
    %5800 = vmatpush2.bf16.msra.mxu0 %v5296
    %5801 = vmatprep.mubr.bf16.mxu0 %v4467
    %5802 = vmatmul.mubr.bf16.gmra.mxu0 %v4466
    %v5803 = vpop.f32.mrf.mxu0
    %v5804 = vadd.f32 %v4677, %v5803
    %v5805 = vpop.f32.mrf.mxu0
    %v5806 = vadd.f32 %v4681, %v5805
    %v5807 = vpop.f32.mrf.mxu0
    %v5808 = vpop.f32.mrf.mxu0
    %5809 = vdwg.mxu0
    %5810 = vmatprep.subr.bf16.mxu0 %v5357
    %5811 = vmatpush1.bf16.msra.mxu0 %v5356
    %5812 = vmatprep.subr.bf16.mxu0 %v5353
    %5813 = vmatpush1.bf16.msra.mxu0 %v5352
    %5814 = vmatprep.subr.bf16.mxu0 %v5349
    %5815 = vmatpush1.bf16.msra.mxu0 %v5348
    %5816 = vmatprep.subr.bf16.mxu0 %v5345
    %5817 = vmatpush1.bf16.msra.mxu0 %v5344
    %5818 = vmatprep.subr.bf16.mxu0 %v5341
    %5819 = vmatpush1.bf16.msra.mxu0 %v5340
    %5820 = vmatprep.subr.bf16.mxu0 %v5337
    %5821 = vmatpush1.bf16.msra.mxu0 %v5336
    %5822 = vmatprep.subr.bf16.mxu0 %v5333
    %5823 = vmatpush1.bf16.msra.mxu0 %v5332
    %5824 = vmatprep.subr.bf16.mxu0 %v5329
    %5825 = vmatpush1.bf16.msra.mxu0 %v5328
    %5826 = vmatprep.subr.bf16.mxu0 %v5389
    %5827 = vmatpush2.bf16.msra.mxu0 %v5388
    %5828 = vmatprep.subr.bf16.mxu0 %v5385
    %5829 = vmatpush2.bf16.msra.mxu0 %v5384
    %5830 = vmatprep.subr.bf16.mxu0 %v5381
    %5831 = vmatpush2.bf16.msra.mxu0 %v5380
    %5832 = vmatprep.subr.bf16.mxu0 %v5377
    %5833 = vmatpush2.bf16.msra.mxu0 %v5376
    %5834 = vmatprep.subr.bf16.mxu0 %v5373
    %5835 = vmatpush2.bf16.msra.mxu0 %v5372
    %5836 = vmatprep.subr.bf16.mxu0 %v5369
    %5837 = vmatpush2.bf16.msra.mxu0 %v5368
    %5838 = vmatprep.subr.bf16.mxu0 %v5365
    %5839 = vmatpush2.bf16.msra.mxu0 %v5364
    %5840 = vmatprep.subr.bf16.mxu0 %v5361
    %5841 = vmatpush2.bf16.msra.mxu0 %v5360
    %5842 = vmatprep.mubr.bf16.mxu0 %v4469
    %5843 = vmatmul.mubr.bf16.gmra.mxu0 %v4468
    %v5844 = vpop.f32.mrf.mxu0
    %v5845 = vadd.f32 %v5804, %v5844
    %v5846 = vpop.f32.mrf.mxu0
    %v5847 = vadd.f32 %v5806, %v5846
    %v5848 = vpop.f32.mrf.mxu0
    %v5849 = vpop.f32.mrf.mxu0
    %5850 = vdwg.mxu0
    %5851 = vmatprep.subr.bf16.mxu0 %v5421
    %5852 = vmatpush1.bf16.msra.mxu0 %v5420
    %5853 = vmatprep.subr.bf16.mxu0 %v5417
    %5854 = vmatpush1.bf16.msra.mxu0 %v5416
    %5855 = vmatprep.subr.bf16.mxu0 %v5413
    %5856 = vmatpush1.bf16.msra.mxu0 %v5412
    %5857 = vmatprep.subr.bf16.mxu0 %v5409
    %5858 = vmatpush1.bf16.msra.mxu0 %v5408
    %5859 = vmatprep.subr.bf16.mxu0 %v5405
    %5860 = vmatpush1.bf16.msra.mxu0 %v5404
    %5861 = vmatprep.subr.bf16.mxu0 %v5401
    %5862 = vmatpush1.bf16.msra.mxu0 %v5400
    %5863 = vmatprep.subr.bf16.mxu0 %v5397
    %5864 = vmatpush1.bf16.msra.mxu0 %v5396
    %5865 = vmatprep.subr.bf16.mxu0 %v5393
    %5866 = vmatpush1.bf16.msra.mxu0 %v5392
    %5867 = vmatprep.subr.bf16.mxu0 %v5453
    %5868 = vmatpush2.bf16.msra.mxu0 %v5452
    %5869 = vmatprep.subr.bf16.mxu0 %v5449
    %5870 = vmatpush2.bf16.msra.mxu0 %v5448
    %5871 = vmatprep.subr.bf16.mxu0 %v5445
    %5872 = vmatpush2.bf16.msra.mxu0 %v5444
    %5873 = vmatprep.subr.bf16.mxu0 %v5441
    %5874 = vmatpush2.bf16.msra.mxu0 %v5440
    %5875 = vmatprep.subr.bf16.mxu0 %v5437
    %5876 = vmatpush2.bf16.msra.mxu0 %v5436
    %5877 = vmatprep.subr.bf16.mxu0 %v5433
    %5878 = vmatpush2.bf16.msra.mxu0 %v5432
    %5879 = vmatprep.subr.bf16.mxu0 %v5429
    %5880 = vmatpush2.bf16.msra.mxu0 %v5428
    %5881 = vmatprep.subr.bf16.mxu0 %v5425
    %5882 = vmatpush2.bf16.msra.mxu0 %v5424
    %5883 = vmatprep.mubr.bf16.mxu0 %v4471
    %5884 = vmatmul.mubr.bf16.gmra.mxu0 %v4470
    %v5885 = vpop.f32.mrf.mxu0
    %v5886 = vadd.f32 %v5845, %v5885
    %v5887 = vpop.f32.mrf.mxu0
    %v5888 = vadd.f32 %v5847, %v5887
    %v5889 = vpop.f32.mrf.mxu0
    %v5890 = vpop.f32.mrf.mxu0
    %5891 = vdwg.mxu0
    %v5892 = vmax.f32 %v5763, 0.0
    %v5893 = vmax.f32 %v5765, 0.0
    %v5894 = vmax.f32 %v5886, 0.0
    %v5895 = vmax.f32 %v5888, 0.0
    %v5896 = vpack.c.bf16 %v5892, %v5892
    %v5897 = vpack.c.bf16 %v5893, %v5893
    %v5898 = vpack.c.bf16 %v5894, %v5894
    %v5899 = vpack.c.bf16 %v5895, %v5895
    %v5900 = vld [vmem:[#allocation14] sm:$0xf]
    %v5901 = vld [vmem:[#allocation14 + $0x4] sm:$0xf]
    %v5902 = vld [vmem:[#allocation14 + $0x8] sm:$0xf]
    %v5903 = vld [vmem:[#allocation14 + $0xc] sm:$0xf]
    %v5904 = vld [vmem:[#allocation14 + $0x10] sm:$0xf]
    %v5905 = vld [vmem:[#allocation14 + $0x14] sm:$0xf]
    %v5906 = vld [vmem:[#allocation14 + $0x18] sm:$0xf]
    %v5907 = vld [vmem:[#allocation14 + $0x1c] sm:$0xf]
    %v5908 = vld [vmem:[#allocation14 + $0x20] sm:$0xf]
    %v5909 = vld [vmem:[#allocation14 + $0x24] sm:$0xf]
    %v5910 = vld [vmem:[#allocation14 + $0x28] sm:$0xf]
    %v5911 = vld [vmem:[#allocation14 + $0x2c] sm:$0xf]
    %v5912 = vld [vmem:[#allocation14 + $0x30] sm:$0xf]
    %v5913 = vld [vmem:[#allocation14 + $0x34] sm:$0xf]
    %v5914 = vld [vmem:[#allocation14 + $0x38] sm:$0xf]
    %v5915 = vld [vmem:[#allocation14 + $0x3c] sm:$0xf]
    %v5916 = vld [vmem:[#allocation14 + $0x40] sm:$0xf]
    %v5917 = vld [vmem:[#allocation14 + $0x44] sm:$0xf]
    %v5918 = vld [vmem:[#allocation14 + $0x48] sm:$0xf]
    %v5919 = vld [vmem:[#allocation14 + $0x4c] sm:$0xf]
    %v5920 = vld [vmem:[#allocation14 + $0x50] sm:$0xf]
    %v5921 = vld [vmem:[#allocation14 + $0x54] sm:$0xf]
    %v5922 = vld [vmem:[#allocation14 + $0x58] sm:$0xf]
    %v5923 = vld [vmem:[#allocation14 + $0x5c] sm:$0xf]
    %v5924 = vld [vmem:[#allocation14 + $0x60] sm:$0xf]
    %v5925 = vld [vmem:[#allocation14 + $0x64] sm:$0xf]
    %v5926 = vld [vmem:[#allocation14 + $0x68] sm:$0xf]
    %v5927 = vld [vmem:[#allocation14 + $0x6c] sm:$0xf]
    %v5928 = vld [vmem:[#allocation14 + $0x70] sm:$0xf]
    %v5929 = vld [vmem:[#allocation14 + $0x74] sm:$0xf]
    %v5930 = vld [vmem:[#allocation14 + $0x78] sm:$0xf]
    %v5931 = vld [vmem:[#allocation14 + $0x7c] sm:$0xf]
    %v5932 = vld [vmem:[#allocation14 + $0x80] sm:$0xf]
    %v5933 = vld [vmem:[#allocation14 + $0x84] sm:$0xf]
    %v5934 = vld [vmem:[#allocation14 + $0x88] sm:$0xf]
    %v5935 = vld [vmem:[#allocation14 + $0x8c] sm:$0xf]
    %v5936 = vld [vmem:[#allocation14 + $0x90] sm:$0xf]
    %v5937 = vld [vmem:[#allocation14 + $0x94] sm:$0xf]
    %v5938 = vld [vmem:[#allocation14 + $0x98] sm:$0xf]
    %v5939 = vld [vmem:[#allocation14 + $0x9c] sm:$0xf]
    %v5940 = vld [vmem:[#allocation14 + $0xa0] sm:$0xf]
    %v5941 = vld [vmem:[#allocation14 + $0xa4] sm:$0xf]
    %v5942 = vld [vmem:[#allocation14 + $0xa8] sm:$0xf]
    %v5943 = vld [vmem:[#allocation14 + $0xac] sm:$0xf]
    %v5944 = vld [vmem:[#allocation14 + $0xb0] sm:$0xf]
    %v5945 = vld [vmem:[#allocation14 + $0xb4] sm:$0xf]
    %v5946 = vld [vmem:[#allocation14 + $0xb8] sm:$0xf]
    %v5947 = vld [vmem:[#allocation14 + $0xbc] sm:$0xf]
    %v5948 = vld [vmem:[#allocation14 + $0xc0] sm:$0xf]
    %v5949 = vld [vmem:[#allocation14 + $0xc4] sm:$0xf]
    %v5950 = vld [vmem:[#allocation14 + $0xc8] sm:$0xf]
    %v5951 = vld [vmem:[#allocation14 + $0xcc] sm:$0xf]
    %v5952 = vld [vmem:[#allocation14 + $0xd0] sm:$0xf]
    %v5953 = vld [vmem:[#allocation14 + $0xd4] sm:$0xf]
    %v5954 = vld [vmem:[#allocation14 + $0xd8] sm:$0xf]
    %v5955 = vld [vmem:[#allocation14 + $0xdc] sm:$0xf]
    %v5956 = vld [vmem:[#allocation14 + $0xe0] sm:$0xf]
    %v5957 = vld [vmem:[#allocation14 + $0xe4] sm:$0xf]
    %v5958 = vld [vmem:[#allocation14 + $0xe8] sm:$0xf]
    %v5959 = vld [vmem:[#allocation14 + $0xec] sm:$0xf]
    %v5960 = vld [vmem:[#allocation14 + $0xf0] sm:$0xf]
    %v5961 = vld [vmem:[#allocation14 + $0xf4] sm:$0xf]
    %v5962 = vld [vmem:[#allocation14 + $0xf8] sm:$0xf]
    %v5963 = vld [vmem:[#allocation14 + $0xfc] sm:$0xf]
    %v5964 = vld [vmem:[#allocation16] sm:$0x1]
    %v5966 = vlaneseq
    %v5967 = vshrl.u32 %v5966, 7
    %v5968 = vsub.s32 0, %v5967
    %v5969 = vrot.slane %v5964, %v5968
    %v6035 = vunpack.c.l.b16 %v5900
    %v6036 = vunpack.c.l.b16 %v5901
    %v6037 = vunpack.c.l.b16 %v5902
    %v6038 = vunpack.c.l.b16 %v5903
    %v6039 = vunpack.c.l.b16 %v5904
    %v6040 = vunpack.c.l.b16 %v5905
    %v6041 = vunpack.c.l.b16 %v5906
    %v6042 = vunpack.c.l.b16 %v5907
    %v6043 = vunpack.c.l.b16 %v5908
    %v6044 = vunpack.c.l.b16 %v5909
    %v6045 = vunpack.c.l.b16 %v5910
    %v6046 = vunpack.c.l.b16 %v5911
    %v6047 = vunpack.c.l.b16 %v5912
    %v6048 = vunpack.c.l.b16 %v5913
    %v6049 = vunpack.c.l.b16 %v5914
    %v6050 = vunpack.c.l.b16 %v5915
    %v6051 = vunpack.c.l.b16 %v5916
    %v6052 = vunpack.c.l.b16 %v5917
    %v6053 = vunpack.c.l.b16 %v5918
    %v6054 = vunpack.c.l.b16 %v5919
    %v6055 = vunpack.c.l.b16 %v5920
    %v6056 = vunpack.c.l.b16 %v5921
    %v6057 = vunpack.c.l.b16 %v5922
    %v6058 = vunpack.c.l.b16 %v5923
    %v6059 = vunpack.c.l.b16 %v5924
    %v6060 = vunpack.c.l.b16 %v5925
    %v6061 = vunpack.c.l.b16 %v5926
    %v6062 = vunpack.c.l.b16 %v5927
    %v6063 = vunpack.c.l.b16 %v5928
    %v6064 = vunpack.c.l.b16 %v5929
    %v6065 = vunpack.c.l.b16 %v5930
    %v6066 = vunpack.c.l.b16 %v5931
    %v6067 = vunpack.c.l.b16 %v5932
    %v6068 = vunpack.c.l.b16 %v5933
    %v6069 = vunpack.c.l.b16 %v5934
    %v6070 = vunpack.c.l.b16 %v5935
    %v6071 = vunpack.c.l.b16 %v5936
    %v6072 = vunpack.c.l.b16 %v5937
    %v6073 = vunpack.c.l.b16 %v5938
    %v6074 = vunpack.c.l.b16 %v5939
    %v6075 = vunpack.c.l.b16 %v5940
    %v6076 = vunpack.c.l.b16 %v5941
    %v6077 = vunpack.c.l.b16 %v5942
    %v6078 = vunpack.c.l.b16 %v5943
    %v6079 = vunpack.c.l.b16 %v5944
    %v6080 = vunpack.c.l.b16 %v5945
    %v6081 = vunpack.c.l.b16 %v5946
    %v6082 = vunpack.c.l.b16 %v5947
    %v6083 = vunpack.c.l.b16 %v5948
    %v6084 = vunpack.c.l.b16 %v5949
    %v6085 = vunpack.c.l.b16 %v5950
    %v6086 = vunpack.c.l.b16 %v5951
    %v6087 = vunpack.c.l.b16 %v5952
    %v6088 = vunpack.c.l.b16 %v5953
    %v6089 = vunpack.c.l.b16 %v5954
    %v6090 = vunpack.c.l.b16 %v5955
    %v6091 = vunpack.c.l.b16 %v5956
    %v6092 = vunpack.c.l.b16 %v5957
    %v6093 = vunpack.c.l.b16 %v5958
    %v6094 = vunpack.c.l.b16 %v5959
    %v6095 = vunpack.c.l.b16 %v5960
    %v6096 = vunpack.c.l.b16 %v5961
    %v6097 = vunpack.c.l.b16 %v5962
    %v6098 = vunpack.c.l.b16 %v5963
    %v6099 = vpack.c.b16 %v6036, %v6035
    %v6100 = vpack.c.b16 %v6038, %v6037
    %v6101 = vpack.c.b16 %v6040, %v6039
    %v6102 = vpack.c.b16 %v6042, %v6041
    %v6103 = vpack.c.b16 %v6044, %v6043
    %v6104 = vpack.c.b16 %v6046, %v6045
    %v6105 = vpack.c.b16 %v6048, %v6047
    %v6106 = vpack.c.b16 %v6050, %v6049
    %v6107 = vpack.c.b16 %v6052, %v6051
    %v6108 = vpack.c.b16 %v6054, %v6053
    %v6109 = vpack.c.b16 %v6056, %v6055
    %v6110 = vpack.c.b16 %v6058, %v6057
    %v6111 = vpack.c.b16 %v6060, %v6059
    %v6112 = vpack.c.b16 %v6062, %v6061
    %v6113 = vpack.c.b16 %v6064, %v6063
    %v6114 = vpack.c.b16 %v6066, %v6065
    %v6115 = vpack.c.b16 %v6068, %v6067
    %v6116 = vpack.c.b16 %v6070, %v6069
    %v6117 = vpack.c.b16 %v6072, %v6071
    %v6118 = vpack.c.b16 %v6074, %v6073
    %v6119 = vpack.c.b16 %v6076, %v6075
    %v6120 = vpack.c.b16 %v6078, %v6077
    %v6121 = vpack.c.b16 %v6080, %v6079
    %v6122 = vpack.c.b16 %v6082, %v6081
    %v6123 = vpack.c.b16 %v6084, %v6083
    %v6124 = vpack.c.b16 %v6086, %v6085
    %v6125 = vpack.c.b16 %v6088, %v6087
    %v6126 = vpack.c.b16 %v6090, %v6089
    %v6127 = vpack.c.b16 %v6092, %v6091
    %v6128 = vpack.c.b16 %v6094, %v6093
    %v6129 = vpack.c.b16 %v6096, %v6095
    %v6130 = vpack.c.b16 %v6098, %v6097
    %6163 = vmatprep.subr.bf16.mxu0 0
    %6164 = vmatpush1.bf16.msra.mxu0 %v6106
    %6165 = vmatprep.subr.bf16.mxu0 0
    %6166 = vmatpush1.bf16.msra.mxu0 %v6105
    %6167 = vmatprep.subr.bf16.mxu0 0
    %6168 = vmatpush1.bf16.msra.mxu0 %v6104
    %6169 = vmatprep.subr.bf16.mxu0 0
    %6170 = vmatpush1.bf16.msra.mxu0 %v6103
    %6171 = vmatprep.subr.bf16.mxu0 0
    %6172 = vmatpush1.bf16.msra.mxu0 %v6102
    %6173 = vmatprep.subr.bf16.mxu0 0
    %6174 = vmatpush1.bf16.msra.mxu0 %v6101
    %6175 = vmatprep.subr.bf16.mxu0 0
    %6176 = vmatpush1.bf16.msra.mxu0 %v6100
    %6177 = vmatprep.subr.bf16.mxu0 0
    %6178 = vmatpush1.bf16.msra.mxu0 %v6099
    %6179 = vmatprep.subr.bf16.mxu0 0
    %6180 = vmatpush2.bf16.msra.mxu0 %v6114
    %6181 = vmatprep.subr.bf16.mxu0 0
    %6182 = vmatpush2.bf16.msra.mxu0 %v6113
    %6183 = vmatprep.subr.bf16.mxu0 0
    %6184 = vmatpush2.bf16.msra.mxu0 %v6112
    %6185 = vmatprep.subr.bf16.mxu0 0
    %6186 = vmatpush2.bf16.msra.mxu0 %v6111
    %6187 = vmatprep.subr.bf16.mxu0 0
    %6188 = vmatpush2.bf16.msra.mxu0 %v6110
    %6189 = vmatprep.subr.bf16.mxu0 0
    %6190 = vmatpush2.bf16.msra.mxu0 %v6109
    %6191 = vmatprep.subr.bf16.mxu0 0
    %6192 = vmatpush2.bf16.msra.mxu0 %v6108
    %6193 = vmatprep.subr.bf16.mxu0 0
    %6194 = vmatpush2.bf16.msra.mxu0 %v6107
    %6195 = vmatprep.mubr.bf16.mxu0 %v5897
    %6196 = vmatmul.mubr.bf16.gmra.mxu0 %v5896
    %v6197 = vpop.f32.mrf.mxu0
    %v6198 = vadd.f32 %v5969, %v6197
    %v6199 = vpop.f32.mrf.mxu0
    %v6200 = vpop.f32.mrf.mxu0
    %v6201 = vpop.f32.mrf.mxu0
    %6202 = vdwg.mxu0
    %6203 = vmatprep.subr.bf16.mxu0 0
    %6204 = vmatpush1.bf16.msra.mxu0 %v6122
    %6205 = vmatprep.subr.bf16.mxu0 0
    %6206 = vmatpush1.bf16.msra.mxu0 %v6121
    %6207 = vmatprep.subr.bf16.mxu0 0
    %6208 = vmatpush1.bf16.msra.mxu0 %v6120
    %6209 = vmatprep.subr.bf16.mxu0 0
    %6210 = vmatpush1.bf16.msra.mxu0 %v6119
    %6211 = vmatprep.subr.bf16.mxu0 0
    %6212 = vmatpush1.bf16.msra.mxu0 %v6118
    %6213 = vmatprep.subr.bf16.mxu0 0
    %6214 = vmatpush1.bf16.msra.mxu0 %v6117
    %6215 = vmatprep.subr.bf16.mxu0 0
    %6216 = vmatpush1.bf16.msra.mxu0 %v6116
    %6217 = vmatprep.subr.bf16.mxu0 0
    %6218 = vmatpush1.bf16.msra.mxu0 %v6115
    %6219 = vmatprep.subr.bf16.mxu0 0
    %6220 = vmatpush2.bf16.msra.mxu0 %v6130
    %6221 = vmatprep.subr.bf16.mxu0 0
    %6222 = vmatpush2.bf16.msra.mxu0 %v6129
    %6223 = vmatprep.subr.bf16.mxu0 0
    %6224 = vmatpush2.bf16.msra.mxu0 %v6128
    %6225 = vmatprep.subr.bf16.mxu0 0
    %6226 = vmatpush2.bf16.msra.mxu0 %v6127
    %6227 = vmatprep.subr.bf16.mxu0 0
    %6228 = vmatpush2.bf16.msra.mxu0 %v6126
    %6229 = vmatprep.subr.bf16.mxu0 0
    %6230 = vmatpush2.bf16.msra.mxu0 %v6125
    %6231 = vmatprep.subr.bf16.mxu0 0
    %6232 = vmatpush2.bf16.msra.mxu0 %v6124
    %6233 = vmatprep.subr.bf16.mxu0 0
    %6234 = vmatpush2.bf16.msra.mxu0 %v6123
    %6235 = vmatprep.mubr.bf16.mxu0 %v5899
    %6236 = vmatmul.mubr.bf16.gmra.mxu0 %v5898
    %v6237 = vpop.f32.mrf.mxu0
    %v6238 = vadd.f32 %v6198, %v6237
    %v6239 = vpop.f32.mrf.mxu0
    %v6240 = vpop.f32.mrf.mxu0
    %v6241 = vpop.f32.mrf.mxu0
    %6242 = vdwg.mxu0
    %6243 = vst [vmem:[#allocation17] sm:$0x3] %v6238
    // Predicated region
    $region74: #{tpu_custom_call.1} parent=1 // pred_check
      _
    $region75: #{tpu_custom_call.1} parent=1 // pred_check_branch
      %6245 = sbr.rel (0) target = $region77
    $region76: #{tpu_custom_call.1} parent=1 // pred_region
      %s6247 = ssub.s32 32, 32
      %6248 = vsyncadd [#allocation4], %s6247
      %s6250 = sshll.u32 [#allocation17], 4
      %s6251 = int_to_ptr.vmem [resolvable:$true] %s6250
      %6253 = dma.vmem_to_hbm [thread:$0]  %s6251, 32, %s9, [#allocation4]
    $region77: #{tpu_custom_call.1} parent=1 // pred_fallthru
      _
    // Predicated region
    $region78: #{tpu_custom_call.1} parent=1 // pred_check
      _
    $region79: #{tpu_custom_call.1} parent=1 // pred_check_branch
      %6255 = sbr.rel (0) target = $region81
    $region80: #{tpu_custom_call.1} parent=1 // pred_region
      %6256 = dma.done [#allocation4], 32
    $region81: #{tpu_custom_call.1} parent=1 // pred_fallthru
      _
    %6257 = vsyncpa [#allocation3], 1
    %6258 = vsyncpa [#allocation6], 1
    %6259 = vsyncpa [#allocation9], 1
    %6260 = vsyncpa [#allocation12], 1
    %6261 = vsyncpa [#allocation15], 1
    %6262 = vsyncpa [#allocation4], 1

</llo_original>
